<compile_context>
chip_gen: v6e
topology: v6e:2x2x1
jax: 0.10.0
libtpu: 0.0.40
codegen_flags: <defaults>
</compile_context>

<pallas_src>
import functools

import jax
import jax.numpy as jnp
from jax import lax
from jax.experimental import pallas as pl
from jax.experimental.pallas import tpu as pltpu

VMEM_LIMIT_BYTES = 32 * 1024 * 1024  # explicit scoped-VMEM budget (safe on v5e/v6e/v7x)


def _round_up(x, m):
    return (x + m - 1) // m * m


# ----------------------------------------------------------------------------
# Pallas kernel 1: M-tiled matmul + bias (+ReLU)  — backs every conv via im2col
# ----------------------------------------------------------------------------
def _matmul_bias_kernel(a_ref, w_ref, b_ref, o_ref, *, apply_relu):
    acc = jnp.dot(a_ref[...], w_ref[...], preferred_element_type=jnp.float32)
    acc = acc + b_ref[...]
    if apply_relu:
        acc = jnp.maximum(acc, 0.0)
    o_ref[...] = acc.astype(o_ref.dtype)


def pallas_matmul_bias(a, w, b, *, relu=False, tile_m=512):
    """(M,K) @ (K,N) + (N,) -> (M,N) with optional fused ReLU.

    M is tiled (pipelined, megacore-parallel); W/bias stay resident; output is
    computed lane-dense (N padded to 128) and sliced back by the caller.
    """
    M, K = a.shape
    K2, N = w.shape
    assert K == K2, (a.shape, w.shape)

    kp = _round_up(K, 8)        # sublane alignment of the contraction dim
    np_ = _round_up(N, 128)     # lane-dense output stores / resident weight columns
    mp = _round_up(M, 8)
    tm = min(tile_m, mp)
    mp = _round_up(mp, tm)

    a_p = jnp.pad(a, ((0, mp - M), (0, kp - K)))
    w_p = jnp.pad(w, ((0, kp - K), (0, np_ - N)))
    b_p = jnp.pad(b.reshape(1, -1), ((0, 0), (0, np_ - N)))

    out = pl.pallas_call(
        functools.partial(_matmul_bias_kernel, apply_relu=relu),
        out_shape=jax.ShapeDtypeStruct((mp, np_), jnp.float32),
        grid=(mp // tm,),
        in_specs=[
            pl.BlockSpec((tm, kp), lambda i: (i, 0)),    # A: tiled over M
            pl.BlockSpec((kp, np_), lambda i: (0, 0)),   # W: resident
            pl.BlockSpec((1, np_), lambda i: (0, 0)),    # bias: resident
        ],
        out_specs=pl.BlockSpec((tm, np_), lambda i: (i, 0)),
        compiler_params=pltpu.CompilerParams(
            dimension_semantics=("parallel",),
            vmem_limit_bytes=VMEM_LIMIT_BYTES),
    )(a_p, w_p, b_p)
    return out[:M, :N]


# ----------------------------------------------------------------------------
# Pallas kernel 2: fused enc3 (1x1) -> vector quantize -> dec1 (1x1) + per-token SE
# ----------------------------------------------------------------------------
def _enc3_vq_dec1_kernel(h_ref, w3_ref, b3_ref, cb_ref, e2_ref, wd1_ref, bd1_ref,
                         d_ref, se_ref):
    h = h_ref[...]                                                     # (T, C1)
    # enc3: 1x1 conv (no activation) -> latent z
    z = jnp.dot(h, w3_ref[...], preferred_element_type=jnp.float32) + b3_ref[...]  # (T, Dp)

    # vector quantize: argmin_k ||z - e_k||^2 ; ||z||^2 dropped (constant per row).
    e = cb_ref[...]                                                    # (Kp, Dp)
    dots = lax.dot_general(z, e, (((1,), (1,)), ((), ())),
                           preferred_element_type=jnp.float32)         # (T, Kp)
    dist = e2_ref[...] - 2.0 * dots                                    # padded codes: +1e30 bias
    T, Kp = dist.shape
    min_d = jnp.min(dist, axis=1, keepdims=True)
    iota = lax.broadcasted_iota(jnp.int32, (T, Kp), 1)
    idx = jnp.min(jnp.where(dist == min_d, iota, Kp), axis=1, keepdims=True)  # first-min tiebreak
    onehot = (iota == idx).astype(jnp.float32)
    q = jnp.dot(onehot, e, preferred_element_type=jnp.float32)         # gather codes via MXU

    # per-token squared error (reduced to a scalar outside the kernel; keeps the
    # token grid axis "parallel" instead of serializing on a scalar accumulator)
    diff = q - z
    se_ref[...] = jnp.sum(diff * diff, axis=1, keepdims=True)

    # dec1: 1x1 conv + ReLU on the (straight-through) quantized latent
    d = jnp.dot(q, wd1_ref[...], preferred_element_type=jnp.float32) + bd1_ref[...]
    d_ref[...] = jnp.maximum(d, 0.0).astype(d_ref.dtype)


def fused_enc3_vq_dec1(h_flat, w_enc3, b_enc3, codebook, w_dec1, b_dec1,
                       *, tile_tokens=256):
    ntok, c1 = h_flat.shape
    w3 = w_enc3.reshape(c1, -1)                  # (C1, D)
    d_emb = w3.shape[1]
    kc = codebook.shape[0]
    wd1 = w_dec1.reshape(d_emb, -1)              # (D, C2)
    c2 = wd1.shape[1]

    dp = _round_up(d_emb, 128)                   # embed_dim -> 128 (MXU depth / lanes)
    kcp = _round_up(kc, 128)                     # codes -> 128 (lane occupancy)
    n_pad = _round_up(c2, 128)                   # lane-dense main output

    w3p = jnp.pad(w3, ((0, 0), (0, dp - d_emb)))
    b3p = jnp.pad(b_enc3.reshape(1, -1), ((0, 0), (0, dp - d_emb)))
    cbp = jnp.pad(codebook, ((0, kcp - kc), (0, dp - d_emb)))
    # ||e||^2 hoisted out of the kernel; padded codes get a huge bias so they never win.
    e2 = jnp.sum(cbp * cbp, axis=1).reshape(1, kcp)
    e2 = e2 + jnp.where(jnp.arange(kcp) >= kc, 1e30, 0.0).reshape(1, kcp).astype(jnp.float32)
    wd1p = jnp.pad(wd1, ((0, dp - d_emb), (0, n_pad - c2)))
    bd1p = jnp.pad(b_dec1.reshape(1, -1), ((0, 0), (0, n_pad - c2)))

    tp = _round_up(ntok, 8)
    tile_t = min(tile_tokens, tp)
    tp = _round_up(tp, tile_t)
    hp = jnp.pad(h_flat, ((0, tp - ntok), (0, 0)))

    d_pad, se_tok = pl.pallas_call(
        _enc3_vq_dec1_kernel,
        out_shape=(
            jax.ShapeDtypeStruct((tp, n_pad), jnp.float32),
            jax.ShapeDtypeStruct((tp, 1), jnp.float32),
        ),
        grid=(tp // tile_t,),
        in_specs=[
            pl.BlockSpec((tile_t, c1), lambda i: (i, 0)),   # tokens: tiled
            pl.BlockSpec((c1, dp), lambda i: (0, 0)),       # enc3 W: resident
            pl.BlockSpec((1, dp), lambda i: (0, 0)),
            pl.BlockSpec((kcp, dp), lambda i: (0, 0)),      # codebook: resident
            pl.BlockSpec((1, kcp), lambda i: (0, 0)),       # ||e||^2: resident
            pl.BlockSpec((dp, n_pad), lambda i: (0, 0)),    # dec1 W: resident
            pl.BlockSpec((1, n_pad), lambda i: (0, 0)),
        ],
        out_specs=[
            pl.BlockSpec((tile_t, n_pad), lambda i: (i, 0)),
            pl.BlockSpec((tile_t, 1), lambda i: (i, 0)),    # per-token squared error
        ],
        compiler_params=pltpu.CompilerParams(
            dimension_semantics=("parallel",),
            vmem_limit_bytes=VMEM_LIMIT_BYTES),
    )(hp, w3p, b3p, cbp, e2, wd1p, bd1p)
    sse = jnp.sum(se_tok[:ntok, 0])              # padded rows dropped before the reduce
    return d_pad[:ntok, :c2], sse


# ----------------------------------------------------------------------------
# JAX glue: im2col conv wrappers (plain / upsample-fused), params
# ----------------------------------------------------------------------------
def conv2d(x, w, b, *, stride, pad, relu):
    """x: (B,H,W,Cin) NHWC, w: (kh,kw,Cin,Cout). im2col in JAX, matmul in Pallas."""
    kh, kw, cin, cout = w.shape
    B, H, W, C = x.shape
    assert C == cin
    xp = jnp.pad(x, ((0, 0), (pad, pad), (pad, pad), (0, 0)))
    Ho = (H + 2 * pad - kh) // stride + 1
    Wo = (W + 2 * pad - kw) // stride + 1
    cols = []
    for i in range(kh):
        for j in range(kw):
            cols.append(
                xp[:, i:i + stride * (Ho - 1) + 1:stride,
                      j:j + stride * (Wo - 1) + 1:stride, :][..., None, :])
    patches = jnp.concatenate(cols, axis=3)                  # (B,Ho,Wo,kh*kw,Cin)
    a = patches.reshape(B * Ho * Wo, kh * kw * cin)
    out = pallas_matmul_bias(a, w.reshape(kh * kw * cin, cout), b, relu=relu)
    return out.reshape(B, Ho, Wo, cout)


def conv2d_upsample2(x, w, b, *, relu):
    """3x3/stride-1/pad-1 conv applied to the 2x nearest-upsampled x, WITHOUT
    materializing the upsampled tensor: patches gathered directly from x."""
    kh, kw, cin, cout = w.shape
    assert (kh, kw) == (3, 3)
    B, H, W, C = x.shape
    assert C == cin
    Ho, Wo = 2 * H, 2 * W
    oy = jnp.arange(Ho)
    ox = jnp.arange(Wo)
    cols = []
    for di in range(kh):
        uy = oy - 1 + di
        vy = (uy >= 0) & (uy < Ho)
        sy = jnp.clip(uy, 0, Ho - 1) // 2
        for dj in range(kw):
            ux = ox - 1 + dj
            vx = (ux >= 0) & (ux < Wo)
            sx = jnp.clip(ux, 0, Wo - 1) // 2
            g = x[:, sy][:, :, sx]                                       # (B,Ho,Wo,C)
            m = (vy[:, None] & vx[None, :]).astype(x.dtype)[None, :, :, None]
            cols.append((g * m)[..., None, :])
    patches = jnp.concatenate(cols, axis=3)                              # (B,Ho,Wo,9,C)
    a = patches.reshape(B * Ho * Wo, kh * kw * cin)
    out = pallas_matmul_bias(a, w.reshape(kh * kw * cin, cout), b, relu=relu)
    return out.reshape(B, Ho, Wo, cout)


def init_params(key, channel, embed_num, embed_dim, hidden_dims):
    h0, h1 = hidden_dims
    keys = jax.random.split(key, 8)

    def conv_init(k, kh, kw, cin, cout):
        fan_in = kh * kw * cin
        w = jax.random.normal(k, (kh, kw, cin, cout), jnp.float32) / jnp.sqrt(fan_in)
        b = jnp.zeros((cout,), jnp.float32)
        return w, b

    p = {}
    # encoder: channel -> h0 (s2) -> h1 (s2) -> embed_dim (1x1)
    p["enc1_w"], p["enc1_b"] = conv_init(keys[0], 3, 3, channel, h0)
    p["enc2_w"], p["enc2_b"] = conv_init(keys[1], 3, 3, h0, h1)
    p["enc3_w"], p["enc3_b"] = conv_init(keys[2], 1, 1, h1, embed_dim)
    # decoder: embed_dim -> h1 (1x1) -> up -> h0 -> up -> channel
    p["dec1_w"], p["dec1_b"] = conv_init(keys[3], 1, 1, embed_dim, h1)
    p["dec2_w"], p["dec2_b"] = conv_init(keys[4], 3, 3, h1, h0)
    p["dec3_w"], p["dec3_b"] = conv_init(keys[5], 3, 3, h0, channel)
    # codebook, uniform(-1/K, 1/K) like the usual VQ-VAE init
    p["codebook"] = jax.random.uniform(
        keys[6], (embed_num, embed_dim), jnp.float32,
        minval=-1.0 / embed_num, maxval=1.0 / embed_num)
    return p


# ----------------------------------------------------------------------------
# VQVAE forward
# ----------------------------------------------------------------------------
def vqvae_forward(params, x_nchw, beta=0.25, gamma=1.0, require_loss=True):
    x = jnp.transpose(x_nchw, (0, 2, 3, 1))  # NCHW -> NHWC

    # encode (stride-2 conv stack)
    h = conv2d(x, params["enc1_w"], params["enc1_b"], stride=2, pad=1, relu=True)
    h = conv2d(h, params["enc2_w"], params["enc2_b"], stride=2, pad=1, relu=True)

    B, Hq, Wq, C1 = h.shape
    h_flat = h.reshape(-1, C1)                # == permute(0,2,3,1).view(-1, C)

    # fused: enc3 (1x1) -> VQ (argmin codebook, straight-through value == q) -> dec1 (1x1)
    d_flat, sse = fused_enc3_vq_dec1(
        h_flat, params["enc3_w"], params["enc3_b"], params["codebook"],
        params["dec1_w"], params["dec1_b"])

    d_emb = params["codebook"].shape[1]
    mse = sse / (h_flat.shape[0] * d_emb)
    # commitment (beta) + codebook (gamma) losses; identical forward value (MSE).
    # TODO(synk): stop_gradient split of the two loss terms only matters for backward.
    vqloss = (beta + gamma) * mse

    # decode: dec1 done in the fused kernel; nearest-upsample folded into dec2/dec3 patches
    d = d_flat.reshape(B, Hq, Wq, -1)
    d = conv2d_upsample2(d, params["dec2_w"], params["dec2_b"], relu=True)
    out = conv2d_upsample2(d, params["dec3_w"], params["dec3_b"], relu=False)

    out_nchw = jnp.transpose(out, (0, 3, 1, 2))  # NHWC -> NCHW
    if require_loss:
        return out_nchw, vqloss
    return out_nchw


if __name__ == "__main__":
    channel = 4
    embed_num = 64
    embed_dim = 32
    hidden_dims = [32, 64]
    B, H, W = 2, 16, 16

    root = jax.random.PRNGKey(0)
    k_param, k_x = jax.random.split(root)
    params = init_params(k_param, channel, embed_num, embed_dim, hidden_dims)
    x = jax.random.normal(k_x, (B, channel, H, W), jnp.float32)

    fwd = jax.jit(functools.partial(vqvae_forward, beta=0.25, gamma=1.0))
    output, vqloss = fwd(params, x)
    jax.block_until_ready((output, vqloss))

    assert output.shape == (B, channel, H, W), output.shape
    assert output.dtype == jnp.float32
    assert vqloss.shape == () and jnp.isfinite(vqloss)
    print("KERNEL_OK")
</pallas_src>

<mosaic_0001>
module attributes {stable_mosaic.version = 11 : i64} {
  func.func @_matmul_bias_kernel(%arg0: i32, %arg1: memref<128x40xf32, #tpu.memory_space<vmem>>, %arg2: memref<40x128xf32, #tpu.memory_space<vmem>>, %arg3: memref<1x128xf32, #tpu.memory_space<vmem>>, %arg4: memref<128x128xf32, #tpu.memory_space<vmem>>) attributes {dimension_semantics = [#tpu.dimension_semantics<parallel>], iteration_bounds = array<i64: 1>, scalar_prefetch = 0 : i64, scratch_operands = 0 : i64, tpu.core_type = #tpu.core_type<tc>, window_params = [{transform_indices = @transform_0, window_bounds = array<i64: 128, 40>}, {pipeline_mode = #tpu.pipeline_mode<synchronous>, transform_indices = @transform_1, window_bounds = array<i64: 40, 128>}, {pipeline_mode = #tpu.pipeline_mode<synchronous>, transform_indices = @transform_2, window_bounds = array<i64: 1, 128>}, {transform_indices = @transform_3, window_bounds = array<i64: 128, 128>}]} {
    %c0 = arith.constant 0 : index
    %c0_0 = arith.constant 0 : index
    %0 = vector.load %arg1[%c0, %c0_0] : memref<128x40xf32, #tpu.memory_space<vmem>>, vector<128x40xf32>
    %c0_1 = arith.constant 0 : index
    %c0_2 = arith.constant 0 : index
    %1 = vector.load %arg2[%c0_1, %c0_2] : memref<40x128xf32, #tpu.memory_space<vmem>>, vector<40x128xf32>
    %cst = arith.constant dense<0.000000e+00> : vector<128x128xf32>
    %2 = tpu.matmul %0, %1, %cst {dimension_numbers = #tpu.dot_dimension_numbers<[1], [0], [0], [1], [0, 0, 1, 1], [], []>} : vector<128x40xf32>, vector<40x128xf32>, vector<128x128xf32> -> vector<128x128xf32>
    %c0_3 = arith.constant 0 : index
    %c0_4 = arith.constant 0 : index
    %3 = vector.load %arg3[%c0_3, %c0_4] : memref<1x128xf32, #tpu.memory_space<vmem>>, vector<1x128xf32>
    %4 = vector.broadcast %3 : vector<1x128xf32> to vector<128x128xf32>
    %5 = arith.addf %2, %4 : vector<128x128xf32>
    %cst_5 = arith.constant 0.000000e+00 : f32
    %6 = vector.broadcast %cst_5 : f32 to vector<128x128xf32>
    %7 = arith.maximumf %5, %6 : vector<128x128xf32>
    %c0_6 = arith.constant 0 : index
    %c0_7 = arith.constant 0 : index
    %8 = vector.load %arg4[%c0_6, %c0_7] : memref<128x128xf32, #tpu.memory_space<vmem>>, vector<128x128xf32>
    tpu.vector_store %arg4[%c0_6, %c0_7], %7 {strides = array<i32>} : memref<128x128xf32, #tpu.memory_space<vmem>>, vector<128x128xf32>,
    return
  }
  func.func @transform_0(%arg0: i32) -> (i32, i32) {
    %c0_i32 = arith.constant 0 : i32
    %c0_i32_0 = arith.constant 0 : i32
    return %arg0, %c0_i32 : i32, i32
  }
  func.func @transform_1(%arg0: i32) -> (i32, i32) {
    %c0_i32 = arith.constant 0 : i32
    %c0_i32_0 = arith.constant 0 : i32
    %c0_i32_1 = arith.constant 0 : i32
    return %c0_i32, %c0_i32_0 : i32, i32
  }
  func.func @transform_2(%arg0: i32) -> (i32, i32) {
    %c0_i32 = arith.constant 0 : i32
    %c0_i32_0 = arith.constant 0 : i32
    %c0_i32_1 = arith.constant 0 : i32
    return %c0_i32, %c0_i32_0 : i32, i32
  }
  func.func @transform_3(%arg0: i32) -> (i32, i32) {
    %c0_i32 = arith.constant 0 : i32
    %c0_i32_0 = arith.constant 0 : i32
    return %arg0, %c0_i32 : i32, i32
  }
}

module attributes {stable_mosaic.version = 11 : i64} {
  func.func @_matmul_bias_kernel(%arg0: i32, %arg1: memref<32x288xf32, #tpu.memory_space<vmem>>, %arg2: memref<288x128xf32, #tpu.memory_space<vmem>>, %arg3: memref<1x128xf32, #tpu.memory_space<vmem>>, %arg4: memref<32x128xf32, #tpu.memory_space<vmem>>) attributes {dimension_semantics = [#tpu.dimension_semantics<parallel>], iteration_bounds = array<i64: 1>, scalar_prefetch = 0 : i64, scratch_operands = 0 : i64, tpu.core_type = #tpu.core_type<tc>, window_params = [{transform_indices = @transform_0, window_bounds = array<i64: 32, 288>}, {pipeline_mode = #tpu.pipeline_mode<synchronous>, transform_indices = @transform_1, window_bounds = array<i64: 288, 128>}, {pipeline_mode = #tpu.pipeline_mode<synchronous>, transform_indices = @transform_2, window_bounds = array<i64: 1, 128>}, {transform_indices = @transform_3, window_bounds = array<i64: 32, 128>}]} {
    %c0 = arith.constant 0 : index
    %c0_0 = arith.constant 0 : index
    %0 = vector.load %arg1[%c0, %c0_0] : memref<32x288xf32, #tpu.memory_space<vmem>>, vector<32x288xf32>
    %c0_1 = arith.constant 0 : index
    %c0_2 = arith.constant 0 : index
    %1 = vector.load %arg2[%c0_1, %c0_2] : memref<288x128xf32, #tpu.memory_space<vmem>>, vector<288x128xf32>
    %cst = arith.constant dense<0.000000e+00> : vector<32x128xf32>
    %2 = tpu.matmul %0, %1, %cst {dimension_numbers = #tpu.dot_dimension_numbers<[1], [0], [0], [1], [0, 0, 1, 1], [], []>} : vector<32x288xf32>, vector<288x128xf32>, vector<32x128xf32> -> vector<32x128xf32>
    %c0_3 = arith.constant 0 : index
    %c0_4 = arith.constant 0 : index
    %3 = vector.load %arg3[%c0_3, %c0_4] : memref<1x128xf32, #tpu.memory_space<vmem>>, vector<1x128xf32>
    %4 = vector.broadcast %3 : vector<1x128xf32> to vector<32x128xf32>
    %5 = arith.addf %2, %4 : vector<32x128xf32>
    %cst_5 = arith.constant 0.000000e+00 : f32
    %6 = vector.broadcast %cst_5 : f32 to vector<32x128xf32>
    %7 = arith.maximumf %5, %6 : vector<32x128xf32>
    %c0_6 = arith.constant 0 : index
    %c0_7 = arith.constant 0 : index
    %8 = vector.load %arg4[%c0_6, %c0_7] : memref<32x128xf32, #tpu.memory_space<vmem>>, vector<32x128xf32>
    tpu.vector_store %arg4[%c0_6, %c0_7], %7 {strides = array<i32>} : memref<32x128xf32, #tpu.memory_space<vmem>>, vector<32x128xf32>,
    return
  }
  func.func @transform_0(%arg0: i32) -> (i32, i32) {
    %c0_i32 = arith.constant 0 : i32
    %c0_i32_0 = arith.constant 0 : i32
    return %arg0, %c0_i32 : i32, i32
  }
  func.func @transform_1(%arg0: i32) -> (i32, i32) {
    %c0_i32 = arith.constant 0 : i32
    %c0_i32_0 = arith.constant 0 : i32
    %c0_i32_1 = arith.constant 0 : i32
    return %c0_i32, %c0_i32_0 : i32, i32
  }
  func.func @transform_2(%arg0: i32) -> (i32, i32) {
    %c0_i32 = arith.constant 0 : i32
    %c0_i32_0 = arith.constant 0 : i32
    %c0_i32_1 = arith.constant 0 : i32
    return %c0_i32, %c0_i32_0 : i32, i32
  }
  func.func @transform_3(%arg0: i32) -> (i32, i32) {
    %c0_i32 = arith.constant 0 : i32
    %c0_i32_0 = arith.constant 0 : i32
    return %arg0, %c0_i32 : i32, i32
  }
}

module attributes {stable_mosaic.version = 11 : i64} {
  func.func @_enc3_vq_dec1_kernel(%arg0: i32, %arg1: memref<32x64xf32, #tpu.memory_space<vmem>>, %arg2: memref<64x128xf32, #tpu.memory_space<vmem>>, %arg3: memref<1x128xf32, #tpu.memory_space<vmem>>, %arg4: memref<128x128xf32, #tpu.memory_space<vmem>>, %arg5: memref<1x128xf32, #tpu.memory_space<vmem>>, %arg6: memref<128x128xf32, #tpu.memory_space<vmem>>, %arg7: memref<1x128xf32, #tpu.memory_space<vmem>>, %arg8: memref<32x128xf32, #tpu.memory_space<vmem>>, %arg9: memref<32x1xf32, #tpu.memory_space<vmem>>) attributes {dimension_semantics = [#tpu.dimension_semantics<parallel>], iteration_bounds = array<i64: 1>, scalar_prefetch = 0 : i64, scratch_operands = 0 : i64, tpu.core_type = #tpu.core_type<tc>, window_params = [{transform_indices = @transform_0, window_bounds = array<i64: 32, 64>}, {pipeline_mode = #tpu.pipeline_mode<synchronous>, transform_indices = @transform_1, window_bounds = array<i64: 64, 128>}, {pipeline_mode = #tpu.pipeline_mode<synchronous>, transform_indices = @transform_2, window_bounds = array<i64: 1, 128>}, {pipeline_mode = #tpu.pipeline_mode<synchronous>, transform_indices = @transform_3, window_bounds = array<i64: 128, 128>}, {pipeline_mode = #tpu.pipeline_mode<synchronous>, transform_indices = @transform_4, window_bounds = array<i64: 1, 128>}, {pipeline_mode = #tpu.pipeline_mode<synchronous>, transform_indices = @transform_5, window_bounds = array<i64: 128, 128>}, {pipeline_mode = #tpu.pipeline_mode<synchronous>, transform_indices = @transform_6, window_bounds = array<i64: 1, 128>}, {transform_indices = @transform_7, window_bounds = array<i64: 32, 128>}, {transform_indices = @transform_8, window_bounds = array<i64: 32, 1>}]} {
    %c0 = arith.constant 0 : index
    %c0_0 = arith.constant 0 : index
    %0 = vector.load %arg1[%c0, %c0_0] : memref<32x64xf32, #tpu.memory_space<vmem>>, vector<32x64xf32>
    %c0_1 = arith.constant 0 : index
    %c0_2 = arith.constant 0 : index
    %1 = vector.load %arg2[%c0_1, %c0_2] : memref<64x128xf32, #tpu.memory_space<vmem>>, vector<64x128xf32>
    %cst = arith.constant dense<0.000000e+00> : vector<32x128xf32>
    %2 = tpu.matmul %0, %1, %cst {dimension_numbers = #tpu.dot_dimension_numbers<[1], [0], [0], [1], [0, 0, 1, 1], [], []>} : vector<32x64xf32>, vector<64x128xf32>, vector<32x128xf32> -> vector<32x128xf32>
    %c0_3 = arith.constant 0 : index
    %c0_4 = arith.constant 0 : index
    %3 = vector.load %arg3[%c0_3, %c0_4] : memref<1x128xf32, #tpu.memory_space<vmem>>, vector<1x128xf32>
    %4 = vector.broadcast %3 : vector<1x128xf32> to vector<32x128xf32>
    %5 = arith.addf %2, %4 : vector<32x128xf32>
    %c0_5 = arith.constant 0 : index
    %c0_6 = arith.constant 0 : index
    %6 = vector.load %arg4[%c0_5, %c0_6] : memref<128x128xf32, #tpu.memory_space<vmem>>, vector<128x128xf32>
    %cst_7 = arith.constant dense<0.000000e+00> : vector<32x128xf32>
    %7 = tpu.matmul %5, %6, %cst_7 {dimension_numbers = #tpu.dot_dimension_numbers<[1], [1], [0], [0], [0, 0, 1, 0], [], []>} : vector<32x128xf32>, vector<128x128xf32>, vector<32x128xf32> -> vector<32x128xf32>
    %c0_8 = arith.constant 0 : index
    %c0_9 = arith.constant 0 : index
    %8 = vector.load %arg5[%c0_8, %c0_9] : memref<1x128xf32, #tpu.memory_space<vmem>>, vector<1x128xf32>
    %cst_10 = arith.constant 2.000000e+00 : f32
    %9 = vector.broadcast %cst_10 : f32 to vector<32x128xf32>
    %10 = arith.mulf %9, %7 : vector<32x128xf32>
    %11 = vector.broadcast %8 : vector<1x128xf32> to vector<32x128xf32>
    %12 = arith.subf %11, %10 : vector<32x128xf32>
    %cst_11 = arith.constant dense<0x7F800000> : vector<32xf32>
    %13 = vector.multi_reduction <minimumf>, %12, %cst_11 [1] : vector<32x128xf32> to vector<32xf32>
    %14 = vector.shape_cast %13 : vector<32xf32> to vector<32x1xf32>
    %15 = tpu.iota {dimensions = array<i32: 1>} : vector<32x128xi32>
    %16 = vector.broadcast %14 : vector<32x1xf32> to vector<32x128xf32>
    %17 = arith.cmpf oeq, %12, %16 : vector<32x128xf32>
    %c128_i32 = arith.constant 128 : i32
    %18 = vector.broadcast %c128_i32 : i32 to vector<32x128xi32>
    %19 = arith.select %17, %15, %18 : vector<32x128xi1>, vector<32x128xi32>
    %cst_12 = arith.constant dense<2147483647> : vector<32xi32>
    %20 = vector.multi_reduction <minsi>, %19, %cst_12 [1] : vector<32x128xi32> to vector<32xi32>
    %21 = vector.shape_cast %20 : vector<32xi32> to vector<32x1xi32>
    %22 = vector.broadcast %21 : vector<32x1xi32> to vector<32x128xi32>
    %23 = arith.cmpi eq, %15, %22 : vector<32x128xi32>
    %24 = arith.extui %23 : vector<32x128xi1> to vector<32x128xi32>
    %25 = arith.sitofp %24 : vector<32x128xi32> to vector<32x128xf32>
    %cst_13 = arith.constant dense<0.000000e+00> : vector<32x128xf32>
    %26 = tpu.matmul %25, %6, %cst_13 {dimension_numbers = #tpu.dot_dimension_numbers<[1], [0], [0], [1], [0, 0, 1, 1], [], []>} : vector<32x128xf32>, vector<128x128xf32>, vector<32x128xf32> -> vector<32x128xf32>
    %27 = arith.subf %26, %5 : vector<32x128xf32>
    %28 = arith.mulf %27, %27 : vector<32x128xf32>
    %cst_14 = arith.constant dense<0.000000e+00> : vector<32xf32>
    %29 = vector.multi_reduction <add>, %28, %cst_14 [1] : vector<32x128xf32> to vector<32xf32>
    %30 = vector.shape_cast %29 : vector<32xf32> to vector<32x1xf32>
    %c0_15 = arith.constant 0 : index
    %c0_16 = arith.constant 0 : index
    %31 = vector.load %arg9[%c0_15, %c0_16] : memref<32x1xf32, #tpu.memory_space<vmem>>, vector<32x1xf32>
    tpu.vector_store %arg9[%c0_15, %c0_16], %30 {strides = array<i32>} : memref<32x1xf32, #tpu.memory_space<vmem>>, vector<32x1xf32>,
    %c0_17 = arith.constant 0 : index
    %c0_18 = arith.constant 0 : index
    %32 = vector.load %arg6[%c0_17, %c0_18] : memref<128x128xf32, #tpu.memory_space<vmem>>, vector<128x128xf32>
    %cst_19 = arith.constant dense<0.000000e+00> : vector<32x128xf32>
    %33 = tpu.matmul %26, %32, %cst_19 {dimension_numbers = #tpu.dot_dimension_numbers<[1], [0], [0], [1], [0, 0, 1, 1], [], []>} : vector<32x128xf32>, vector<128x128xf32>, vector<32x128xf32> -> vector<32x128xf32>
    %c0_20 = arith.constant 0 : index
    %c0_21 = arith.constant 0 : index
    %34 = vector.load %arg7[%c0_20, %c0_21] : memref<1x128xf32, #tpu.memory_space<vmem>>, vector<1x128xf32>
    %35 = vector.broadcast %34 : vector<1x128xf32> to vector<32x128xf32>
    %36 = arith.addf %33, %35 : vector<32x128xf32>
    %cst_22 = arith.constant 0.000000e+00 : f32
    %37 = vector.broadcast %cst_22 : f32 to vector<32x128xf32>
    %38 = arith.maximumf %36, %37 : vector<32x128xf32>
    %c0_23 = arith.constant 0 : index
    %c0_24 = arith.constant 0 : index
    %39 = vector.load %arg8[%c0_23, %c0_24] : memref<32x128xf32, #tpu.memory_space<vmem>>, vector<32x128xf32>
    tpu.vector_store %arg8[%c0_23, %c0_24], %38 {strides = array<i32>} : memref<32x128xf32, #tpu.memory_space<vmem>>, vector<32x128xf32>,
    return
  }
  func.func @transform_0(%arg0: i32) -> (i32, i32) {
    %c0_i32 = arith.constant 0 : i32
    %c0_i32_0 = arith.constant 0 : i32
    return %arg0, %c0_i32 : i32, i32
  }
  func.func @transform_1(%arg0: i32) -> (i32, i32) {
    %c0_i32 = arith.constant 0 : i32
    %c0_i32_0 = arith.constant 0 : i32
    %c0_i32_1 = arith.constant 0 : i32
    return %c0_i32, %c0_i32_0 : i32, i32
  }
  func.func @transform_2(%arg0: i32) -> (i32, i32) {
    %c0_i32 = arith.constant 0 : i32
    %c0_i32_0 = arith.constant 0 : i32
    %c0_i32_1 = arith.constant 0 : i32
    return %c0_i32, %c0_i32_0 : i32, i32
  }
  func.func @transform_3(%arg0: i32) -> (i32, i32) {
    %c0_i32 = arith.constant 0 : i32
    %c0_i32_0 = arith.constant 0 : i32
    %c0_i32_1 = arith.constant 0 : i32
    return %c0_i32, %c0_i32_0 : i32, i32
  }
  func.func @transform_4(%arg0: i32) -> (i32, i32) {
    %c0_i32 = arith.constant 0 : i32
    %c0_i32_0 = arith.constant 0 : i32
    %c0_i32_1 = arith.constant 0 : i32
    return %c0_i32, %c0_i32_0 : i32, i32
  }
  func.func @transform_5(%arg0: i32) -> (i32, i32) {
    %c0_i32 = arith.constant 0 : i32
    %c0_i32_0 = arith.constant 0 : i32
    %c0_i32_1 = arith.constant 0 : i32
    return %c0_i32, %c0_i32_0 : i32, i32
  }
  func.func @transform_6(%arg0: i32) -> (i32, i32) {
    %c0_i32 = arith.constant 0 : i32
    %c0_i32_0 = arith.constant 0 : i32
    %c0_i32_1 = arith.constant 0 : i32
    return %c0_i32, %c0_i32_0 : i32, i32
  }
  func.func @transform_7(%arg0: i32) -> (i32, i32) {
    %c0_i32 = arith.constant 0 : i32
    %c0_i32_0 = arith.constant 0 : i32
    return %arg0, %c0_i32 : i32, i32
  }
  func.func @transform_8(%arg0: i32) -> (i32, i32) {
    %c0_i32 = arith.constant 0 : i32
    %c0_i32_0 = arith.constant 0 : i32
    return %arg0, %c0_i32 : i32, i32
  }
}

module attributes {stable_mosaic.version = 11 : i64} {
  func.func @_matmul_bias_kernel(%arg0: i32, %arg1: memref<128x576xf32, #tpu.memory_space<vmem>>, %arg2: memref<576x128xf32, #tpu.memory_space<vmem>>, %arg3: memref<1x128xf32, #tpu.memory_space<vmem>>, %arg4: memref<128x128xf32, #tpu.memory_space<vmem>>) attributes {dimension_semantics = [#tpu.dimension_semantics<parallel>], iteration_bounds = array<i64: 1>, scalar_prefetch = 0 : i64, scratch_operands = 0 : i64, tpu.core_type = #tpu.core_type<tc>, window_params = [{transform_indices = @transform_0, window_bounds = array<i64: 128, 576>}, {pipeline_mode = #tpu.pipeline_mode<synchronous>, transform_indices = @transform_1, window_bounds = array<i64: 576, 128>}, {pipeline_mode = #tpu.pipeline_mode<synchronous>, transform_indices = @transform_2, window_bounds = array<i64: 1, 128>}, {transform_indices = @transform_3, window_bounds = array<i64: 128, 128>}]} {
    %c0 = arith.constant 0 : index
    %c0_0 = arith.constant 0 : index
    %0 = vector.load %arg1[%c0, %c0_0] : memref<128x576xf32, #tpu.memory_space<vmem>>, vector<128x576xf32>
    %c0_1 = arith.constant 0 : index
    %c0_2 = arith.constant 0 : index
    %1 = vector.load %arg2[%c0_1, %c0_2] : memref<576x128xf32, #tpu.memory_space<vmem>>, vector<576x128xf32>
    %cst = arith.constant dense<0.000000e+00> : vector<128x128xf32>
    %2 = tpu.matmul %0, %1, %cst {dimension_numbers = #tpu.dot_dimension_numbers<[1], [0], [0], [1], [0, 0, 1, 1], [], []>} : vector<128x576xf32>, vector<576x128xf32>, vector<128x128xf32> -> vector<128x128xf32>
    %c0_3 = arith.constant 0 : index
    %c0_4 = arith.constant 0 : index
    %3 = vector.load %arg3[%c0_3, %c0_4] : memref<1x128xf32, #tpu.memory_space<vmem>>, vector<1x128xf32>
    %4 = vector.broadcast %3 : vector<1x128xf32> to vector<128x128xf32>
    %5 = arith.addf %2, %4 : vector<128x128xf32>
    %cst_5 = arith.constant 0.000000e+00 : f32
    %6 = vector.broadcast %cst_5 : f32 to vector<128x128xf32>
    %7 = arith.maximumf %5, %6 : vector<128x128xf32>
    %c0_6 = arith.constant 0 : index
    %c0_7 = arith.constant 0 : index
    %8 = vector.load %arg4[%c0_6, %c0_7] : memref<128x128xf32, #tpu.memory_space<vmem>>, vector<128x128xf32>
    tpu.vector_store %arg4[%c0_6, %c0_7], %7 {strides = array<i32>} : memref<128x128xf32, #tpu.memory_space<vmem>>, vector<128x128xf32>,
    return
  }
  func.func @transform_0(%arg0: i32) -> (i32, i32) {
    %c0_i32 = arith.constant 0 : i32
    %c0_i32_0 = arith.constant 0 : i32
    return %arg0, %c0_i32 : i32, i32
  }
  func.func @transform_1(%arg0: i32) -> (i32, i32) {
    %c0_i32 = arith.constant 0 : i32
    %c0_i32_0 = arith.constant 0 : i32
    %c0_i32_1 = arith.constant 0 : i32
    return %c0_i32, %c0_i32_0 : i32, i32
  }
  func.func @transform_2(%arg0: i32) -> (i32, i32) {
    %c0_i32 = arith.constant 0 : i32
    %c0_i32_0 = arith.constant 0 : i32
    %c0_i32_1 = arith.constant 0 : i32
    return %c0_i32, %c0_i32_0 : i32, i32
  }
  func.func @transform_3(%arg0: i32) -> (i32, i32) {
    %c0_i32 = arith.constant 0 : i32
    %c0_i32_0 = arith.constant 0 : i32
    return %arg0, %c0_i32 : i32, i32
  }
}

module attributes {stable_mosaic.version = 11 : i64} {
  func.func @_matmul_bias_kernel(%arg0: i32, %arg1: memref<512x288xf32, #tpu.memory_space<vmem>>, %arg2: memref<288x128xf32, #tpu.memory_space<vmem>>, %arg3: memref<1x128xf32, #tpu.memory_space<vmem>>, %arg4: memref<512x128xf32, #tpu.memory_space<vmem>>) attributes {dimension_semantics = [#tpu.dimension_semantics<parallel>], iteration_bounds = array<i64: 1>, scalar_prefetch = 0 : i64, scratch_operands = 0 : i64, tpu.core_type = #tpu.core_type<tc>, window_params = [{transform_indices = @transform_0, window_bounds = array<i64: 512, 288>}, {pipeline_mode = #tpu.pipeline_mode<synchronous>, transform_indices = @transform_1, window_bounds = array<i64: 288, 128>}, {pipeline_mode = #tpu.pipeline_mode<synchronous>, transform_indices = @transform_2, window_bounds = array<i64: 1, 128>}, {transform_indices = @transform_3, window_bounds = array<i64: 512, 128>}]} {
    %c0 = arith.constant 0 : index
    %c0_0 = arith.constant 0 : index
    %0 = vector.load %arg1[%c0, %c0_0] : memref<512x288xf32, #tpu.memory_space<vmem>>, vector<512x288xf32>
    %c0_1 = arith.constant 0 : index
    %c0_2 = arith.constant 0 : index
    %1 = vector.load %arg2[%c0_1, %c0_2] : memref<288x128xf32, #tpu.memory_space<vmem>>, vector<288x128xf32>
    %cst = arith.constant dense<0.000000e+00> : vector<512x128xf32>
    %2 = tpu.matmul %0, %1, %cst {dimension_numbers = #tpu.dot_dimension_numbers<[1], [0], [0], [1], [0, 0, 1, 1], [], []>} : vector<512x288xf32>, vector<288x128xf32>, vector<512x128xf32> -> vector<512x128xf32>
    %c0_3 = arith.constant 0 : index
    %c0_4 = arith.constant 0 : index
    %3 = vector.load %arg3[%c0_3, %c0_4] : memref<1x128xf32, #tpu.memory_space<vmem>>, vector<1x128xf32>
    %4 = vector.broadcast %3 : vector<1x128xf32> to vector<512x128xf32>
    %5 = arith.addf %2, %4 : vector<512x128xf32>
    %c0_5 = arith.constant 0 : index
    %c0_6 = arith.constant 0 : index
    %6 = vector.load %arg4[%c0_5, %c0_6] : memref<512x128xf32, #tpu.memory_space<vmem>>, vector<512x128xf32>
    tpu.vector_store %arg4[%c0_5, %c0_6], %5 {strides = array<i32>} : memref<512x128xf32, #tpu.memory_space<vmem>>, vector<512x128xf32>,
    return
  }
  func.func @transform_0(%arg0: i32) -> (i32, i32) {
    %c0_i32 = arith.constant 0 : i32
    %c0_i32_0 = arith.constant 0 : i32
    return %arg0, %c0_i32 : i32, i32
  }
  func.func @transform_1(%arg0: i32) -> (i32, i32) {
    %c0_i32 = arith.constant 0 : i32
    %c0_i32_0 = arith.constant 0 : i32
    %c0_i32_1 = arith.constant 0 : i32
    return %c0_i32, %c0_i32_0 : i32, i32
  }
  func.func @transform_2(%arg0: i32) -> (i32, i32) {
    %c0_i32 = arith.constant 0 : i32
    %c0_i32_0 = arith.constant 0 : i32
    %c0_i32_1 = arith.constant 0 : i32
    return %c0_i32, %c0_i32_0 : i32, i32
  }
  func.func @transform_3(%arg0: i32) -> (i32, i32) {
    %c0_i32 = arith.constant 0 : i32
    %c0_i32_0 = arith.constant 0 : i32
    return %arg0, %c0_i32 : i32, i32
  }
}

</mosaic_0001>

<llo_original>
// kernel: vqvae_forward.5
$region0: #{vqvae_forward.5}
  #allocation0 [shape = 'u32[]', space=smem, size = 0x4, offset = 0x4, fixed_abs, tag = 'smem constant byte address 0x4 - core index']
  #allocation1 [shape = 'u32[144,128]{1,0:T(1,128)}', space=vmem, size = 0x12000, scoped, tag = 'internal scratch']
  %s0 = inlined_call_operand.vmem [shape: f32[128,40], index: 0, kind: input, shape index: {}]
  %s1 = inlined_call_operand.vmem [shape: f32[40,128], index: 1, kind: input, shape index: {}]
  %s2 = inlined_call_operand.vmem [shape: f32[1,128], index: 2, kind: input, shape index: {}]
  %s3 = inlined_call_operand.vmem [shape: f32[128,128], index: 3, kind: output, shape index: {}]
  %s4 = sld [smem:[#allocation0]]
  $region22: #{vqvae_forward.5} parent=0
    _
  %s6 = ssub.s32 1, %s4
  %s7 = scalar_select 0, %s6, %s4
  // Predicated region
  $region2: #{vqvae_forward.5} parent=0 // pred_check
    _
  $region3: #{vqvae_forward.5} parent=0 // pred_check_branch
    %9 = sbr.rel (0) target = $region5
  $region4: #{vqvae_forward.5} parent=0 // pred_region
    _
  $region5: #{vqvae_forward.5} parent=0 // pred_fallthru
    _
  // Predicated region
  $region6: #{vqvae_forward.5} parent=0 // pred_check
    _
  $region7: #{vqvae_forward.5} parent=0 // pred_check_branch
    %11 = sbr.rel (0) target = $region9
  $region8: #{vqvae_forward.5} parent=0 // pred_region
    _
  $region9: #{vqvae_forward.5} parent=0 // pred_fallthru
    _
  // Predicated region
  $region10: #{vqvae_forward.5} parent=0 // pred_check
    _
  $region11: #{vqvae_forward.5} parent=0 // pred_check_branch
    %13 = sbr.rel (0) target = $region13
  $region12: #{vqvae_forward.5} parent=0 // pred_region
    _
  $region13: #{vqvae_forward.5} parent=0 // pred_fallthru
    _
  %v14 = vld [vmem:[%s0] sm:$0xff]
  %v15 = vld [vmem:[%s0 + $0x8] sm:$0xff]
  %v16 = vld [vmem:[%s0 + $0x10] sm:$0xff]
  %v17 = vld [vmem:[%s0 + $0x18] sm:$0xff]
  %v18 = vld [vmem:[%s0 + $0x20] sm:$0xff]
  %v19 = vld [vmem:[%s0 + $0x28] sm:$0xff]
  %v20 = vld [vmem:[%s0 + $0x30] sm:$0xff]
  %v21 = vld [vmem:[%s0 + $0x38] sm:$0xff]
  %v22 = vld [vmem:[%s0 + $0x40] sm:$0xff]
  %v23 = vld [vmem:[%s0 + $0x48] sm:$0xff]
  %v24 = vld [vmem:[%s0 + $0x50] sm:$0xff]
  %v25 = vld [vmem:[%s0 + $0x58] sm:$0xff]
  %v26 = vld [vmem:[%s0 + $0x60] sm:$0xff]
  %v27 = vld [vmem:[%s0 + $0x68] sm:$0xff]
  %v28 = vld [vmem:[%s0 + $0x70] sm:$0xff]
  %v29 = vld [vmem:[%s0 + $0x78] sm:$0xff]
  %v30 = vld [vmem:[%s1] sm:$0xff]
  %v31 = vld [vmem:[%s1 + $0x8] sm:$0xff]
  %v32 = vld [vmem:[%s1 + $0x10] sm:$0xff]
  %v33 = vld [vmem:[%s1 + $0x18] sm:$0xff]
  %v34 = vld [vmem:[%s1 + $0x20] sm:$0xff]
  %v35 = vld [vmem:[%s2] sm:$0x1]
  %v37 = vlaneseq
  %v38 = vshrl.u32 %v37, 7
  %v39 = vsub.s32 0, %v38
  %v40 = vrot.slane %v35, %v39
  %vm42 = vcmask 326656
  %v44 = vsel %vm42, %v14, 0
  %v47 = vsel %vm42, %v15, 0
  %v50 = vsel %vm42, %v16, 0
  %v53 = vsel %vm42, %v17, 0
  %v56 = vsel %vm42, %v18, 0
  %v59 = vsel %vm42, %v19, 0
  %v62 = vsel %vm42, %v20, 0
  %v65 = vsel %vm42, %v21, 0
  %v68 = vsel %vm42, %v22, 0
  %v71 = vsel %vm42, %v23, 0
  %v74 = vsel %vm42, %v24, 0
  %v77 = vsel %vm42, %v25, 0
  %v80 = vsel %vm42, %v26, 0
  %v83 = vsel %vm42, %v27, 0
  %v86 = vsel %vm42, %v28, 0
  %v89 = vsel %vm42, %v29, 0
  %91 = vmatprep.subr.mxu0 0.0
  %92 = vmatpush1.msra.mxu0 0.0
  %93 = vmatprep.subr.mxu0 0.0
  %94 = vmatpush1.msra.mxu0 0.0
  %95 = vmatprep.subr.mxu0 0.0
  %96 = vmatpush1.msra.mxu0 0.0
  %97 = vmatprep.subr.mxu0 0.0
  %98 = vmatpush1.msra.mxu0 0.0
  %99 = vmatprep.subr.mxu0 0.0
  %100 = vmatpush1.msra.mxu0 0.0
  %101 = vmatprep.subr.mxu0 0.0
  %102 = vmatpush1.msra.mxu0 0.0
  %103 = vmatprep.subr.mxu0 0.0
  %104 = vmatpush1.msra.mxu0 0.0
  %105 = vmatprep.subr.mxu0 0.0
  %106 = vmatpush1.msra.mxu0 0.0
  %107 = vmatprep.subr.mxu0 0.0
  %108 = vmatpush1.msra.mxu0 0.0
  %109 = vmatprep.subr.mxu0 0.0
  %110 = vmatpush1.msra.mxu0 0.0
  %111 = vmatprep.subr.mxu0 0.0
  %112 = vmatpush1.msra.mxu0 0.0
  %113 = vmatprep.subr.mxu0 0.0
  %114 = vmatpush1.msra.mxu0 %v34
  %115 = vmatprep.subr.mxu0 0.0
  %116 = vmatpush1.msra.mxu0 %v33
  %117 = vmatprep.subr.mxu0 0.0
  %118 = vmatpush1.msra.mxu0 %v32
  %119 = vmatprep.subr.mxu0 0.0
  %120 = vmatpush1.msra.mxu0 %v31
  %121 = vmatprep.subr.mxu0 0.0
  %122 = vmatpush1.msra.mxu0 %v30
  %123 = vmatprep.subr.mxu0 0.0
  %124 = vmatpush2.msra.mxu0 0.0
  %125 = vmatprep.subr.mxu0 0.0
  %126 = vmatpush2.msra.mxu0 0.0
  %127 = vmatprep.subr.mxu0 0.0
  %128 = vmatpush2.msra.mxu0 0.0
  %129 = vmatprep.subr.mxu0 0.0
  %130 = vmatpush2.msra.mxu0 0.0
  %131 = vmatprep.subr.mxu0 0.0
  %132 = vmatpush2.msra.mxu0 0.0
  %133 = vmatprep.subr.mxu0 0.0
  %134 = vmatpush2.msra.mxu0 0.0
  %135 = vmatprep.subr.mxu0 0.0
  %136 = vmatpush2.msra.mxu0 0.0
  %137 = vmatprep.subr.mxu0 0.0
  %138 = vmatpush2.msra.mxu0 0.0
  %139 = vmatprep.subr.mxu0 0.0
  %140 = vmatpush2.msra.mxu0 0.0
  %141 = vmatprep.subr.mxu0 0.0
  %142 = vmatpush2.msra.mxu0 0.0
  %143 = vmatprep.subr.mxu0 0.0
  %144 = vmatpush2.msra.mxu0 0.0
  %145 = vmatprep.subr.mxu0 0.0
  %146 = vmatpush2.msra.mxu0 0.0
  %147 = vmatprep.subr.mxu0 0.0
  %148 = vmatpush2.msra.mxu0 0.0
  %149 = vmatprep.subr.mxu0 0.0
  %150 = vmatpush2.msra.mxu0 0.0
  %151 = vmatprep.subr.mxu0 0.0
  %152 = vmatpush2.msra.mxu0 0.0
  %153 = vmatprep.subr.mxu0 0.0
  %154 = vmatpush2.msra.mxu0 0.0
  %155 = vmatprep.mubr.f32.mxu0 0.0
  %156 = vmatmul.mubr.f32.gmra.mxu0 %v44
  %v157 = vpop.f32.mrf.mxu0
  %v158 = vadd.f32 %v40, %v157
  %v159 = vpop.f32.mrf.mxu0
  %160 = vmatprep.mubr.f32.mxu0 0.0
  %161 = vmatmul.mubr.f32.gmra.mxu0 %v47
  %v162 = vpop.f32.mrf.mxu0
  %v163 = vadd.f32 %v40, %v162
  %v164 = vpop.f32.mrf.mxu0
  %165 = vmatprep.mubr.f32.mxu0 0.0
  %166 = vmatmul.mubr.f32.gmra.mxu0 %v50
  %v167 = vpop.f32.mrf.mxu0
  %v168 = vadd.f32 %v40, %v167
  %v169 = vpop.f32.mrf.mxu0
  %170 = vmatprep.mubr.f32.mxu0 0.0
  %171 = vmatmul.mubr.f32.gmra.mxu0 %v53
  %v172 = vpop.f32.mrf.mxu0
  %v173 = vadd.f32 %v40, %v172
  %v174 = vpop.f32.mrf.mxu0
  %175 = vmatprep.mubr.f32.mxu0 0.0
  %176 = vmatmul.mubr.f32.gmra.mxu0 %v56
  %v177 = vpop.f32.mrf.mxu0
  %v178 = vadd.f32 %v40, %v177
  %v179 = vpop.f32.mrf.mxu0
  %180 = vmatprep.mubr.f32.mxu0 0.0
  %181 = vmatmul.mubr.f32.gmra.mxu0 %v59
  %v182 = vpop.f32.mrf.mxu0
  %v183 = vadd.f32 %v40, %v182
  %v184 = vpop.f32.mrf.mxu0
  %185 = vmatprep.mubr.f32.mxu0 0.0
  %186 = vmatmul.mubr.f32.gmra.mxu0 %v62
  %v187 = vpop.f32.mrf.mxu0
  %v188 = vadd.f32 %v40, %v187
  %v189 = vpop.f32.mrf.mxu0
  %190 = vmatprep.mubr.f32.mxu0 0.0
  %191 = vmatmul.mubr.f32.gmra.mxu0 %v65
  %v192 = vpop.f32.mrf.mxu0
  %v193 = vadd.f32 %v40, %v192
  %v194 = vpop.f32.mrf.mxu0
  %195 = vmatprep.mubr.f32.mxu0 0.0
  %196 = vmatmul.mubr.f32.gmra.mxu0 %v68
  %v197 = vpop.f32.mrf.mxu0
  %v198 = vadd.f32 %v40, %v197
  %v199 = vpop.f32.mrf.mxu0
  %200 = vmatprep.mubr.f32.mxu0 0.0
  %201 = vmatmul.mubr.f32.gmra.mxu0 %v71
  %v202 = vpop.f32.mrf.mxu0
  %v203 = vadd.f32 %v40, %v202
  %v204 = vpop.f32.mrf.mxu0
  %205 = vmatprep.mubr.f32.mxu0 0.0
  %206 = vmatmul.mubr.f32.gmra.mxu0 %v74
  %v207 = vpop.f32.mrf.mxu0
  %v208 = vadd.f32 %v40, %v207
  %v209 = vpop.f32.mrf.mxu0
  %210 = vmatprep.mubr.f32.mxu0 0.0
  %211 = vmatmul.mubr.f32.gmra.mxu0 %v77
  %v212 = vpop.f32.mrf.mxu0
  %v213 = vadd.f32 %v40, %v212
  %v214 = vpop.f32.mrf.mxu0
  %215 = vmatprep.mubr.f32.mxu0 0.0
  %216 = vmatmul.mubr.f32.gmra.mxu0 %v80
  %v217 = vpop.f32.mrf.mxu0
  %v218 = vadd.f32 %v40, %v217
  %v219 = vpop.f32.mrf.mxu0
  %220 = vmatprep.mubr.f32.mxu0 0.0
  %221 = vmatmul.mubr.f32.gmra.mxu0 %v83
  %v222 = vpop.f32.mrf.mxu0
  %v223 = vadd.f32 %v40, %v222
  %v224 = vpop.f32.mrf.mxu0
  %225 = vmatprep.mubr.f32.mxu0 0.0
  %226 = vmatmul.mubr.f32.gmra.mxu0 %v86
  %v227 = vpop.f32.mrf.mxu0
  %v228 = vadd.f32 %v40, %v227
  %v229 = vpop.f32.mrf.mxu0
  %230 = vmatprep.mubr.f32.mxu0 0.0
  %231 = vmatmul.mubr.f32.gmra.mxu0 %v89
  %v232 = vpop.f32.mrf.mxu0
  %v233 = vadd.f32 %v40, %v232
  %v234 = vpop.f32.mrf.mxu0
  %235 = vdwg.mxu0
  %v236 = vmax.f32 %v158, 0.0
  %v237 = vmax.f32 %v163, 0.0
  %v238 = vmax.f32 %v168, 0.0
  %v239 = vmax.f32 %v173, 0.0
  %v240 = vmax.f32 %v178, 0.0
  %v241 = vmax.f32 %v183, 0.0
  %v242 = vmax.f32 %v188, 0.0
  %v243 = vmax.f32 %v193, 0.0
  %v244 = vmax.f32 %v198, 0.0
  %v245 = vmax.f32 %v203, 0.0
  %v246 = vmax.f32 %v208, 0.0
  %v247 = vmax.f32 %v213, 0.0
  %v248 = vmax.f32 %v218, 0.0
  %v249 = vmax.f32 %v223, 0.0
  %v250 = vmax.f32 %v228, 0.0
  %v251 = vmax.f32 %v233, 0.0
  %252 = vst [vmem:[%s3] sm:$0xff] %v236
  %253 = vst [vmem:[%s3 + $0x8] sm:$0xff] %v237
  %254 = vst [vmem:[%s3 + $0x10] sm:$0xff] %v238
  %255 = vst [vmem:[%s3 + $0x18] sm:$0xff] %v239
  %256 = vst [vmem:[%s3 + $0x20] sm:$0xff] %v240
  %257 = vst [vmem:[%s3 + $0x28] sm:$0xff] %v241
  %258 = vst [vmem:[%s3 + $0x30] sm:$0xff] %v242
  %259 = vst [vmem:[%s3 + $0x38] sm:$0xff] %v243
  %260 = vst [vmem:[%s3 + $0x40] sm:$0xff] %v244
  %261 = vst [vmem:[%s3 + $0x48] sm:$0xff] %v245
  %262 = vst [vmem:[%s3 + $0x50] sm:$0xff] %v246
  %263 = vst [vmem:[%s3 + $0x58] sm:$0xff] %v247
  %264 = vst [vmem:[%s3 + $0x60] sm:$0xff] %v248
  %265 = vst [vmem:[%s3 + $0x68] sm:$0xff] %v249
  %266 = vst [vmem:[%s3 + $0x70] sm:$0xff] %v250
  %267 = vst [vmem:[%s3 + $0x78] sm:$0xff] %v251
  // Predicated region
  $region14: #{vqvae_forward.5} parent=0 // pred_check
    _
  $region15: #{vqvae_forward.5} parent=0 // pred_check_branch
    %269 = sbr.rel (0) target = $region17
  $region16: #{vqvae_forward.5} parent=0 // pred_region
    _
  $region17: #{vqvae_forward.5} parent=0 // pred_fallthru
    _
  // Predicated region
  $region18: #{vqvae_forward.5} parent=0 // pred_check
    _
  $region19: #{vqvae_forward.5} parent=0 // pred_check_branch
    %271 = sbr.rel (0) target = $region21
  $region20: #{vqvae_forward.5} parent=0 // pred_region
    _
  $region21: #{vqvae_forward.5} parent=0 // pred_fallthru
    _

// kernel: vqvae_forward.6
$region0: #{vqvae_forward.6}
  #allocation0 [shape = 'u32[]', space=smem, size = 0x4, offset = 0x4, fixed_abs, tag = 'smem constant byte address 0x4 - core index']
  #allocation1 [shape = 'u32[144,128]{1,0:T(1,128)}', space=vmem, size = 0x12000, scoped, tag = 'internal scratch']
  %s0 = inlined_call_operand.vmem [shape: f32[32,288], index: 0, kind: input, shape index: {}]
  %s1 = inlined_call_operand.vmem [shape: f32[288,128], index: 1, kind: input, shape index: {}]
  %s2 = inlined_call_operand.vmem [shape: f32[1,128], index: 2, kind: input, shape index: {}]
  %s3 = inlined_call_operand.vmem [shape: f32[32,128], index: 3, kind: output, shape index: {}]
  %s4 = sld [smem:[#allocation0]]
  $region22: #{vqvae_forward.6} parent=0
    _
  %s6 = ssub.s32 1, %s4
  %s7 = scalar_select 0, %s6, %s4
  // Predicated region
  $region2: #{vqvae_forward.6} parent=0 // pred_check
    _
  $region3: #{vqvae_forward.6} parent=0 // pred_check_branch
    %9 = sbr.rel (0) target = $region5
  $region4: #{vqvae_forward.6} parent=0 // pred_region
    _
  $region5: #{vqvae_forward.6} parent=0 // pred_fallthru
    _
  // Predicated region
  $region6: #{vqvae_forward.6} parent=0 // pred_check
    _
  $region7: #{vqvae_forward.6} parent=0 // pred_check_branch
    %11 = sbr.rel (0) target = $region9
  $region8: #{vqvae_forward.6} parent=0 // pred_region
    _
  $region9: #{vqvae_forward.6} parent=0 // pred_fallthru
    _
  // Predicated region
  $region10: #{vqvae_forward.6} parent=0 // pred_check
    _
  $region11: #{vqvae_forward.6} parent=0 // pred_check_branch
    %13 = sbr.rel (0) target = $region13
  $region12: #{vqvae_forward.6} parent=0 // pred_region
    _
  $region13: #{vqvae_forward.6} parent=0 // pred_fallthru
    _
  %v14 = vld [vmem:[%s0] sm:$0xff]
  %v15 = vld [vmem:[%s0 + $0x8] sm:$0xff]
  %v16 = vld [vmem:[%s0 + $0x10] sm:$0xff]
  %v17 = vld [vmem:[%s0 + $0x18] sm:$0xff]
  %v18 = vld [vmem:[%s0 + $0x20] sm:$0xff]
  %v19 = vld [vmem:[%s0 + $0x28] sm:$0xff]
  %v20 = vld [vmem:[%s0 + $0x30] sm:$0xff]
  %v21 = vld [vmem:[%s0 + $0x38] sm:$0xff]
  %v22 = vld [vmem:[%s0 + $0x40] sm:$0xff]
  %v23 = vld [vmem:[%s0 + $0x48] sm:$0xff]
  %v24 = vld [vmem:[%s0 + $0x50] sm:$0xff]
  %v25 = vld [vmem:[%s0 + $0x58] sm:$0xff]
  %v26 = vld [vmem:[%s1] sm:$0xff]
  %v27 = vld [vmem:[%s1 + $0x8] sm:$0xff]
  %v28 = vld [vmem:[%s1 + $0x10] sm:$0xff]
  %v29 = vld [vmem:[%s1 + $0x18] sm:$0xff]
  %v30 = vld [vmem:[%s1 + $0x20] sm:$0xff]
  %v31 = vld [vmem:[%s1 + $0x28] sm:$0xff]
  %v32 = vld [vmem:[%s1 + $0x30] sm:$0xff]
  %v33 = vld [vmem:[%s1 + $0x38] sm:$0xff]
  %v34 = vld [vmem:[%s1 + $0x40] sm:$0xff]
  %v35 = vld [vmem:[%s1 + $0x48] sm:$0xff]
  %v36 = vld [vmem:[%s1 + $0x50] sm:$0xff]
  %v37 = vld [vmem:[%s1 + $0x58] sm:$0xff]
  %v38 = vld [vmem:[%s1 + $0x60] sm:$0xff]
  %v39 = vld [vmem:[%s1 + $0x68] sm:$0xff]
  %v40 = vld [vmem:[%s1 + $0x70] sm:$0xff]
  %v41 = vld [vmem:[%s1 + $0x78] sm:$0xff]
  %v42 = vld [vmem:[%s1 + $0x80] sm:$0xff]
  %v43 = vld [vmem:[%s1 + $0x88] sm:$0xff]
  %v44 = vld [vmem:[%s1 + $0x90] sm:$0xff]
  %v45 = vld [vmem:[%s1 + $0x98] sm:$0xff]
  %v46 = vld [vmem:[%s1 + $0xa0] sm:$0xff]
  %v47 = vld [vmem:[%s1 + $0xa8] sm:$0xff]
  %v48 = vld [vmem:[%s1 + $0xb0] sm:$0xff]
  %v49 = vld [vmem:[%s1 + $0xb8] sm:$0xff]
  %v50 = vld [vmem:[%s1 + $0xc0] sm:$0xff]
  %v51 = vld [vmem:[%s1 + $0xc8] sm:$0xff]
  %v52 = vld [vmem:[%s1 + $0xd0] sm:$0xff]
  %v53 = vld [vmem:[%s1 + $0xd8] sm:$0xff]
  %v54 = vld [vmem:[%s1 + $0xe0] sm:$0xff]
  %v55 = vld [vmem:[%s1 + $0xe8] sm:$0xff]
  %v56 = vld [vmem:[%s1 + $0xf0] sm:$0xff]
  %v57 = vld [vmem:[%s1 + $0xf8] sm:$0xff]
  %v58 = vld [vmem:[%s1 + $0x100] sm:$0xff]
  %v59 = vld [vmem:[%s1 + $0x108] sm:$0xff]
  %v60 = vld [vmem:[%s1 + $0x110] sm:$0xff]
  %v61 = vld [vmem:[%s1 + $0x118] sm:$0xff]
  %v62 = vld [vmem:[%s2] sm:$0x1]
  %v64 = vlaneseq
  %v65 = vshrl.u32 %v64, 7
  %v66 = vsub.s32 0, %v65
  %v67 = vrot.slane %v62, %v66
  %vm69 = vcmask 261120
  %v71 = vsel %vm69, %v16, 0
  %v74 = vsel %vm69, %v19, 0
  %v77 = vsel %vm69, %v22, 0
  %v80 = vsel %vm69, %v25, 0
  %82 = vmatprep.subr.mxu0 0.0
  %83 = vmatpush1.msra.mxu0 %v41
  %84 = vmatprep.subr.mxu0 0.0
  %85 = vmatpush1.msra.mxu0 %v40
  %86 = vmatprep.subr.mxu0 0.0
  %87 = vmatpush1.msra.mxu0 %v39
  %88 = vmatprep.subr.mxu0 0.0
  %89 = vmatpush1.msra.mxu0 %v38
  %90 = vmatprep.subr.mxu0 0.0
  %91 = vmatpush1.msra.mxu0 %v37
  %92 = vmatprep.subr.mxu0 0.0
  %93 = vmatpush1.msra.mxu0 %v36
  %94 = vmatprep.subr.mxu0 0.0
  %95 = vmatpush1.msra.mxu0 %v35
  %96 = vmatprep.subr.mxu0 0.0
  %97 = vmatpush1.msra.mxu0 %v34
  %98 = vmatprep.subr.mxu0 0.0
  %99 = vmatpush1.msra.mxu0 %v33
  %100 = vmatprep.subr.mxu0 0.0
  %101 = vmatpush1.msra.mxu0 %v32
  %102 = vmatprep.subr.mxu0 0.0
  %103 = vmatpush1.msra.mxu0 %v31
  %104 = vmatprep.subr.mxu0 0.0
  %105 = vmatpush1.msra.mxu0 %v30
  %106 = vmatprep.subr.mxu0 0.0
  %107 = vmatpush1.msra.mxu0 %v29
  %108 = vmatprep.subr.mxu0 0.0
  %109 = vmatpush1.msra.mxu0 %v28
  %110 = vmatprep.subr.mxu0 0.0
  %111 = vmatpush1.msra.mxu0 %v27
  %112 = vmatprep.subr.mxu0 0.0
  %113 = vmatpush1.msra.mxu0 %v26
  %114 = vmatprep.subr.mxu0 0.0
  %115 = vmatpush2.msra.mxu0 %v57
  %116 = vmatprep.subr.mxu0 0.0
  %117 = vmatpush2.msra.mxu0 %v56
  %118 = vmatprep.subr.mxu0 0.0
  %119 = vmatpush2.msra.mxu0 %v55
  %120 = vmatprep.subr.mxu0 0.0
  %121 = vmatpush2.msra.mxu0 %v54
  %122 = vmatprep.subr.mxu0 0.0
  %123 = vmatpush2.msra.mxu0 %v53
  %124 = vmatprep.subr.mxu0 0.0
  %125 = vmatpush2.msra.mxu0 %v52
  %126 = vmatprep.subr.mxu0 0.0
  %127 = vmatpush2.msra.mxu0 %v51
  %128 = vmatprep.subr.mxu0 0.0
  %129 = vmatpush2.msra.mxu0 %v50
  %130 = vmatprep.subr.mxu0 0.0
  %131 = vmatpush2.msra.mxu0 %v49
  %132 = vmatprep.subr.mxu0 0.0
  %133 = vmatpush2.msra.mxu0 %v48
  %134 = vmatprep.subr.mxu0 0.0
  %135 = vmatpush2.msra.mxu0 %v47
  %136 = vmatprep.subr.mxu0 0.0
  %137 = vmatpush2.msra.mxu0 %v46
  %138 = vmatprep.subr.mxu0 0.0
  %139 = vmatpush2.msra.mxu0 %v45
  %140 = vmatprep.subr.mxu0 0.0
  %141 = vmatpush2.msra.mxu0 %v44
  %142 = vmatprep.subr.mxu0 0.0
  %143 = vmatpush2.msra.mxu0 %v43
  %144 = vmatprep.subr.mxu0 0.0
  %145 = vmatpush2.msra.mxu0 %v42
  %146 = vmatprep.mubr.f32.mxu0 %v15
  %147 = vmatmul.mubr.f32.gmra.mxu0 %v14
  %v148 = vpop.f32.mrf.mxu0
  %v149 = vadd.f32 %v67, %v148
  %v150 = vpop.f32.mrf.mxu0
  %151 = vmatprep.mubr.f32.mxu0 %v18
  %152 = vmatmul.mubr.f32.gmra.mxu0 %v17
  %v153 = vpop.f32.mrf.mxu0
  %v154 = vadd.f32 %v67, %v153
  %v155 = vpop.f32.mrf.mxu0
  %156 = vmatprep.mubr.f32.mxu0 %v21
  %157 = vmatmul.mubr.f32.gmra.mxu0 %v20
  %v158 = vpop.f32.mrf.mxu0
  %v159 = vadd.f32 %v67, %v158
  %v160 = vpop.f32.mrf.mxu0
  %161 = vmatprep.mubr.f32.mxu0 %v24
  %162 = vmatmul.mubr.f32.gmra.mxu0 %v23
  %v163 = vpop.f32.mrf.mxu0
  %v164 = vadd.f32 %v67, %v163
  %v165 = vpop.f32.mrf.mxu0
  %166 = vdwg.mxu0
  %167 = vmatprep.subr.mxu0 0.0
  %168 = vmatpush1.msra.mxu0 0.0
  %169 = vmatprep.subr.mxu0 0.0
  %170 = vmatpush1.msra.mxu0 0.0
  %171 = vmatprep.subr.mxu0 0.0
  %172 = vmatpush1.msra.mxu0 0.0
  %173 = vmatprep.subr.mxu0 0.0
  %174 = vmatpush1.msra.mxu0 0.0
  %175 = vmatprep.subr.mxu0 0.0
  %176 = vmatpush1.msra.mxu0 0.0
  %177 = vmatprep.subr.mxu0 0.0
  %178 = vmatpush1.msra.mxu0 0.0
  %179 = vmatprep.subr.mxu0 0.0
  %180 = vmatpush1.msra.mxu0 0.0
  %181 = vmatprep.subr.mxu0 0.0
  %182 = vmatpush1.msra.mxu0 0.0
  %183 = vmatprep.subr.mxu0 0.0
  %184 = vmatpush1.msra.mxu0 0.0
  %185 = vmatprep.subr.mxu0 0.0
  %186 = vmatpush1.msra.mxu0 0.0
  %187 = vmatprep.subr.mxu0 0.0
  %188 = vmatpush1.msra.mxu0 0.0
  %189 = vmatprep.subr.mxu0 0.0
  %190 = vmatpush1.msra.mxu0 0.0
  %191 = vmatprep.subr.mxu0 0.0
  %192 = vmatpush1.msra.mxu0 %v61
  %193 = vmatprep.subr.mxu0 0.0
  %194 = vmatpush1.msra.mxu0 %v60
  %195 = vmatprep.subr.mxu0 0.0
  %196 = vmatpush1.msra.mxu0 %v59
  %197 = vmatprep.subr.mxu0 0.0
  %198 = vmatpush1.msra.mxu0 %v58
  %199 = vmatprep.subr.mxu0 0.0
  %200 = vmatpush2.msra.mxu0 0.0
  %201 = vmatprep.subr.mxu0 0.0
  %202 = vmatpush2.msra.mxu0 0.0
  %203 = vmatprep.subr.mxu0 0.0
  %204 = vmatpush2.msra.mxu0 0.0
  %205 = vmatprep.subr.mxu0 0.0
  %206 = vmatpush2.msra.mxu0 0.0
  %207 = vmatprep.subr.mxu0 0.0
  %208 = vmatpush2.msra.mxu0 0.0
  %209 = vmatprep.subr.mxu0 0.0
  %210 = vmatpush2.msra.mxu0 0.0
  %211 = vmatprep.subr.mxu0 0.0
  %212 = vmatpush2.msra.mxu0 0.0
  %213 = vmatprep.subr.mxu0 0.0
  %214 = vmatpush2.msra.mxu0 0.0
  %215 = vmatprep.subr.mxu0 0.0
  %216 = vmatpush2.msra.mxu0 0.0
  %217 = vmatprep.subr.mxu0 0.0
  %218 = vmatpush2.msra.mxu0 0.0
  %219 = vmatprep.subr.mxu0 0.0
  %220 = vmatpush2.msra.mxu0 0.0
  %221 = vmatprep.subr.mxu0 0.0
  %222 = vmatpush2.msra.mxu0 0.0
  %223 = vmatprep.subr.mxu0 0.0
  %224 = vmatpush2.msra.mxu0 0.0
  %225 = vmatprep.subr.mxu0 0.0
  %226 = vmatpush2.msra.mxu0 0.0
  %227 = vmatprep.subr.mxu0 0.0
  %228 = vmatpush2.msra.mxu0 0.0
  %229 = vmatprep.subr.mxu0 0.0
  %230 = vmatpush2.msra.mxu0 0.0
  %231 = vmatprep.mubr.f32.mxu0 0.0
  %232 = vmatmul.mubr.f32.gmra.mxu0 %v71
  %v233 = vpop.f32.mrf.mxu0
  %v234 = vadd.f32 %v149, %v233
  %v235 = vpop.f32.mrf.mxu0
  %236 = vmatprep.mubr.f32.mxu0 0.0
  %237 = vmatmul.mubr.f32.gmra.mxu0 %v74
  %v238 = vpop.f32.mrf.mxu0
  %v239 = vadd.f32 %v154, %v238
  %v240 = vpop.f32.mrf.mxu0
  %241 = vmatprep.mubr.f32.mxu0 0.0
  %242 = vmatmul.mubr.f32.gmra.mxu0 %v77
  %v243 = vpop.f32.mrf.mxu0
  %v244 = vadd.f32 %v159, %v243
  %v245 = vpop.f32.mrf.mxu0
  %246 = vmatprep.mubr.f32.mxu0 0.0
  %247 = vmatmul.mubr.f32.gmra.mxu0 %v80
  %v248 = vpop.f32.mrf.mxu0
  %v249 = vadd.f32 %v164, %v248
  %v250 = vpop.f32.mrf.mxu0
  %251 = vdwg.mxu0
  %v252 = vmax.f32 %v234, 0.0
  %v253 = vmax.f32 %v239, 0.0
  %v254 = vmax.f32 %v244, 0.0
  %v255 = vmax.f32 %v249, 0.0
  %256 = vst [vmem:[%s3] sm:$0xff] %v252
  %257 = vst [vmem:[%s3 + $0x8] sm:$0xff] %v253
  %258 = vst [vmem:[%s3 + $0x10] sm:$0xff] %v254
  %259 = vst [vmem:[%s3 + $0x18] sm:$0xff] %v255
  // Predicated region
  $region14: #{vqvae_forward.6} parent=0 // pred_check
    _
  $region15: #{vqvae_forward.6} parent=0 // pred_check_branch
    %261 = sbr.rel (0) target = $region17
  $region16: #{vqvae_forward.6} parent=0 // pred_region
    _
  $region17: #{vqvae_forward.6} parent=0 // pred_fallthru
    _
  // Predicated region
  $region18: #{vqvae_forward.6} parent=0 // pred_check
    _
  $region19: #{vqvae_forward.6} parent=0 // pred_check_branch
    %263 = sbr.rel (0) target = $region21
  $region20: #{vqvae_forward.6} parent=0 // pred_region
    _
  $region21: #{vqvae_forward.6} parent=0 // pred_fallthru
    _

// kernel: vqvae_forward.7
$region0: #{vqvae_forward.7}
  #allocation0 [shape = 'u32[]', space=smem, size = 0x4, offset = 0x4, fixed_abs, tag = 'smem constant byte address 0x4 - core index']
  #allocation1 [shape = 'u32[144,128]{1,0:T(1,128)}', space=vmem, size = 0x12000, scoped, tag = 'internal scratch']
  %s0 = inlined_call_operand.vmem [shape: f32[32,64], index: 0, kind: input, shape index: {}]
  %s1 = inlined_call_operand.vmem [shape: f32[64,128], index: 1, kind: input, shape index: {}]
  %s2 = inlined_call_operand.vmem [shape: f32[1,128], index: 2, kind: input, shape index: {}]
  %s3 = inlined_call_operand.vmem [shape: f32[128,128], index: 3, kind: input, shape index: {}]
  %s4 = inlined_call_operand.vmem [shape: f32[1,128], index: 4, kind: input, shape index: {}]
  %s5 = inlined_call_operand.vmem [shape: f32[128,128], index: 5, kind: input, shape index: {}]
  %s6 = inlined_call_operand.vmem [shape: f32[1,128], index: 6, kind: input, shape index: {}]
  %s7 = inlined_call_operand.vmem [shape: f32[32,128], index: 7, kind: output, shape index: {0}]
  %s8 = inlined_call_operand.vmem [shape: f32[32,1], index: 8, kind: output, shape index: {1}]
  %9 = xla_tuple %s7, %s8
  %s10 = sld [smem:[#allocation0]]
  $region46: #{vqvae_forward.7} parent=0
    _
  %s12 = ssub.s32 1, %s10
  %s13 = scalar_select 0, %s12, %s10
  // Predicated region
  $region2: #{vqvae_forward.7} parent=0 // pred_check
    _
  $region3: #{vqvae_forward.7} parent=0 // pred_check_branch
    %15 = sbr.rel (0) target = $region5
  $region4: #{vqvae_forward.7} parent=0 // pred_region
    _
  $region5: #{vqvae_forward.7} parent=0 // pred_fallthru
    _
  // Predicated region
  $region6: #{vqvae_forward.7} parent=0 // pred_check
    _
  $region7: #{vqvae_forward.7} parent=0 // pred_check_branch
    %17 = sbr.rel (0) target = $region9
  $region8: #{vqvae_forward.7} parent=0 // pred_region
    _
  $region9: #{vqvae_forward.7} parent=0 // pred_fallthru
    _
  // Predicated region
  $region10: #{vqvae_forward.7} parent=0 // pred_check
    _
  $region11: #{vqvae_forward.7} parent=0 // pred_check_branch
    %19 = sbr.rel (0) target = $region13
  $region12: #{vqvae_forward.7} parent=0 // pred_region
    _
  $region13: #{vqvae_forward.7} parent=0 // pred_fallthru
    _
  // Predicated region
  $region14: #{vqvae_forward.7} parent=0 // pred_check
    _
  $region15: #{vqvae_forward.7} parent=0 // pred_check_branch
    %21 = sbr.rel (0) target = $region17
  $region16: #{vqvae_forward.7} parent=0 // pred_region
    _
  $region17: #{vqvae_forward.7} parent=0 // pred_fallthru
    _
  // Predicated region
  $region18: #{vqvae_forward.7} parent=0 // pred_check
    _
  $region19: #{vqvae_forward.7} parent=0 // pred_check_branch
    %23 = sbr.rel (0) target = $region21
  $region20: #{vqvae_forward.7} parent=0 // pred_region
    _
  $region21: #{vqvae_forward.7} parent=0 // pred_fallthru
    _
  // Predicated region
  $region22: #{vqvae_forward.7} parent=0 // pred_check
    _
  $region23: #{vqvae_forward.7} parent=0 // pred_check_branch
    %25 = sbr.rel (0) target = $region25
  $region24: #{vqvae_forward.7} parent=0 // pred_region
    _
  $region25: #{vqvae_forward.7} parent=0 // pred_fallthru
    _
  // Predicated region
  $region26: #{vqvae_forward.7} parent=0 // pred_check
    _
  $region27: #{vqvae_forward.7} parent=0 // pred_check_branch
    %27 = sbr.rel (0) target = $region29
  $region28: #{vqvae_forward.7} parent=0 // pred_region
    _
  $region29: #{vqvae_forward.7} parent=0 // pred_fallthru
    _
  %v28 = vld [vmem:[%s0] sm:$0xff]
  %v29 = vld [vmem:[%s0 + $0x8] sm:$0xff]
  %v30 = vld [vmem:[%s0 + $0x10] sm:$0xff]
  %v31 = vld [vmem:[%s0 + $0x18] sm:$0xff]
  %v32 = vld [vmem:[%s1] sm:$0xff]
  %v33 = vld [vmem:[%s1 + $0x8] sm:$0xff]
  %v34 = vld [vmem:[%s1 + $0x10] sm:$0xff]
  %v35 = vld [vmem:[%s1 + $0x18] sm:$0xff]
  %v36 = vld [vmem:[%s1 + $0x20] sm:$0xff]
  %v37 = vld [vmem:[%s1 + $0x28] sm:$0xff]
  %v38 = vld [vmem:[%s1 + $0x30] sm:$0xff]
  %v39 = vld [vmem:[%s1 + $0x38] sm:$0xff]
  %v40 = vld [vmem:[%s2] sm:$0x1]
  %v42 = vlaneseq
  %v43 = vshrl.u32 %v42, 7
  %v44 = vsub.s32 0, %v43
  %v45 = vrot.slane %v40, %v44
  %vm47 = vcmask 523264
  %v49 = vsel %vm47, %v28, 0
  %v52 = vsel %vm47, %v29, 0
  %v55 = vsel %vm47, %v30, 0
  %v58 = vsel %vm47, %v31, 0
  %60 = vmatprep.subr.mxu0 0.0
  %61 = vmatpush1.msra.mxu0 0.0
  %62 = vmatprep.subr.mxu0 0.0
  %63 = vmatpush1.msra.mxu0 0.0
  %64 = vmatprep.subr.mxu0 0.0
  %65 = vmatpush1.msra.mxu0 0.0
  %66 = vmatprep.subr.mxu0 0.0
  %67 = vmatpush1.msra.mxu0 0.0
  %68 = vmatprep.subr.mxu0 0.0
  %69 = vmatpush1.msra.mxu0 0.0
  %70 = vmatprep.subr.mxu0 0.0
  %71 = vmatpush1.msra.mxu0 0.0
  %72 = vmatprep.subr.mxu0 0.0
  %73 = vmatpush1.msra.mxu0 0.0
  %74 = vmatprep.subr.mxu0 0.0
  %75 = vmatpush1.msra.mxu0 0.0
  %76 = vmatprep.subr.mxu0 0.0
  %77 = vmatpush1.msra.mxu0 %v39
  %78 = vmatprep.subr.mxu0 0.0
  %79 = vmatpush1.msra.mxu0 %v38
  %80 = vmatprep.subr.mxu0 0.0
  %81 = vmatpush1.msra.mxu0 %v37
  %82 = vmatprep.subr.mxu0 0.0
  %83 = vmatpush1.msra.mxu0 %v36
  %84 = vmatprep.subr.mxu0 0.0
  %85 = vmatpush1.msra.mxu0 %v35
  %86 = vmatprep.subr.mxu0 0.0
  %87 = vmatpush1.msra.mxu0 %v34
  %88 = vmatprep.subr.mxu0 0.0
  %89 = vmatpush1.msra.mxu0 %v33
  %90 = vmatprep.subr.mxu0 0.0
  %91 = vmatpush1.msra.mxu0 %v32
  %92 = vmatprep.subr.mxu0 0.0
  %93 = vmatpush2.msra.mxu0 0.0
  %94 = vmatprep.subr.mxu0 0.0
  %95 = vmatpush2.msra.mxu0 0.0
  %96 = vmatprep.subr.mxu0 0.0
  %97 = vmatpush2.msra.mxu0 0.0
  %98 = vmatprep.subr.mxu0 0.0
  %99 = vmatpush2.msra.mxu0 0.0
  %100 = vmatprep.subr.mxu0 0.0
  %101 = vmatpush2.msra.mxu0 0.0
  %102 = vmatprep.subr.mxu0 0.0
  %103 = vmatpush2.msra.mxu0 0.0
  %104 = vmatprep.subr.mxu0 0.0
  %105 = vmatpush2.msra.mxu0 0.0
  %106 = vmatprep.subr.mxu0 0.0
  %107 = vmatpush2.msra.mxu0 0.0
  %108 = vmatprep.subr.mxu0 0.0
  %109 = vmatpush2.msra.mxu0 0.0
  %110 = vmatprep.subr.mxu0 0.0
  %111 = vmatpush2.msra.mxu0 0.0
  %112 = vmatprep.subr.mxu0 0.0
  %113 = vmatpush2.msra.mxu0 0.0
  %114 = vmatprep.subr.mxu0 0.0
  %115 = vmatpush2.msra.mxu0 0.0
  %116 = vmatprep.subr.mxu0 0.0
  %117 = vmatpush2.msra.mxu0 0.0
  %118 = vmatprep.subr.mxu0 0.0
  %119 = vmatpush2.msra.mxu0 0.0
  %120 = vmatprep.subr.mxu0 0.0
  %121 = vmatpush2.msra.mxu0 0.0
  %122 = vmatprep.subr.mxu0 0.0
  %123 = vmatpush2.msra.mxu0 0.0
  %124 = vmatprep.mubr.f32.mxu0 0.0
  %125 = vmatmul.mubr.f32.gmra.mxu0 %v49
  %v126 = vpop.f32.mrf.mxu0
  %v127 = vadd.f32 %v45, %v126
  %v128 = vpop.f32.mrf.mxu0
  %129 = vmatprep.mubr.f32.mxu0 0.0
  %130 = vmatmul.mubr.f32.gmra.mxu0 %v52
  %v131 = vpop.f32.mrf.mxu0
  %v132 = vadd.f32 %v45, %v131
  %v133 = vpop.f32.mrf.mxu0
  %134 = vmatprep.mubr.f32.mxu0 0.0
  %135 = vmatmul.mubr.f32.gmra.mxu0 %v55
  %v136 = vpop.f32.mrf.mxu0
  %v137 = vadd.f32 %v45, %v136
  %v138 = vpop.f32.mrf.mxu0
  %139 = vmatprep.mubr.f32.mxu0 0.0
  %140 = vmatmul.mubr.f32.gmra.mxu0 %v58
  %v141 = vpop.f32.mrf.mxu0
  %v142 = vadd.f32 %v45, %v141
  %v143 = vpop.f32.mrf.mxu0
  %144 = vdwg.mxu0
  %v145 = vld [vmem:[%s3] sm:$0xff]
  %v146 = vld [vmem:[%s3 + $0x8] sm:$0xff]
  %v147 = vld [vmem:[%s3 + $0x10] sm:$0xff]
  %v148 = vld [vmem:[%s3 + $0x18] sm:$0xff]
  %v149 = vld [vmem:[%s3 + $0x20] sm:$0xff]
  %v150 = vld [vmem:[%s3 + $0x28] sm:$0xff]
  %v151 = vld [vmem:[%s3 + $0x30] sm:$0xff]
  %v152 = vld [vmem:[%s3 + $0x38] sm:$0xff]
  %v153 = vld [vmem:[%s3 + $0x40] sm:$0xff]
  %v154 = vld [vmem:[%s3 + $0x48] sm:$0xff]
  %v155 = vld [vmem:[%s3 + $0x50] sm:$0xff]
  %v156 = vld [vmem:[%s3 + $0x58] sm:$0xff]
  %v157 = vld [vmem:[%s3 + $0x60] sm:$0xff]
  %v158 = vld [vmem:[%s3 + $0x68] sm:$0xff]
  %v159 = vld [vmem:[%s3 + $0x70] sm:$0xff]
  %v160 = vld [vmem:[%s3 + $0x78] sm:$0xff]
  %161 = vmatprep.subr.mxu0 0.0
  %162 = vmatpush1.xpose.msra.mxu0 %v160
  %163 = vmatprep.subr.mxu0 0.0
  %164 = vmatpush1.xpose.msra.mxu0 %v159
  %165 = vmatprep.subr.mxu0 0.0
  %166 = vmatpush1.xpose.msra.mxu0 %v158
  %167 = vmatprep.subr.mxu0 0.0
  %168 = vmatpush1.xpose.msra.mxu0 %v157
  %169 = vmatprep.subr.mxu0 0.0
  %170 = vmatpush1.xpose.msra.mxu0 %v156
  %171 = vmatprep.subr.mxu0 0.0
  %172 = vmatpush1.xpose.msra.mxu0 %v155
  %173 = vmatprep.subr.mxu0 0.0
  %174 = vmatpush1.xpose.msra.mxu0 %v154
  %175 = vmatprep.subr.mxu0 0.0
  %176 = vmatpush1.xpose.msra.mxu0 %v153
  %177 = vmatprep.subr.mxu0 0.0
  %178 = vmatpush1.xpose.msra.mxu0 %v152
  %179 = vmatprep.subr.mxu0 0.0
  %180 = vmatpush1.xpose.msra.mxu0 %v151
  %181 = vmatprep.subr.mxu0 0.0
  %182 = vmatpush1.xpose.msra.mxu0 %v150
  %183 = vmatprep.subr.mxu0 0.0
  %184 = vmatpush1.xpose.msra.mxu0 %v149
  %185 = vmatprep.subr.mxu0 0.0
  %186 = vmatpush1.xpose.msra.mxu0 %v148
  %187 = vmatprep.subr.mxu0 0.0
  %188 = vmatpush1.xpose.msra.mxu0 %v147
  %189 = vmatprep.subr.mxu0 0.0
  %190 = vmatpush1.xpose.msra.mxu0 %v146
  %191 = vmatprep.subr.mxu0 0.0
  %192 = vmatpush1.xpose.msra.mxu0 %v145
  %193 = vmatprep.subr.mxu0 0.0
  %194 = vmatpush2.xpose.msra.mxu0 0.0
  %195 = vmatprep.subr.mxu0 0.0
  %196 = vmatpush2.xpose.msra.mxu0 0.0
  %197 = vmatprep.subr.mxu0 0.0
  %198 = vmatpush2.xpose.msra.mxu0 0.0
  %199 = vmatprep.subr.mxu0 0.0
  %200 = vmatpush2.xpose.msra.mxu0 0.0
  %201 = vmatprep.subr.mxu0 0.0
  %202 = vmatpush2.xpose.msra.mxu0 0.0
  %203 = vmatprep.subr.mxu0 0.0
  %204 = vmatpush2.xpose.msra.mxu0 0.0
  %205 = vmatprep.subr.mxu0 0.0
  %206 = vmatpush2.xpose.msra.mxu0 0.0
  %207 = vmatprep.subr.mxu0 0.0
  %208 = vmatpush2.xpose.msra.mxu0 0.0
  %209 = vmatprep.subr.mxu0 0.0
  %210 = vmatpush2.xpose.msra.mxu0 0.0
  %211 = vmatprep.subr.mxu0 0.0
  %212 = vmatpush2.xpose.msra.mxu0 0.0
  %213 = vmatprep.subr.mxu0 0.0
  %214 = vmatpush2.xpose.msra.mxu0 0.0
  %215 = vmatprep.subr.mxu0 0.0
  %216 = vmatpush2.xpose.msra.mxu0 0.0
  %217 = vmatprep.subr.mxu0 0.0
  %218 = vmatpush2.xpose.msra.mxu0 0.0
  %219 = vmatprep.subr.mxu0 0.0
  %220 = vmatpush2.xpose.msra.mxu0 0.0
  %221 = vmatprep.subr.mxu0 0.0
  %222 = vmatpush2.xpose.msra.mxu0 0.0
  %223 = vmatprep.subr.mxu0 0.0
  %224 = vmatpush2.xpose.msra.mxu0 0.0
  %225 = vmatprep.mubr.f32.mxu0 0.0
  %226 = vmatmul.mubr.f32.gmra.mxu0 %v127
  %v227 = vpop.f32.mrf.mxu0
  %v228 = vadd.f32 0.0, %v227
  %v229 = vpop.f32.mrf.mxu0
  %230 = vmatprep.mubr.f32.mxu0 0.0
  %231 = vmatmul.mubr.f32.gmra.mxu0 %v132
  %v232 = vpop.f32.mrf.mxu0
  %v233 = vadd.f32 0.0, %v232
  %v234 = vpop.f32.mrf.mxu0
  %235 = vmatprep.mubr.f32.mxu0 0.0
  %236 = vmatmul.mubr.f32.gmra.mxu0 %v137
  %v237 = vpop.f32.mrf.mxu0
  %v238 = vadd.f32 0.0, %v237
  %v239 = vpop.f32.mrf.mxu0
  %240 = vmatprep.mubr.f32.mxu0 0.0
  %241 = vmatmul.mubr.f32.gmra.mxu0 %v142
  %v242 = vpop.f32.mrf.mxu0
  %v243 = vadd.f32 0.0, %v242
  %v244 = vpop.f32.mrf.mxu0
  %245 = vdwg.mxu0
  %v246 = vld [vmem:[%s4] sm:$0x1]
  %v247 = vmul.f32 %v228, 2.0
  %v248 = vmul.f32 %v233, 2.0
  %v249 = vmul.f32 %v238, 2.0
  %v250 = vmul.f32 %v243, 2.0
  %v252 = vlaneseq
  %v253 = vshrl.u32 %v252, 7
  %v254 = vsub.s32 0, %v253
  %v255 = vrot.slane %v246, %v254
  %v257 = vsub.f32 %v255, %v247
  %v258 = vsub.f32 %v255, %v248
  %v259 = vsub.f32 %v255, %v249
  %v260 = vsub.f32 %v255, %v250
  %261 = vmin.xlane.f32.xlu0 %v257
  %v262 = vpop.xlane.xlu0 %261
  %263 = vmin.xlane.f32.xlu0 %v258
  %v264 = vpop.xlane.xlu0 %263
  %265 = vmin.xlane.f32.xlu0 %v259
  %v266 = vpop.xlane.xlu0 %265
  %267 = vmin.xlane.f32.xlu0 %v260
  %v268 = vpop.xlane.xlu0 %267
  %v269 = vlaneseq
  %v270 = vand.u32 %v269, 127
  %vm271 = vcmp.eq.f32.partialorder %v257, %v262
  %vm272 = vcmp.eq.f32.partialorder %v258, %v264
  %vm273 = vcmp.eq.f32.partialorder %v259, %v266
  %vm274 = vcmp.eq.f32.partialorder %v260, %v268
  %v275 = vsel %vm271, %v270, 128
  %v276 = vsel %vm272, %v270, 128
  %v277 = vsel %vm273, %v270, 128
  %v278 = vsel %vm274, %v270, 128
  %v279 = vand.u32 %v275, 65535
  %v280 = vshra.s32 %v275, 16
  %v281 = vcvt.s32.f32 %v279
  %v282 = vcvt.s32.f32 %v280
  %283 = vmin.xlane.f32.xlu0 %v282
  %v284 = vpop.xlane.xlu0 %283
  %vm285 = vcmp.eq.f32.partialorder %v282, %v284
  %v286 = vsel %vm285, %v281, inf
  %287 = vmin.xlane.f32.xlu0 %v286
  %v288 = vpop.xlane.xlu0 %287
  %v289 = vcvt.f32.s32 %v288
  %v290 = vcvt.f32.s32 %v284
  %v291 = vshll.u32 %v290, 16
  %v292 = vadd.s32 %v291, %v289
  %v293 = vand.u32 %v276, 65535
  %v294 = vshra.s32 %v276, 16
  %v295 = vcvt.s32.f32 %v293
  %v296 = vcvt.s32.f32 %v294
  %297 = vmin.xlane.f32.xlu0 %v296
  %v298 = vpop.xlane.xlu0 %297
  %vm299 = vcmp.eq.f32.partialorder %v296, %v298
  %v300 = vsel %vm299, %v295, inf
  %301 = vmin.xlane.f32.xlu0 %v300
  %v302 = vpop.xlane.xlu0 %301
  %v303 = vcvt.f32.s32 %v302
  %v304 = vcvt.f32.s32 %v298
  %v305 = vshll.u32 %v304, 16
  %v306 = vadd.s32 %v305, %v303
  %v307 = vand.u32 %v277, 65535
  %v308 = vshra.s32 %v277, 16
  %v309 = vcvt.s32.f32 %v307
  %v310 = vcvt.s32.f32 %v308
  %311 = vmin.xlane.f32.xlu0 %v310
  %v312 = vpop.xlane.xlu0 %311
  %vm313 = vcmp.eq.f32.partialorder %v310, %v312
  %v314 = vsel %vm313, %v309, inf
  %315 = vmin.xlane.f32.xlu0 %v314
  %v316 = vpop.xlane.xlu0 %315
  %v317 = vcvt.f32.s32 %v316
  %v318 = vcvt.f32.s32 %v312
  %v319 = vshll.u32 %v318, 16
  %v320 = vadd.s32 %v319, %v317
  %v321 = vand.u32 %v278, 65535
  %v322 = vshra.s32 %v278, 16
  %v323 = vcvt.s32.f32 %v321
  %v324 = vcvt.s32.f32 %v322
  %325 = vmin.xlane.f32.xlu0 %v324
  %v326 = vpop.xlane.xlu0 %325
  %vm327 = vcmp.eq.f32.partialorder %v324, %v326
  %v328 = vsel %vm327, %v323, inf
  %329 = vmin.xlane.f32.xlu0 %v328
  %v330 = vpop.xlane.xlu0 %329
  %v331 = vcvt.f32.s32 %v330
  %v332 = vcvt.f32.s32 %v326
  %v333 = vshll.u32 %v332, 16
  %v334 = vadd.s32 %v333, %v331
  %vm335 = vcmp.eq.s32.totalorder %v270, %v292
  %vm336 = vcmp.eq.s32.totalorder %v270, %v306
  %vm337 = vcmp.eq.s32.totalorder %v270, %v320
  %vm338 = vcmp.eq.s32.totalorder %v270, %v334
  %v339 = vsel %vm335, 1, 0
  %v340 = vsel %vm336, 1, 0
  %v341 = vsel %vm337, 1, 0
  %v342 = vsel %vm338, 1, 0
  %v343 = vcvt.s32.f32 %v339
  %v344 = vcvt.s32.f32 %v340
  %v345 = vcvt.s32.f32 %v341
  %v346 = vcvt.s32.f32 %v342
  %347 = vmatprep.subr.mxu0 0.0
  %348 = vmatpush1.msra.mxu0 %v160
  %349 = vmatprep.subr.mxu0 0.0
  %350 = vmatpush1.msra.mxu0 %v159
  %351 = vmatprep.subr.mxu0 0.0
  %352 = vmatpush1.msra.mxu0 %v158
  %353 = vmatprep.subr.mxu0 0.0
  %354 = vmatpush1.msra.mxu0 %v157
  %355 = vmatprep.subr.mxu0 0.0
  %356 = vmatpush1.msra.mxu0 %v156
  %357 = vmatprep.subr.mxu0 0.0
  %358 = vmatpush1.msra.mxu0 %v155
  %359 = vmatprep.subr.mxu0 0.0
  %360 = vmatpush1.msra.mxu0 %v154
  %361 = vmatprep.subr.mxu0 0.0
  %362 = vmatpush1.msra.mxu0 %v153
  %363 = vmatprep.subr.mxu0 0.0
  %364 = vmatpush1.msra.mxu0 %v152
  %365 = vmatprep.subr.mxu0 0.0
  %366 = vmatpush1.msra.mxu0 %v151
  %367 = vmatprep.subr.mxu0 0.0
  %368 = vmatpush1.msra.mxu0 %v150
  %369 = vmatprep.subr.mxu0 0.0
  %370 = vmatpush1.msra.mxu0 %v149
  %371 = vmatprep.subr.mxu0 0.0
  %372 = vmatpush1.msra.mxu0 %v148
  %373 = vmatprep.subr.mxu0 0.0
  %374 = vmatpush1.msra.mxu0 %v147
  %375 = vmatprep.subr.mxu0 0.0
  %376 = vmatpush1.msra.mxu0 %v146
  %377 = vmatprep.subr.mxu0 0.0
  %378 = vmatpush1.msra.mxu0 %v145
  %379 = vmatprep.subr.mxu0 0.0
  %380 = vmatpush2.msra.mxu0 0.0
  %381 = vmatprep.subr.mxu0 0.0
  %382 = vmatpush2.msra.mxu0 0.0
  %383 = vmatprep.subr.mxu0 0.0
  %384 = vmatpush2.msra.mxu0 0.0
  %385 = vmatprep.subr.mxu0 0.0
  %386 = vmatpush2.msra.mxu0 0.0
  %387 = vmatprep.subr.mxu0 0.0
  %388 = vmatpush2.msra.mxu0 0.0
  %389 = vmatprep.subr.mxu0 0.0
  %390 = vmatpush2.msra.mxu0 0.0
  %391 = vmatprep.subr.mxu0 0.0
  %392 = vmatpush2.msra.mxu0 0.0
  %393 = vmatprep.subr.mxu0 0.0
  %394 = vmatpush2.msra.mxu0 0.0
  %395 = vmatprep.subr.mxu0 0.0
  %396 = vmatpush2.msra.mxu0 0.0
  %397 = vmatprep.subr.mxu0 0.0
  %398 = vmatpush2.msra.mxu0 0.0
  %399 = vmatprep.subr.mxu0 0.0
  %400 = vmatpush2.msra.mxu0 0.0
  %401 = vmatprep.subr.mxu0 0.0
  %402 = vmatpush2.msra.mxu0 0.0
  %403 = vmatprep.subr.mxu0 0.0
  %404 = vmatpush2.msra.mxu0 0.0
  %405 = vmatprep.subr.mxu0 0.0
  %406 = vmatpush2.msra.mxu0 0.0
  %407 = vmatprep.subr.mxu0 0.0
  %408 = vmatpush2.msra.mxu0 0.0
  %409 = vmatprep.subr.mxu0 0.0
  %410 = vmatpush2.msra.mxu0 0.0
  %411 = vmatprep.mubr.f32.mxu0 0.0
  %412 = vmatmul.mubr.f32.gmra.mxu0 %v343
  %v413 = vpop.f32.mrf.mxu0
  %v414 = vadd.f32 0.0, %v413
  %v415 = vpop.f32.mrf.mxu0
  %416 = vmatprep.mubr.f32.mxu0 0.0
  %417 = vmatmul.mubr.f32.gmra.mxu0 %v344
  %v418 = vpop.f32.mrf.mxu0
  %v419 = vadd.f32 0.0, %v418
  %v420 = vpop.f32.mrf.mxu0
  %421 = vmatprep.mubr.f32.mxu0 0.0
  %422 = vmatmul.mubr.f32.gmra.mxu0 %v345
  %v423 = vpop.f32.mrf.mxu0
  %v424 = vadd.f32 0.0, %v423
  %v425 = vpop.f32.mrf.mxu0
  %426 = vmatprep.mubr.f32.mxu0 0.0
  %427 = vmatmul.mubr.f32.gmra.mxu0 %v346
  %v428 = vpop.f32.mrf.mxu0
  %v429 = vadd.f32 0.0, %v428
  %v430 = vpop.f32.mrf.mxu0
  %431 = vdwg.mxu0
  %v432 = vsub.f32 %v414, %v127
  %v433 = vsub.f32 %v419, %v132
  %v434 = vsub.f32 %v424, %v137
  %v435 = vsub.f32 %v429, %v142
  %v436 = vmul.f32 %v432, %v432
  %v437 = vmul.f32 %v433, %v433
  %v438 = vmul.f32 %v434, %v434
  %v439 = vmul.f32 %v435, %v435
  %440 = vadd.xlane.f32.xlu0 %v436
  %v441 = vpop.xlane.xlu0 %440
  %442 = vadd.xlane.f32.xlu0 %v437
  %v443 = vpop.xlane.xlu0 %442
  %444 = vadd.xlane.f32.xlu0 %v438
  %v445 = vpop.xlane.xlu0 %444
  %446 = vadd.xlane.f32.xlu0 %v439
  %v447 = vpop.xlane.xlu0 %446
  %vm448 = vcmask 7168
  %449 = vst.msk [vmem:[%s8] sm:$0xff] %vm448, %v441
  %450 = vst.msk [vmem:[%s8 + $0x8] sm:$0xff] %vm448, %v443
  %451 = vst.msk [vmem:[%s8 + $0x10] sm:$0xff] %vm448, %v445
  %452 = vst.msk [vmem:[%s8 + $0x18] sm:$0xff] %vm448, %v447
  %v453 = vld [vmem:[%s5] sm:$0xff]
  %v454 = vld [vmem:[%s5 + $0x8] sm:$0xff]
  %v455 = vld [vmem:[%s5 + $0x10] sm:$0xff]
  %v456 = vld [vmem:[%s5 + $0x18] sm:$0xff]
  %v457 = vld [vmem:[%s5 + $0x20] sm:$0xff]
  %v458 = vld [vmem:[%s5 + $0x28] sm:$0xff]
  %v459 = vld [vmem:[%s5 + $0x30] sm:$0xff]
  %v460 = vld [vmem:[%s5 + $0x38] sm:$0xff]
  %v461 = vld [vmem:[%s5 + $0x40] sm:$0xff]
  %v462 = vld [vmem:[%s5 + $0x48] sm:$0xff]
  %v463 = vld [vmem:[%s5 + $0x50] sm:$0xff]
  %v464 = vld [vmem:[%s5 + $0x58] sm:$0xff]
  %v465 = vld [vmem:[%s5 + $0x60] sm:$0xff]
  %v466 = vld [vmem:[%s5 + $0x68] sm:$0xff]
  %v467 = vld [vmem:[%s5 + $0x70] sm:$0xff]
  %v468 = vld [vmem:[%s5 + $0x78] sm:$0xff]
  %v469 = vld [vmem:[%s6] sm:$0x1]
  %v471 = vlaneseq
  %v472 = vshrl.u32 %v471, 7
  %v473 = vsub.s32 0, %v472
  %v474 = vrot.slane %v469, %v473
  %476 = vmatprep.subr.mxu0 0.0
  %477 = vmatpush1.msra.mxu0 %v468
  %478 = vmatprep.subr.mxu0 0.0
  %479 = vmatpush1.msra.mxu0 %v467
  %480 = vmatprep.subr.mxu0 0.0
  %481 = vmatpush1.msra.mxu0 %v466
  %482 = vmatprep.subr.mxu0 0.0
  %483 = vmatpush1.msra.mxu0 %v465
  %484 = vmatprep.subr.mxu0 0.0
  %485 = vmatpush1.msra.mxu0 %v464
  %486 = vmatprep.subr.mxu0 0.0
  %487 = vmatpush1.msra.mxu0 %v463
  %488 = vmatprep.subr.mxu0 0.0
  %489 = vmatpush1.msra.mxu0 %v462
  %490 = vmatprep.subr.mxu0 0.0
  %491 = vmatpush1.msra.mxu0 %v461
  %492 = vmatprep.subr.mxu0 0.0
  %493 = vmatpush1.msra.mxu0 %v460
  %494 = vmatprep.subr.mxu0 0.0
  %495 = vmatpush1.msra.mxu0 %v459
  %496 = vmatprep.subr.mxu0 0.0
  %497 = vmatpush1.msra.mxu0 %v458
  %498 = vmatprep.subr.mxu0 0.0
  %499 = vmatpush1.msra.mxu0 %v457
  %500 = vmatprep.subr.mxu0 0.0
  %501 = vmatpush1.msra.mxu0 %v456
  %502 = vmatprep.subr.mxu0 0.0
  %503 = vmatpush1.msra.mxu0 %v455
  %504 = vmatprep.subr.mxu0 0.0
  %505 = vmatpush1.msra.mxu0 %v454
  %506 = vmatprep.subr.mxu0 0.0
  %507 = vmatpush1.msra.mxu0 %v453
  %508 = vmatprep.subr.mxu0 0.0
  %509 = vmatpush2.msra.mxu0 0.0
  %510 = vmatprep.subr.mxu0 0.0
  %511 = vmatpush2.msra.mxu0 0.0
  %512 = vmatprep.subr.mxu0 0.0
  %513 = vmatpush2.msra.mxu0 0.0
  %514 = vmatprep.subr.mxu0 0.0
  %515 = vmatpush2.msra.mxu0 0.0
  %516 = vmatprep.subr.mxu0 0.0
  %517 = vmatpush2.msra.mxu0 0.0
  %518 = vmatprep.subr.mxu0 0.0
  %519 = vmatpush2.msra.mxu0 0.0
  %520 = vmatprep.subr.mxu0 0.0
  %521 = vmatpush2.msra.mxu0 0.0
  %522 = vmatprep.subr.mxu0 0.0
  %523 = vmatpush2.msra.mxu0 0.0
  %524 = vmatprep.subr.mxu0 0.0
  %525 = vmatpush2.msra.mxu0 0.0
  %526 = vmatprep.subr.mxu0 0.0
  %527 = vmatpush2.msra.mxu0 0.0
  %528 = vmatprep.subr.mxu0 0.0
  %529 = vmatpush2.msra.mxu0 0.0
  %530 = vmatprep.subr.mxu0 0.0
  %531 = vmatpush2.msra.mxu0 0.0
  %532 = vmatprep.subr.mxu0 0.0
  %533 = vmatpush2.msra.mxu0 0.0
  %534 = vmatprep.subr.mxu0 0.0
  %535 = vmatpush2.msra.mxu0 0.0
  %536 = vmatprep.subr.mxu0 0.0
  %537 = vmatpush2.msra.mxu0 0.0
  %538 = vmatprep.subr.mxu0 0.0
  %539 = vmatpush2.msra.mxu0 0.0
  %540 = vmatprep.mubr.f32.mxu0 0.0
  %541 = vmatmul.mubr.f32.gmra.mxu0 %v414
  %v542 = vpop.f32.mrf.mxu0
  %v543 = vadd.f32 %v474, %v542
  %v544 = vpop.f32.mrf.mxu0
  %545 = vmatprep.mubr.f32.mxu0 0.0
  %546 = vmatmul.mubr.f32.gmra.mxu0 %v419
  %v547 = vpop.f32.mrf.mxu0
  %v548 = vadd.f32 %v474, %v547
  %v549 = vpop.f32.mrf.mxu0
  %550 = vmatprep.mubr.f32.mxu0 0.0
  %551 = vmatmul.mubr.f32.gmra.mxu0 %v424
  %v552 = vpop.f32.mrf.mxu0
  %v553 = vadd.f32 %v474, %v552
  %v554 = vpop.f32.mrf.mxu0
  %555 = vmatprep.mubr.f32.mxu0 0.0
  %556 = vmatmul.mubr.f32.gmra.mxu0 %v429
  %v557 = vpop.f32.mrf.mxu0
  %v558 = vadd.f32 %v474, %v557
  %v559 = vpop.f32.mrf.mxu0
  %560 = vdwg.mxu0
  %v561 = vmax.f32 %v543, 0.0
  %v562 = vmax.f32 %v548, 0.0
  %v563 = vmax.f32 %v553, 0.0
  %v564 = vmax.f32 %v558, 0.0
  %565 = vst [vmem:[%s7] sm:$0xff] %v561
  %566 = vst [vmem:[%s7 + $0x8] sm:$0xff] %v562
  %567 = vst [vmem:[%s7 + $0x10] sm:$0xff] %v563
  %568 = vst [vmem:[%s7 + $0x18] sm:$0xff] %v564
  // Predicated region
  $region30: #{vqvae_forward.7} parent=0 // pred_check
    _
  $region31: #{vqvae_forward.7} parent=0 // pred_check_branch
    %570 = sbr.rel (0) target = $region33
  $region32: #{vqvae_forward.7} parent=0 // pred_region
    _
  $region33: #{vqvae_forward.7} parent=0 // pred_fallthru
    _
  // Predicated region
  $region34: #{vqvae_forward.7} parent=0 // pred_check
    _
  $region35: #{vqvae_forward.7} parent=0 // pred_check_branch
    %572 = sbr.rel (0) target = $region37
  $region36: #{vqvae_forward.7} parent=0 // pred_region
    _
  $region37: #{vqvae_forward.7} parent=0 // pred_fallthru
    _
  // Predicated region
  $region38: #{vqvae_forward.7} parent=0 // pred_check
    _
  $region39: #{vqvae_forward.7} parent=0 // pred_check_branch
    %574 = sbr.rel (0) target = $region41
  $region40: #{vqvae_forward.7} parent=0 // pred_region
    _
  $region41: #{vqvae_forward.7} parent=0 // pred_fallthru
    _
  // Predicated region
  $region42: #{vqvae_forward.7} parent=0 // pred_check
    _
  $region43: #{vqvae_forward.7} parent=0 // pred_check_branch
    %576 = sbr.rel (0) target = $region45
  $region44: #{vqvae_forward.7} parent=0 // pred_region
    _
  $region45: #{vqvae_forward.7} parent=0 // pred_fallthru
    _

// kernel: vqvae_forward.8
$region0: #{vqvae_forward.8}
  #allocation0 [shape = 'u32[]', space=smem, size = 0x4, offset = 0x4, fixed_abs, tag = 'smem constant byte address 0x4 - core index']
  #allocation1 [shape = 'u32[144,128]{1,0:T(1,128)}', space=vmem, size = 0x12000, scoped, tag = 'internal scratch']
  %s0 = inlined_call_operand.vmem [shape: f32[128,576], index: 0, kind: input, shape index: {}]
  %s1 = inlined_call_operand.vmem [shape: f32[576,128], index: 1, kind: input, shape index: {}]
  %s2 = inlined_call_operand.vmem [shape: f32[1,128], index: 2, kind: input, shape index: {}]
  %s3 = inlined_call_operand.vmem [shape: f32[128,128], index: 3, kind: output, shape index: {}]
  %s4 = sld [smem:[#allocation0]]
  $region22: #{vqvae_forward.8} parent=0
    _
  %s6 = ssub.s32 1, %s4
  %s7 = scalar_select 0, %s6, %s4
  // Predicated region
  $region2: #{vqvae_forward.8} parent=0 // pred_check
    _
  $region3: #{vqvae_forward.8} parent=0 // pred_check_branch
    %9 = sbr.rel (0) target = $region5
  $region4: #{vqvae_forward.8} parent=0 // pred_region
    _
  $region5: #{vqvae_forward.8} parent=0 // pred_fallthru
    _
  // Predicated region
  $region6: #{vqvae_forward.8} parent=0 // pred_check
    _
  $region7: #{vqvae_forward.8} parent=0 // pred_check_branch
    %11 = sbr.rel (0) target = $region9
  $region8: #{vqvae_forward.8} parent=0 // pred_region
    _
  $region9: #{vqvae_forward.8} parent=0 // pred_fallthru
    _
  // Predicated region
  $region10: #{vqvae_forward.8} parent=0 // pred_check
    _
  $region11: #{vqvae_forward.8} parent=0 // pred_check_branch
    %13 = sbr.rel (0) target = $region13
  $region12: #{vqvae_forward.8} parent=0 // pred_region
    _
  $region13: #{vqvae_forward.8} parent=0 // pred_fallthru
    _
  %v14 = vld [vmem:[%s0] sm:$0xff]
  %v15 = vld [vmem:[%s0 + $0x8] sm:$0xff]
  %v16 = vld [vmem:[%s0 + $0x10] sm:$0xff]
  %v17 = vld [vmem:[%s0 + $0x18] sm:$0xff]
  %v18 = vld [vmem:[%s0 + $0x20] sm:$0xff]
  %v19 = vld [vmem:[%s0 + $0x28] sm:$0xff]
  %v20 = vld [vmem:[%s0 + $0x30] sm:$0xff]
  %v21 = vld [vmem:[%s0 + $0x38] sm:$0xff]
  %v22 = vld [vmem:[%s0 + $0x40] sm:$0xff]
  %v23 = vld [vmem:[%s0 + $0x48] sm:$0xff]
  %v24 = vld [vmem:[%s0 + $0x50] sm:$0xff]
  %v25 = vld [vmem:[%s0 + $0x58] sm:$0xff]
  %v26 = vld [vmem:[%s0 + $0x60] sm:$0xff]
  %v27 = vld [vmem:[%s0 + $0x68] sm:$0xff]
  %v28 = vld [vmem:[%s0 + $0x70] sm:$0xff]
  %v29 = vld [vmem:[%s0 + $0x78] sm:$0xff]
  %v30 = vld [vmem:[%s0 + $0x80] sm:$0xff]
  %v31 = vld [vmem:[%s0 + $0x88] sm:$0xff]
  %v32 = vld [vmem:[%s0 + $0x90] sm:$0xff]
  %v33 = vld [vmem:[%s0 + $0x98] sm:$0xff]
  %v34 = vld [vmem:[%s0 + $0xa0] sm:$0xff]
  %v35 = vld [vmem:[%s0 + $0xa8] sm:$0xff]
  %v36 = vld [vmem:[%s0 + $0xb0] sm:$0xff]
  %v37 = vld [vmem:[%s0 + $0xb8] sm:$0xff]
  %v38 = vld [vmem:[%s0 + $0xc0] sm:$0xff]
  %v39 = vld [vmem:[%s0 + $0xc8] sm:$0xff]
  %v40 = vld [vmem:[%s0 + $0xd0] sm:$0xff]
  %v41 = vld [vmem:[%s0 + $0xd8] sm:$0xff]
  %v42 = vld [vmem:[%s0 + $0xe0] sm:$0xff]
  %v43 = vld [vmem:[%s0 + $0xe8] sm:$0xff]
  %v44 = vld [vmem:[%s0 + $0xf0] sm:$0xff]
  %v45 = vld [vmem:[%s0 + $0xf8] sm:$0xff]
  %v46 = vld [vmem:[%s0 + $0x100] sm:$0xff]
  %v47 = vld [vmem:[%s0 + $0x108] sm:$0xff]
  %v48 = vld [vmem:[%s0 + $0x110] sm:$0xff]
  %v49 = vld [vmem:[%s0 + $0x118] sm:$0xff]
  %v50 = vld [vmem:[%s0 + $0x120] sm:$0xff]
  %v51 = vld [vmem:[%s0 + $0x128] sm:$0xff]
  %v52 = vld [vmem:[%s0 + $0x130] sm:$0xff]
  %v53 = vld [vmem:[%s0 + $0x138] sm:$0xff]
  %v54 = vld [vmem:[%s0 + $0x140] sm:$0xff]
  %v55 = vld [vmem:[%s0 + $0x148] sm:$0xff]
  %v56 = vld [vmem:[%s0 + $0x150] sm:$0xff]
  %v57 = vld [vmem:[%s0 + $0x158] sm:$0xff]
  %v58 = vld [vmem:[%s0 + $0x160] sm:$0xff]
  %v59 = vld [vmem:[%s0 + $0x168] sm:$0xff]
  %v60 = vld [vmem:[%s0 + $0x170] sm:$0xff]
  %v61 = vld [vmem:[%s0 + $0x178] sm:$0xff]
  %v62 = vld [vmem:[%s0 + $0x180] sm:$0xff]
  %v63 = vld [vmem:[%s0 + $0x188] sm:$0xff]
  %v64 = vld [vmem:[%s0 + $0x190] sm:$0xff]
  %v65 = vld [vmem:[%s0 + $0x198] sm:$0xff]
  %v66 = vld [vmem:[%s0 + $0x1a0] sm:$0xff]
  %v67 = vld [vmem:[%s0 + $0x1a8] sm:$0xff]
  %v68 = vld [vmem:[%s0 + $0x1b0] sm:$0xff]
  %v69 = vld [vmem:[%s0 + $0x1b8] sm:$0xff]
  %v70 = vld [vmem:[%s0 + $0x1c0] sm:$0xff]
  %v71 = vld [vmem:[%s0 + $0x1c8] sm:$0xff]
  %v72 = vld [vmem:[%s0 + $0x1d0] sm:$0xff]
  %v73 = vld [vmem:[%s0 + $0x1d8] sm:$0xff]
  %v74 = vld [vmem:[%s0 + $0x1e0] sm:$0xff]
  %v75 = vld [vmem:[%s0 + $0x1e8] sm:$0xff]
  %v76 = vld [vmem:[%s0 + $0x1f0] sm:$0xff]
  %v77 = vld [vmem:[%s0 + $0x1f8] sm:$0xff]
  %v78 = vld [vmem:[%s0 + $0x200] sm:$0xff]
  %v79 = vld [vmem:[%s0 + $0x208] sm:$0xff]
  %v80 = vld [vmem:[%s0 + $0x210] sm:$0xff]
  %v81 = vld [vmem:[%s0 + $0x218] sm:$0xff]
  %v82 = vld [vmem:[%s0 + $0x220] sm:$0xff]
  %v83 = vld [vmem:[%s0 + $0x228] sm:$0xff]
  %v84 = vld [vmem:[%s0 + $0x230] sm:$0xff]
  %v85 = vld [vmem:[%s0 + $0x238] sm:$0xff]
  %v86 = vld [vmem:[%s0 + $0x240] sm:$0xff]
  %v87 = vld [vmem:[%s0 + $0x248] sm:$0xff]
  %v88 = vld [vmem:[%s0 + $0x250] sm:$0xff]
  %v89 = vld [vmem:[%s0 + $0x258] sm:$0xff]
  %v90 = vld [vmem:[%s0 + $0x260] sm:$0xff]
  %v91 = vld [vmem:[%s0 + $0x268] sm:$0xff]
  %v92 = vld [vmem:[%s0 + $0x270] sm:$0xff]
  %v93 = vld [vmem:[%s0 + $0x278] sm:$0xff]
  %v94 = vld [vmem:[%s1] sm:$0xff]
  %v95 = vld [vmem:[%s1 + $0x8] sm:$0xff]
  %v96 = vld [vmem:[%s1 + $0x10] sm:$0xff]
  %v97 = vld [vmem:[%s1 + $0x18] sm:$0xff]
  %v98 = vld [vmem:[%s1 + $0x20] sm:$0xff]
  %v99 = vld [vmem:[%s1 + $0x28] sm:$0xff]
  %v100 = vld [vmem:[%s1 + $0x30] sm:$0xff]
  %v101 = vld [vmem:[%s1 + $0x38] sm:$0xff]
  %v102 = vld [vmem:[%s1 + $0x40] sm:$0xff]
  %v103 = vld [vmem:[%s1 + $0x48] sm:$0xff]
  %v104 = vld [vmem:[%s1 + $0x50] sm:$0xff]
  %v105 = vld [vmem:[%s1 + $0x58] sm:$0xff]
  %v106 = vld [vmem:[%s1 + $0x60] sm:$0xff]
  %v107 = vld [vmem:[%s1 + $0x68] sm:$0xff]
  %v108 = vld [vmem:[%s1 + $0x70] sm:$0xff]
  %v109 = vld [vmem:[%s1 + $0x78] sm:$0xff]
  %v110 = vld [vmem:[%s1 + $0x80] sm:$0xff]
  %v111 = vld [vmem:[%s1 + $0x88] sm:$0xff]
  %v112 = vld [vmem:[%s1 + $0x90] sm:$0xff]
  %v113 = vld [vmem:[%s1 + $0x98] sm:$0xff]
  %v114 = vld [vmem:[%s1 + $0xa0] sm:$0xff]
  %v115 = vld [vmem:[%s1 + $0xa8] sm:$0xff]
  %v116 = vld [vmem:[%s1 + $0xb0] sm:$0xff]
  %v117 = vld [vmem:[%s1 + $0xb8] sm:$0xff]
  %v118 = vld [vmem:[%s1 + $0xc0] sm:$0xff]
  %v119 = vld [vmem:[%s1 + $0xc8] sm:$0xff]
  %v120 = vld [vmem:[%s1 + $0xd0] sm:$0xff]
  %v121 = vld [vmem:[%s1 + $0xd8] sm:$0xff]
  %v122 = vld [vmem:[%s1 + $0xe0] sm:$0xff]
  %v123 = vld [vmem:[%s1 + $0xe8] sm:$0xff]
  %v124 = vld [vmem:[%s1 + $0xf0] sm:$0xff]
  %v125 = vld [vmem:[%s1 + $0xf8] sm:$0xff]
  %v126 = vld [vmem:[%s1 + $0x100] sm:$0xff]
  %v127 = vld [vmem:[%s1 + $0x108] sm:$0xff]
  %v128 = vld [vmem:[%s1 + $0x110] sm:$0xff]
  %v129 = vld [vmem:[%s1 + $0x118] sm:$0xff]
  %v130 = vld [vmem:[%s1 + $0x120] sm:$0xff]
  %v131 = vld [vmem:[%s1 + $0x128] sm:$0xff]
  %v132 = vld [vmem:[%s1 + $0x130] sm:$0xff]
  %v133 = vld [vmem:[%s1 + $0x138] sm:$0xff]
  %v134 = vld [vmem:[%s1 + $0x140] sm:$0xff]
  %v135 = vld [vmem:[%s1 + $0x148] sm:$0xff]
  %v136 = vld [vmem:[%s1 + $0x150] sm:$0xff]
  %v137 = vld [vmem:[%s1 + $0x158] sm:$0xff]
  %v138 = vld [vmem:[%s1 + $0x160] sm:$0xff]
  %v139 = vld [vmem:[%s1 + $0x168] sm:$0xff]
  %v140 = vld [vmem:[%s1 + $0x170] sm:$0xff]
  %v141 = vld [vmem:[%s1 + $0x178] sm:$0xff]
  %v142 = vld [vmem:[%s1 + $0x180] sm:$0xff]
  %v143 = vld [vmem:[%s1 + $0x188] sm:$0xff]
  %v144 = vld [vmem:[%s1 + $0x190] sm:$0xff]
  %v145 = vld [vmem:[%s1 + $0x198] sm:$0xff]
  %v146 = vld [vmem:[%s1 + $0x1a0] sm:$0xff]
  %v147 = vld [vmem:[%s1 + $0x1a8] sm:$0xff]
  %v148 = vld [vmem:[%s1 + $0x1b0] sm:$0xff]
  %v149 = vld [vmem:[%s1 + $0x1b8] sm:$0xff]
  %v150 = vld [vmem:[%s1 + $0x1c0] sm:$0xff]
  %v151 = vld [vmem:[%s1 + $0x1c8] sm:$0xff]
  %v152 = vld [vmem:[%s1 + $0x1d0] sm:$0xff]
  %v153 = vld [vmem:[%s1 + $0x1d8] sm:$0xff]
  %v154 = vld [vmem:[%s1 + $0x1e0] sm:$0xff]
  %v155 = vld [vmem:[%s1 + $0x1e8] sm:$0xff]
  %v156 = vld [vmem:[%s1 + $0x1f0] sm:$0xff]
  %v157 = vld [vmem:[%s1 + $0x1f8] sm:$0xff]
  %v158 = vld [vmem:[%s1 + $0x200] sm:$0xff]
  %v159 = vld [vmem:[%s1 + $0x208] sm:$0xff]
  %v160 = vld [vmem:[%s1 + $0x210] sm:$0xff]
  %v161 = vld [vmem:[%s1 + $0x218] sm:$0xff]
  %v162 = vld [vmem:[%s1 + $0x220] sm:$0xff]
  %v163 = vld [vmem:[%s1 + $0x228] sm:$0xff]
  %v164 = vld [vmem:[%s1 + $0x230] sm:$0xff]
  %v165 = vld [vmem:[%s1 + $0x238] sm:$0xff]
  %v166 = vld [vmem:[%s2] sm:$0x1]
  %v168 = vlaneseq
  %v169 = vshrl.u32 %v168, 7
  %v170 = vsub.s32 0, %v169
  %v171 = vrot.slane %v166, %v170
  %vm173 = vcmask 523264
  %v175 = vsel %vm173, %v18, 0
  %v178 = vsel %vm173, %v23, 0
  %v181 = vsel %vm173, %v28, 0
  %v184 = vsel %vm173, %v33, 0
  %v187 = vsel %vm173, %v38, 0
  %v190 = vsel %vm173, %v43, 0
  %v193 = vsel %vm173, %v48, 0
  %v196 = vsel %vm173, %v53, 0
  %v199 = vsel %vm173, %v58, 0
  %v202 = vsel %vm173, %v63, 0
  %v205 = vsel %vm173, %v68, 0
  %v208 = vsel %vm173, %v73, 0
  %v211 = vsel %vm173, %v78, 0
  %v214 = vsel %vm173, %v83, 0
  %v217 = vsel %vm173, %v88, 0
  %v220 = vsel %vm173, %v93, 0
  %222 = vmatprep.subr.mxu0 0.0
  %223 = vmatpush1.msra.mxu0 %v109
  %224 = vmatprep.subr.mxu0 0.0
  %225 = vmatpush1.msra.mxu0 %v108
  %226 = vmatprep.subr.mxu0 0.0
  %227 = vmatpush1.msra.mxu0 %v107
  %228 = vmatprep.subr.mxu0 0.0
  %229 = vmatpush1.msra.mxu0 %v106
  %230 = vmatprep.subr.mxu0 0.0
  %231 = vmatpush1.msra.mxu0 %v105
  %232 = vmatprep.subr.mxu0 0.0
  %233 = vmatpush1.msra.mxu0 %v104
  %234 = vmatprep.subr.mxu0 0.0
  %235 = vmatpush1.msra.mxu0 %v103
  %236 = vmatprep.subr.mxu0 0.0
  %237 = vmatpush1.msra.mxu0 %v102
  %238 = vmatprep.subr.mxu0 0.0
  %239 = vmatpush1.msra.mxu0 %v101
  %240 = vmatprep.subr.mxu0 0.0
  %241 = vmatpush1.msra.mxu0 %v100
  %242 = vmatprep.subr.mxu0 0.0
  %243 = vmatpush1.msra.mxu0 %v99
  %244 = vmatprep.subr.mxu0 0.0
  %245 = vmatpush1.msra.mxu0 %v98
  %246 = vmatprep.subr.mxu0 0.0
  %247 = vmatpush1.msra.mxu0 %v97
  %248 = vmatprep.subr.mxu0 0.0
  %249 = vmatpush1.msra.mxu0 %v96
  %250 = vmatprep.subr.mxu0 0.0
  %251 = vmatpush1.msra.mxu0 %v95
  %252 = vmatprep.subr.mxu0 0.0
  %253 = vmatpush1.msra.mxu0 %v94
  %254 = vmatprep.subr.mxu0 0.0
  %255 = vmatpush2.msra.mxu0 %v125
  %256 = vmatprep.subr.mxu0 0.0
  %257 = vmatpush2.msra.mxu0 %v124
  %258 = vmatprep.subr.mxu0 0.0
  %259 = vmatpush2.msra.mxu0 %v123
  %260 = vmatprep.subr.mxu0 0.0
  %261 = vmatpush2.msra.mxu0 %v122
  %262 = vmatprep.subr.mxu0 0.0
  %263 = vmatpush2.msra.mxu0 %v121
  %264 = vmatprep.subr.mxu0 0.0
  %265 = vmatpush2.msra.mxu0 %v120
  %266 = vmatprep.subr.mxu0 0.0
  %267 = vmatpush2.msra.mxu0 %v119
  %268 = vmatprep.subr.mxu0 0.0
  %269 = vmatpush2.msra.mxu0 %v118
  %270 = vmatprep.subr.mxu0 0.0
  %271 = vmatpush2.msra.mxu0 %v117
  %272 = vmatprep.subr.mxu0 0.0
  %273 = vmatpush2.msra.mxu0 %v116
  %274 = vmatprep.subr.mxu0 0.0
  %275 = vmatpush2.msra.mxu0 %v115
  %276 = vmatprep.subr.mxu0 0.0
  %277 = vmatpush2.msra.mxu0 %v114
  %278 = vmatprep.subr.mxu0 0.0
  %279 = vmatpush2.msra.mxu0 %v113
  %280 = vmatprep.subr.mxu0 0.0
  %281 = vmatpush2.msra.mxu0 %v112
  %282 = vmatprep.subr.mxu0 0.0
  %283 = vmatpush2.msra.mxu0 %v111
  %284 = vmatprep.subr.mxu0 0.0
  %285 = vmatpush2.msra.mxu0 %v110
  %286 = vmatprep.mubr.f32.mxu0 %v15
  %287 = vmatmul.mubr.f32.gmra.mxu0 %v14
  %v288 = vpop.f32.mrf.mxu0
  %v289 = vadd.f32 %v171, %v288
  %v290 = vpop.f32.mrf.mxu0
  %291 = vmatprep.mubr.f32.mxu0 %v20
  %292 = vmatmul.mubr.f32.gmra.mxu0 %v19
  %v293 = vpop.f32.mrf.mxu0
  %v294 = vadd.f32 %v171, %v293
  %v295 = vpop.f32.mrf.mxu0
  %296 = vmatprep.mubr.f32.mxu0 %v25
  %297 = vmatmul.mubr.f32.gmra.mxu0 %v24
  %v298 = vpop.f32.mrf.mxu0
  %v299 = vadd.f32 %v171, %v298
  %v300 = vpop.f32.mrf.mxu0
  %301 = vmatprep.mubr.f32.mxu0 %v30
  %302 = vmatmul.mubr.f32.gmra.mxu0 %v29
  %v303 = vpop.f32.mrf.mxu0
  %v304 = vadd.f32 %v171, %v303
  %v305 = vpop.f32.mrf.mxu0
  %306 = vmatprep.mubr.f32.mxu0 %v35
  %307 = vmatmul.mubr.f32.gmra.mxu0 %v34
  %v308 = vpop.f32.mrf.mxu0
  %v309 = vadd.f32 %v171, %v308
  %v310 = vpop.f32.mrf.mxu0
  %311 = vmatprep.mubr.f32.mxu0 %v40
  %312 = vmatmul.mubr.f32.gmra.mxu0 %v39
  %v313 = vpop.f32.mrf.mxu0
  %v314 = vadd.f32 %v171, %v313
  %v315 = vpop.f32.mrf.mxu0
  %316 = vmatprep.mubr.f32.mxu0 %v45
  %317 = vmatmul.mubr.f32.gmra.mxu0 %v44
  %v318 = vpop.f32.mrf.mxu0
  %v319 = vadd.f32 %v171, %v318
  %v320 = vpop.f32.mrf.mxu0
  %321 = vmatprep.mubr.f32.mxu0 %v50
  %322 = vmatmul.mubr.f32.gmra.mxu0 %v49
  %v323 = vpop.f32.mrf.mxu0
  %v324 = vadd.f32 %v171, %v323
  %v325 = vpop.f32.mrf.mxu0
  %326 = vmatprep.mubr.f32.mxu0 %v55
  %327 = vmatmul.mubr.f32.gmra.mxu0 %v54
  %v328 = vpop.f32.mrf.mxu0
  %v329 = vadd.f32 %v171, %v328
  %v330 = vpop.f32.mrf.mxu0
  %331 = vmatprep.mubr.f32.mxu0 %v60
  %332 = vmatmul.mubr.f32.gmra.mxu0 %v59
  %v333 = vpop.f32.mrf.mxu0
  %v334 = vadd.f32 %v171, %v333
  %v335 = vpop.f32.mrf.mxu0
  %336 = vmatprep.mubr.f32.mxu0 %v65
  %337 = vmatmul.mubr.f32.gmra.mxu0 %v64
  %v338 = vpop.f32.mrf.mxu0
  %v339 = vadd.f32 %v171, %v338
  %v340 = vpop.f32.mrf.mxu0
  %341 = vmatprep.mubr.f32.mxu0 %v70
  %342 = vmatmul.mubr.f32.gmra.mxu0 %v69
  %v343 = vpop.f32.mrf.mxu0
  %v344 = vadd.f32 %v171, %v343
  %v345 = vpop.f32.mrf.mxu0
  %346 = vmatprep.mubr.f32.mxu0 %v75
  %347 = vmatmul.mubr.f32.gmra.mxu0 %v74
  %v348 = vpop.f32.mrf.mxu0
  %v349 = vadd.f32 %v171, %v348
  %v350 = vpop.f32.mrf.mxu0
  %351 = vmatprep.mubr.f32.mxu0 %v80
  %352 = vmatmul.mubr.f32.gmra.mxu0 %v79
  %v353 = vpop.f32.mrf.mxu0
  %v354 = vadd.f32 %v171, %v353
  %v355 = vpop.f32.mrf.mxu0
  %356 = vmatprep.mubr.f32.mxu0 %v85
  %357 = vmatmul.mubr.f32.gmra.mxu0 %v84
  %v358 = vpop.f32.mrf.mxu0
  %v359 = vadd.f32 %v171, %v358
  %v360 = vpop.f32.mrf.mxu0
  %361 = vmatprep.mubr.f32.mxu0 %v90
  %362 = vmatmul.mubr.f32.gmra.mxu0 %v89
  %v363 = vpop.f32.mrf.mxu0
  %v364 = vadd.f32 %v171, %v363
  %v365 = vpop.f32.mrf.mxu0
  %366 = vdwg.mxu0
  %367 = vmatprep.subr.mxu0 0.0
  %368 = vmatpush1.msra.mxu0 %v141
  %369 = vmatprep.subr.mxu0 0.0
  %370 = vmatpush1.msra.mxu0 %v140
  %371 = vmatprep.subr.mxu0 0.0
  %372 = vmatpush1.msra.mxu0 %v139
  %373 = vmatprep.subr.mxu0 0.0
  %374 = vmatpush1.msra.mxu0 %v138
  %375 = vmatprep.subr.mxu0 0.0
  %376 = vmatpush1.msra.mxu0 %v137
  %377 = vmatprep.subr.mxu0 0.0
  %378 = vmatpush1.msra.mxu0 %v136
  %379 = vmatprep.subr.mxu0 0.0
  %380 = vmatpush1.msra.mxu0 %v135
  %381 = vmatprep.subr.mxu0 0.0
  %382 = vmatpush1.msra.mxu0 %v134
  %383 = vmatprep.subr.mxu0 0.0
  %384 = vmatpush1.msra.mxu0 %v133
  %385 = vmatprep.subr.mxu0 0.0
  %386 = vmatpush1.msra.mxu0 %v132
  %387 = vmatprep.subr.mxu0 0.0
  %388 = vmatpush1.msra.mxu0 %v131
  %389 = vmatprep.subr.mxu0 0.0
  %390 = vmatpush1.msra.mxu0 %v130
  %391 = vmatprep.subr.mxu0 0.0
  %392 = vmatpush1.msra.mxu0 %v129
  %393 = vmatprep.subr.mxu0 0.0
  %394 = vmatpush1.msra.mxu0 %v128
  %395 = vmatprep.subr.mxu0 0.0
  %396 = vmatpush1.msra.mxu0 %v127
  %397 = vmatprep.subr.mxu0 0.0
  %398 = vmatpush1.msra.mxu0 %v126
  %399 = vmatprep.subr.mxu0 0.0
  %400 = vmatpush2.msra.mxu0 %v157
  %401 = vmatprep.subr.mxu0 0.0
  %402 = vmatpush2.msra.mxu0 %v156
  %403 = vmatprep.subr.mxu0 0.0
  %404 = vmatpush2.msra.mxu0 %v155
  %405 = vmatprep.subr.mxu0 0.0
  %406 = vmatpush2.msra.mxu0 %v154
  %407 = vmatprep.subr.mxu0 0.0
  %408 = vmatpush2.msra.mxu0 %v153
  %409 = vmatprep.subr.mxu0 0.0
  %410 = vmatpush2.msra.mxu0 %v152
  %411 = vmatprep.subr.mxu0 0.0
  %412 = vmatpush2.msra.mxu0 %v151
  %413 = vmatprep.subr.mxu0 0.0
  %414 = vmatpush2.msra.mxu0 %v150
  %415 = vmatprep.subr.mxu0 0.0
  %416 = vmatpush2.msra.mxu0 %v149
  %417 = vmatprep.subr.mxu0 0.0
  %418 = vmatpush2.msra.mxu0 %v148
  %419 = vmatprep.subr.mxu0 0.0
  %420 = vmatpush2.msra.mxu0 %v147
  %421 = vmatprep.subr.mxu0 0.0
  %422 = vmatpush2.msra.mxu0 %v146
  %423 = vmatprep.subr.mxu0 0.0
  %424 = vmatpush2.msra.mxu0 %v145
  %425 = vmatprep.subr.mxu0 0.0
  %426 = vmatpush2.msra.mxu0 %v144
  %427 = vmatprep.subr.mxu0 0.0
  %428 = vmatpush2.msra.mxu0 %v143
  %429 = vmatprep.subr.mxu0 0.0
  %430 = vmatpush2.msra.mxu0 %v142
  %431 = vmatprep.mubr.f32.mxu0 %v17
  %432 = vmatmul.mubr.f32.gmra.mxu0 %v16
  %v433 = vpop.f32.mrf.mxu0
  %v434 = vadd.f32 %v289, %v433
  %v435 = vpop.f32.mrf.mxu0
  %436 = vmatprep.mubr.f32.mxu0 %v22
  %437 = vmatmul.mubr.f32.gmra.mxu0 %v21
  %v438 = vpop.f32.mrf.mxu0
  %v439 = vadd.f32 %v294, %v438
  %v440 = vpop.f32.mrf.mxu0
  %441 = vmatprep.mubr.f32.mxu0 %v27
  %442 = vmatmul.mubr.f32.gmra.mxu0 %v26
  %v443 = vpop.f32.mrf.mxu0
  %v444 = vadd.f32 %v299, %v443
  %v445 = vpop.f32.mrf.mxu0
  %446 = vmatprep.mubr.f32.mxu0 %v32
  %447 = vmatmul.mubr.f32.gmra.mxu0 %v31
  %v448 = vpop.f32.mrf.mxu0
  %v449 = vadd.f32 %v304, %v448
  %v450 = vpop.f32.mrf.mxu0
  %451 = vmatprep.mubr.f32.mxu0 %v37
  %452 = vmatmul.mubr.f32.gmra.mxu0 %v36
  %v453 = vpop.f32.mrf.mxu0
  %v454 = vadd.f32 %v309, %v453
  %v455 = vpop.f32.mrf.mxu0
  %456 = vmatprep.mubr.f32.mxu0 %v42
  %457 = vmatmul.mubr.f32.gmra.mxu0 %v41
  %v458 = vpop.f32.mrf.mxu0
  %v459 = vadd.f32 %v314, %v458
  %v460 = vpop.f32.mrf.mxu0
  %461 = vmatprep.mubr.f32.mxu0 %v47
  %462 = vmatmul.mubr.f32.gmra.mxu0 %v46
  %v463 = vpop.f32.mrf.mxu0
  %v464 = vadd.f32 %v319, %v463
  %v465 = vpop.f32.mrf.mxu0
  %466 = vmatprep.mubr.f32.mxu0 %v52
  %467 = vmatmul.mubr.f32.gmra.mxu0 %v51
  %v468 = vpop.f32.mrf.mxu0
  %v469 = vadd.f32 %v324, %v468
  %v470 = vpop.f32.mrf.mxu0
  %471 = vmatprep.mubr.f32.mxu0 %v57
  %472 = vmatmul.mubr.f32.gmra.mxu0 %v56
  %v473 = vpop.f32.mrf.mxu0
  %v474 = vadd.f32 %v329, %v473
  %v475 = vpop.f32.mrf.mxu0
  %476 = vmatprep.mubr.f32.mxu0 %v62
  %477 = vmatmul.mubr.f32.gmra.mxu0 %v61
  %v478 = vpop.f32.mrf.mxu0
  %v479 = vadd.f32 %v334, %v478
  %v480 = vpop.f32.mrf.mxu0
  %481 = vmatprep.mubr.f32.mxu0 %v67
  %482 = vmatmul.mubr.f32.gmra.mxu0 %v66
  %v483 = vpop.f32.mrf.mxu0
  %v484 = vadd.f32 %v339, %v483
  %v485 = vpop.f32.mrf.mxu0
  %486 = vmatprep.mubr.f32.mxu0 %v72
  %487 = vmatmul.mubr.f32.gmra.mxu0 %v71
  %v488 = vpop.f32.mrf.mxu0
  %v489 = vadd.f32 %v344, %v488
  %v490 = vpop.f32.mrf.mxu0
  %491 = vmatprep.mubr.f32.mxu0 %v77
  %492 = vmatmul.mubr.f32.gmra.mxu0 %v76
  %v493 = vpop.f32.mrf.mxu0
  %v494 = vadd.f32 %v349, %v493
  %v495 = vpop.f32.mrf.mxu0
  %496 = vmatprep.mubr.f32.mxu0 %v82
  %497 = vmatmul.mubr.f32.gmra.mxu0 %v81
  %v498 = vpop.f32.mrf.mxu0
  %v499 = vadd.f32 %v354, %v498
  %v500 = vpop.f32.mrf.mxu0
  %501 = vmatprep.mubr.f32.mxu0 %v87
  %502 = vmatmul.mubr.f32.gmra.mxu0 %v86
  %v503 = vpop.f32.mrf.mxu0
  %v504 = vadd.f32 %v359, %v503
  %v505 = vpop.f32.mrf.mxu0
  %506 = vmatprep.mubr.f32.mxu0 %v92
  %507 = vmatmul.mubr.f32.gmra.mxu0 %v91
  %v508 = vpop.f32.mrf.mxu0
  %v509 = vadd.f32 %v364, %v508
  %v510 = vpop.f32.mrf.mxu0
  %511 = vdwg.mxu0
  %512 = vmatprep.subr.mxu0 0.0
  %513 = vmatpush1.msra.mxu0 0.0
  %514 = vmatprep.subr.mxu0 0.0
  %515 = vmatpush1.msra.mxu0 0.0
  %516 = vmatprep.subr.mxu0 0.0
  %517 = vmatpush1.msra.mxu0 0.0
  %518 = vmatprep.subr.mxu0 0.0
  %519 = vmatpush1.msra.mxu0 0.0
  %520 = vmatprep.subr.mxu0 0.0
  %521 = vmatpush1.msra.mxu0 0.0
  %522 = vmatprep.subr.mxu0 0.0
  %523 = vmatpush1.msra.mxu0 0.0
  %524 = vmatprep.subr.mxu0 0.0
  %525 = vmatpush1.msra.mxu0 0.0
  %526 = vmatprep.subr.mxu0 0.0
  %527 = vmatpush1.msra.mxu0 0.0
  %528 = vmatprep.subr.mxu0 0.0
  %529 = vmatpush1.msra.mxu0 %v165
  %530 = vmatprep.subr.mxu0 0.0
  %531 = vmatpush1.msra.mxu0 %v164
  %532 = vmatprep.subr.mxu0 0.0
  %533 = vmatpush1.msra.mxu0 %v163
  %534 = vmatprep.subr.mxu0 0.0
  %535 = vmatpush1.msra.mxu0 %v162
  %536 = vmatprep.subr.mxu0 0.0
  %537 = vmatpush1.msra.mxu0 %v161
  %538 = vmatprep.subr.mxu0 0.0
  %539 = vmatpush1.msra.mxu0 %v160
  %540 = vmatprep.subr.mxu0 0.0
  %541 = vmatpush1.msra.mxu0 %v159
  %542 = vmatprep.subr.mxu0 0.0
  %543 = vmatpush1.msra.mxu0 %v158
  %544 = vmatprep.subr.mxu0 0.0
  %545 = vmatpush2.msra.mxu0 0.0
  %546 = vmatprep.subr.mxu0 0.0
  %547 = vmatpush2.msra.mxu0 0.0
  %548 = vmatprep.subr.mxu0 0.0
  %549 = vmatpush2.msra.mxu0 0.0
  %550 = vmatprep.subr.mxu0 0.0
  %551 = vmatpush2.msra.mxu0 0.0
  %552 = vmatprep.subr.mxu0 0.0
  %553 = vmatpush2.msra.mxu0 0.0
  %554 = vmatprep.subr.mxu0 0.0
  %555 = vmatpush2.msra.mxu0 0.0
  %556 = vmatprep.subr.mxu0 0.0
  %557 = vmatpush2.msra.mxu0 0.0
  %558 = vmatprep.subr.mxu0 0.0
  %559 = vmatpush2.msra.mxu0 0.0
  %560 = vmatprep.subr.mxu0 0.0
  %561 = vmatpush2.msra.mxu0 0.0
  %562 = vmatprep.subr.mxu0 0.0
  %563 = vmatpush2.msra.mxu0 0.0
  %564 = vmatprep.subr.mxu0 0.0
  %565 = vmatpush2.msra.mxu0 0.0
  %566 = vmatprep.subr.mxu0 0.0
  %567 = vmatpush2.msra.mxu0 0.0
  %568 = vmatprep.subr.mxu0 0.0
  %569 = vmatpush2.msra.mxu0 0.0
  %570 = vmatprep.subr.mxu0 0.0
  %571 = vmatpush2.msra.mxu0 0.0
  %572 = vmatprep.subr.mxu0 0.0
  %573 = vmatpush2.msra.mxu0 0.0
  %574 = vmatprep.subr.mxu0 0.0
  %575 = vmatpush2.msra.mxu0 0.0
  %576 = vmatprep.mubr.f32.mxu0 0.0
  %577 = vmatmul.mubr.f32.gmra.mxu0 %v175
  %v578 = vpop.f32.mrf.mxu0
  %v579 = vadd.f32 %v434, %v578
  %v580 = vpop.f32.mrf.mxu0
  %581 = vmatprep.mubr.f32.mxu0 0.0
  %582 = vmatmul.mubr.f32.gmra.mxu0 %v178
  %v583 = vpop.f32.mrf.mxu0
  %v584 = vadd.f32 %v439, %v583
  %v585 = vpop.f32.mrf.mxu0
  %586 = vmatprep.mubr.f32.mxu0 0.0
  %587 = vmatmul.mubr.f32.gmra.mxu0 %v181
  %v588 = vpop.f32.mrf.mxu0
  %v589 = vadd.f32 %v444, %v588
  %v590 = vpop.f32.mrf.mxu0
  %591 = vmatprep.mubr.f32.mxu0 0.0
  %592 = vmatmul.mubr.f32.gmra.mxu0 %v184
  %v593 = vpop.f32.mrf.mxu0
  %v594 = vadd.f32 %v449, %v593
  %v595 = vpop.f32.mrf.mxu0
  %596 = vmatprep.mubr.f32.mxu0 0.0
  %597 = vmatmul.mubr.f32.gmra.mxu0 %v187
  %v598 = vpop.f32.mrf.mxu0
  %v599 = vadd.f32 %v454, %v598
  %v600 = vpop.f32.mrf.mxu0
  %601 = vmatprep.mubr.f32.mxu0 0.0
  %602 = vmatmul.mubr.f32.gmra.mxu0 %v190
  %v603 = vpop.f32.mrf.mxu0
  %v604 = vadd.f32 %v459, %v603
  %v605 = vpop.f32.mrf.mxu0
  %606 = vmatprep.mubr.f32.mxu0 0.0
  %607 = vmatmul.mubr.f32.gmra.mxu0 %v193
  %v608 = vpop.f32.mrf.mxu0
  %v609 = vadd.f32 %v464, %v608
  %v610 = vpop.f32.mrf.mxu0
  %611 = vmatprep.mubr.f32.mxu0 0.0
  %612 = vmatmul.mubr.f32.gmra.mxu0 %v196
  %v613 = vpop.f32.mrf.mxu0
  %v614 = vadd.f32 %v469, %v613
  %v615 = vpop.f32.mrf.mxu0
  %616 = vmatprep.mubr.f32.mxu0 0.0
  %617 = vmatmul.mubr.f32.gmra.mxu0 %v199
  %v618 = vpop.f32.mrf.mxu0
  %v619 = vadd.f32 %v474, %v618
  %v620 = vpop.f32.mrf.mxu0
  %621 = vmatprep.mubr.f32.mxu0 0.0
  %622 = vmatmul.mubr.f32.gmra.mxu0 %v202
  %v623 = vpop.f32.mrf.mxu0
  %v624 = vadd.f32 %v479, %v623
  %v625 = vpop.f32.mrf.mxu0
  %626 = vmatprep.mubr.f32.mxu0 0.0
  %627 = vmatmul.mubr.f32.gmra.mxu0 %v205
  %v628 = vpop.f32.mrf.mxu0
  %v629 = vadd.f32 %v484, %v628
  %v630 = vpop.f32.mrf.mxu0
  %631 = vmatprep.mubr.f32.mxu0 0.0
  %632 = vmatmul.mubr.f32.gmra.mxu0 %v208
  %v633 = vpop.f32.mrf.mxu0
  %v634 = vadd.f32 %v489, %v633
  %v635 = vpop.f32.mrf.mxu0
  %636 = vmatprep.mubr.f32.mxu0 0.0
  %637 = vmatmul.mubr.f32.gmra.mxu0 %v211
  %v638 = vpop.f32.mrf.mxu0
  %v639 = vadd.f32 %v494, %v638
  %v640 = vpop.f32.mrf.mxu0
  %641 = vmatprep.mubr.f32.mxu0 0.0
  %642 = vmatmul.mubr.f32.gmra.mxu0 %v214
  %v643 = vpop.f32.mrf.mxu0
  %v644 = vadd.f32 %v499, %v643
  %v645 = vpop.f32.mrf.mxu0
  %646 = vmatprep.mubr.f32.mxu0 0.0
  %647 = vmatmul.mubr.f32.gmra.mxu0 %v217
  %v648 = vpop.f32.mrf.mxu0
  %v649 = vadd.f32 %v504, %v648
  %v650 = vpop.f32.mrf.mxu0
  %651 = vmatprep.mubr.f32.mxu0 0.0
  %652 = vmatmul.mubr.f32.gmra.mxu0 %v220
  %v653 = vpop.f32.mrf.mxu0
  %v654 = vadd.f32 %v509, %v653
  %v655 = vpop.f32.mrf.mxu0
  %656 = vdwg.mxu0
  %v657 = vmax.f32 %v579, 0.0
  %v658 = vmax.f32 %v584, 0.0
  %v659 = vmax.f32 %v589, 0.0
  %v660 = vmax.f32 %v594, 0.0
  %v661 = vmax.f32 %v599, 0.0
  %v662 = vmax.f32 %v604, 0.0
  %v663 = vmax.f32 %v609, 0.0
  %v664 = vmax.f32 %v614, 0.0
  %v665 = vmax.f32 %v619, 0.0
  %v666 = vmax.f32 %v624, 0.0
  %v667 = vmax.f32 %v629, 0.0
  %v668 = vmax.f32 %v634, 0.0
  %v669 = vmax.f32 %v639, 0.0
  %v670 = vmax.f32 %v644, 0.0
  %v671 = vmax.f32 %v649, 0.0
  %v672 = vmax.f32 %v654, 0.0
  %673 = vst [vmem:[%s3] sm:$0xff] %v657
  %674 = vst [vmem:[%s3 + $0x8] sm:$0xff] %v658
  %675 = vst [vmem:[%s3 + $0x10] sm:$0xff] %v659
  %676 = vst [vmem:[%s3 + $0x18] sm:$0xff] %v660
  %677 = vst [vmem:[%s3 + $0x20] sm:$0xff] %v661
  %678 = vst [vmem:[%s3 + $0x28] sm:$0xff] %v662
  %679 = vst [vmem:[%s3 + $0x30] sm:$0xff] %v663
  %680 = vst [vmem:[%s3 + $0x38] sm:$0xff] %v664
  %681 = vst [vmem:[%s3 + $0x40] sm:$0xff] %v665
  %682 = vst [vmem:[%s3 + $0x48] sm:$0xff] %v666
  %683 = vst [vmem:[%s3 + $0x50] sm:$0xff] %v667
  %684 = vst [vmem:[%s3 + $0x58] sm:$0xff] %v668
  %685 = vst [vmem:[%s3 + $0x60] sm:$0xff] %v669
  %686 = vst [vmem:[%s3 + $0x68] sm:$0xff] %v670
  %687 = vst [vmem:[%s3 + $0x70] sm:$0xff] %v671
  %688 = vst [vmem:[%s3 + $0x78] sm:$0xff] %v672
  // Predicated region
  $region14: #{vqvae_forward.8} parent=0 // pred_check
    _
  $region15: #{vqvae_forward.8} parent=0 // pred_check_branch
    %690 = sbr.rel (0) target = $region17
  $region16: #{vqvae_forward.8} parent=0 // pred_region
    _
  $region17: #{vqvae_forward.8} parent=0 // pred_fallthru
    _
  // Predicated region
  $region18: #{vqvae_forward.8} parent=0 // pred_check
    _
  $region19: #{vqvae_forward.8} parent=0 // pred_check_branch
    %692 = sbr.rel (0) target = $region21
  $region20: #{vqvae_forward.8} parent=0 // pred_region
    _
  $region21: #{vqvae_forward.8} parent=0 // pred_fallthru
    _

// kernel: vqvae_forward.9
$region0: #{vqvae_forward.9}
  #allocation0 [shape = 'u32[]', space=smem, size = 0x4, offset = 0x4, fixed_abs, tag = 'smem constant byte address 0x4 - core index']
  #allocation1 [shape = 'u32[144,128]{1,0:T(1,128)}', space=vmem, size = 0x12000, scoped, tag = 'internal scratch']
  %s0 = inlined_call_operand.vmem [shape: f32[512,288], index: 0, kind: input, shape index: {}]
  %s1 = inlined_call_operand.vmem [shape: f32[288,128], index: 1, kind: input, shape index: {}]
  %s2 = inlined_call_operand.vmem [shape: f32[1,128], index: 2, kind: input, shape index: {}]
  %s3 = inlined_call_operand.vmem [shape: f32[512,128], index: 3, kind: output, shape index: {}]
  %s4 = sld [smem:[#allocation0]]
  $region22: #{vqvae_forward.9} parent=0
    _
  %s6 = ssub.s32 1, %s4
  %s7 = scalar_select 0, %s6, %s4
  // Predicated region
  $region2: #{vqvae_forward.9} parent=0 // pred_check
    _
  $region3: #{vqvae_forward.9} parent=0 // pred_check_branch
    %9 = sbr.rel (0) target = $region5
  $region4: #{vqvae_forward.9} parent=0 // pred_region
    _
  $region5: #{vqvae_forward.9} parent=0 // pred_fallthru
    _
  // Predicated region
  $region6: #{vqvae_forward.9} parent=0 // pred_check
    _
  $region7: #{vqvae_forward.9} parent=0 // pred_check_branch
    %11 = sbr.rel (0) target = $region9
  $region8: #{vqvae_forward.9} parent=0 // pred_region
    _
  $region9: #{vqvae_forward.9} parent=0 // pred_fallthru
    _
  // Predicated region
  $region10: #{vqvae_forward.9} parent=0 // pred_check
    _
  $region11: #{vqvae_forward.9} parent=0 // pred_check_branch
    %13 = sbr.rel (0) target = $region13
  $region12: #{vqvae_forward.9} parent=0 // pred_region
    _
  $region13: #{vqvae_forward.9} parent=0 // pred_fallthru
    _
  %v14 = vld [vmem:[%s0] sm:$0xff]
  %v15 = vld [vmem:[%s0 + $0x8] sm:$0xff]
  %v16 = vld [vmem:[%s0 + $0x10] sm:$0xff]
  %v17 = vld [vmem:[%s0 + $0x18] sm:$0xff]
  %v18 = vld [vmem:[%s0 + $0x20] sm:$0xff]
  %v19 = vld [vmem:[%s0 + $0x28] sm:$0xff]
  %v20 = vld [vmem:[%s0 + $0x30] sm:$0xff]
  %v21 = vld [vmem:[%s0 + $0x38] sm:$0xff]
  %v22 = vld [vmem:[%s0 + $0x40] sm:$0xff]
  %v23 = vld [vmem:[%s0 + $0x48] sm:$0xff]
  %v24 = vld [vmem:[%s0 + $0x50] sm:$0xff]
  %v25 = vld [vmem:[%s0 + $0x58] sm:$0xff]
  %v26 = vld [vmem:[%s0 + $0x60] sm:$0xff]
  %v27 = vld [vmem:[%s0 + $0x68] sm:$0xff]
  %v28 = vld [vmem:[%s0 + $0x70] sm:$0xff]
  %v29 = vld [vmem:[%s0 + $0x78] sm:$0xff]
  %v30 = vld [vmem:[%s0 + $0x80] sm:$0xff]
  %v31 = vld [vmem:[%s0 + $0x88] sm:$0xff]
  %v32 = vld [vmem:[%s0 + $0x90] sm:$0xff]
  %v33 = vld [vmem:[%s0 + $0x98] sm:$0xff]
  %v34 = vld [vmem:[%s0 + $0xa0] sm:$0xff]
  %v35 = vld [vmem:[%s0 + $0xa8] sm:$0xff]
  %v36 = vld [vmem:[%s0 + $0xb0] sm:$0xff]
  %v37 = vld [vmem:[%s0 + $0xb8] sm:$0xff]
  %v38 = vld [vmem:[%s0 + $0xc0] sm:$0xff]
  %v39 = vld [vmem:[%s0 + $0xc8] sm:$0xff]
  %v40 = vld [vmem:[%s0 + $0xd0] sm:$0xff]
  %v41 = vld [vmem:[%s0 + $0xd8] sm:$0xff]
  %v42 = vld [vmem:[%s0 + $0xe0] sm:$0xff]
  %v43 = vld [vmem:[%s0 + $0xe8] sm:$0xff]
  %v44 = vld [vmem:[%s0 + $0xf0] sm:$0xff]
  %v45 = vld [vmem:[%s0 + $0xf8] sm:$0xff]
  %v46 = vld [vmem:[%s0 + $0x100] sm:$0xff]
  %v47 = vld [vmem:[%s0 + $0x108] sm:$0xff]
  %v48 = vld [vmem:[%s0 + $0x110] sm:$0xff]
  %v49 = vld [vmem:[%s0 + $0x118] sm:$0xff]
  %v50 = vld [vmem:[%s0 + $0x120] sm:$0xff]
  %v51 = vld [vmem:[%s0 + $0x128] sm:$0xff]
  %v52 = vld [vmem:[%s0 + $0x130] sm:$0xff]
  %v53 = vld [vmem:[%s0 + $0x138] sm:$0xff]
  %v54 = vld [vmem:[%s0 + $0x140] sm:$0xff]
  %v55 = vld [vmem:[%s0 + $0x148] sm:$0xff]
  %v56 = vld [vmem:[%s0 + $0x150] sm:$0xff]
  %v57 = vld [vmem:[%s0 + $0x158] sm:$0xff]
  %v58 = vld [vmem:[%s0 + $0x160] sm:$0xff]
  %v59 = vld [vmem:[%s0 + $0x168] sm:$0xff]
  %v60 = vld [vmem:[%s0 + $0x170] sm:$0xff]
  %v61 = vld [vmem:[%s0 + $0x178] sm:$0xff]
  %v62 = vld [vmem:[%s0 + $0x180] sm:$0xff]
  %v63 = vld [vmem:[%s0 + $0x188] sm:$0xff]
  %v64 = vld [vmem:[%s0 + $0x190] sm:$0xff]
  %v65 = vld [vmem:[%s0 + $0x198] sm:$0xff]
  %v66 = vld [vmem:[%s0 + $0x1a0] sm:$0xff]
  %v67 = vld [vmem:[%s0 + $0x1a8] sm:$0xff]
  %v68 = vld [vmem:[%s0 + $0x1b0] sm:$0xff]
  %v69 = vld [vmem:[%s0 + $0x1b8] sm:$0xff]
  %v70 = vld [vmem:[%s0 + $0x1c0] sm:$0xff]
  %v71 = vld [vmem:[%s0 + $0x1c8] sm:$0xff]
  %v72 = vld [vmem:[%s0 + $0x1d0] sm:$0xff]
  %v73 = vld [vmem:[%s0 + $0x1d8] sm:$0xff]
  %v74 = vld [vmem:[%s0 + $0x1e0] sm:$0xff]
  %v75 = vld [vmem:[%s0 + $0x1e8] sm:$0xff]
  %v76 = vld [vmem:[%s0 + $0x1f0] sm:$0xff]
  %v77 = vld [vmem:[%s0 + $0x1f8] sm:$0xff]
  %v78 = vld [vmem:[%s0 + $0x200] sm:$0xff]
  %v79 = vld [vmem:[%s0 + $0x208] sm:$0xff]
  %v80 = vld [vmem:[%s0 + $0x210] sm:$0xff]
  %v81 = vld [vmem:[%s0 + $0x218] sm:$0xff]
  %v82 = vld [vmem:[%s0 + $0x220] sm:$0xff]
  %v83 = vld [vmem:[%s0 + $0x228] sm:$0xff]
  %v84 = vld [vmem:[%s0 + $0x230] sm:$0xff]
  %v85 = vld [vmem:[%s0 + $0x238] sm:$0xff]
  %v86 = vld [vmem:[%s0 + $0x240] sm:$0xff]
  %v87 = vld [vmem:[%s0 + $0x248] sm:$0xff]
  %v88 = vld [vmem:[%s0 + $0x250] sm:$0xff]
  %v89 = vld [vmem:[%s0 + $0x258] sm:$0xff]
  %v90 = vld [vmem:[%s0 + $0x260] sm:$0xff]
  %v91 = vld [vmem:[%s0 + $0x268] sm:$0xff]
  %v92 = vld [vmem:[%s0 + $0x270] sm:$0xff]
  %v93 = vld [vmem:[%s0 + $0x278] sm:$0xff]
  %v94 = vld [vmem:[%s0 + $0x280] sm:$0xff]
  %v95 = vld [vmem:[%s0 + $0x288] sm:$0xff]
  %v96 = vld [vmem:[%s0 + $0x290] sm:$0xff]
  %v97 = vld [vmem:[%s0 + $0x298] sm:$0xff]
  %v98 = vld [vmem:[%s0 + $0x2a0] sm:$0xff]
  %v99 = vld [vmem:[%s0 + $0x2a8] sm:$0xff]
  %v100 = vld [vmem:[%s0 + $0x2b0] sm:$0xff]
  %v101 = vld [vmem:[%s0 + $0x2b8] sm:$0xff]
  %v102 = vld [vmem:[%s0 + $0x2c0] sm:$0xff]
  %v103 = vld [vmem:[%s0 + $0x2c8] sm:$0xff]
  %v104 = vld [vmem:[%s0 + $0x2d0] sm:$0xff]
  %v105 = vld [vmem:[%s0 + $0x2d8] sm:$0xff]
  %v106 = vld [vmem:[%s0 + $0x2e0] sm:$0xff]
  %v107 = vld [vmem:[%s0 + $0x2e8] sm:$0xff]
  %v108 = vld [vmem:[%s0 + $0x2f0] sm:$0xff]
  %v109 = vld [vmem:[%s0 + $0x2f8] sm:$0xff]
  %v110 = vld [vmem:[%s0 + $0x300] sm:$0xff]
  %v111 = vld [vmem:[%s0 + $0x308] sm:$0xff]
  %v112 = vld [vmem:[%s0 + $0x310] sm:$0xff]
  %v113 = vld [vmem:[%s0 + $0x318] sm:$0xff]
  %v114 = vld [vmem:[%s0 + $0x320] sm:$0xff]
  %v115 = vld [vmem:[%s0 + $0x328] sm:$0xff]
  %v116 = vld [vmem:[%s0 + $0x330] sm:$0xff]
  %v117 = vld [vmem:[%s0 + $0x338] sm:$0xff]
  %v118 = vld [vmem:[%s0 + $0x340] sm:$0xff]
  %v119 = vld [vmem:[%s0 + $0x348] sm:$0xff]
  %v120 = vld [vmem:[%s0 + $0x350] sm:$0xff]
  %v121 = vld [vmem:[%s0 + $0x358] sm:$0xff]
  %v122 = vld [vmem:[%s0 + $0x360] sm:$0xff]
  %v123 = vld [vmem:[%s0 + $0x368] sm:$0xff]
  %v124 = vld [vmem:[%s0 + $0x370] sm:$0xff]
  %v125 = vld [vmem:[%s0 + $0x378] sm:$0xff]
  %v126 = vld [vmem:[%s0 + $0x380] sm:$0xff]
  %v127 = vld [vmem:[%s0 + $0x388] sm:$0xff]
  %v128 = vld [vmem:[%s0 + $0x390] sm:$0xff]
  %v129 = vld [vmem:[%s0 + $0x398] sm:$0xff]
  %v130 = vld [vmem:[%s0 + $0x3a0] sm:$0xff]
  %v131 = vld [vmem:[%s0 + $0x3a8] sm:$0xff]
  %v132 = vld [vmem:[%s0 + $0x3b0] sm:$0xff]
  %v133 = vld [vmem:[%s0 + $0x3b8] sm:$0xff]
  %v134 = vld [vmem:[%s0 + $0x3c0] sm:$0xff]
  %v135 = vld [vmem:[%s0 + $0x3c8] sm:$0xff]
  %v136 = vld [vmem:[%s0 + $0x3d0] sm:$0xff]
  %v137 = vld [vmem:[%s0 + $0x3d8] sm:$0xff]
  %v138 = vld [vmem:[%s0 + $0x3e0] sm:$0xff]
  %v139 = vld [vmem:[%s0 + $0x3e8] sm:$0xff]
  %v140 = vld [vmem:[%s0 + $0x3f0] sm:$0xff]
  %v141 = vld [vmem:[%s0 + $0x3f8] sm:$0xff]
  %v142 = vld [vmem:[%s0 + $0x400] sm:$0xff]
  %v143 = vld [vmem:[%s0 + $0x408] sm:$0xff]
  %v144 = vld [vmem:[%s0 + $0x410] sm:$0xff]
  %v145 = vld [vmem:[%s0 + $0x418] sm:$0xff]
  %v146 = vld [vmem:[%s0 + $0x420] sm:$0xff]
  %v147 = vld [vmem:[%s0 + $0x428] sm:$0xff]
  %v148 = vld [vmem:[%s0 + $0x430] sm:$0xff]
  %v149 = vld [vmem:[%s0 + $0x438] sm:$0xff]
  %v150 = vld [vmem:[%s0 + $0x440] sm:$0xff]
  %v151 = vld [vmem:[%s0 + $0x448] sm:$0xff]
  %v152 = vld [vmem:[%s0 + $0x450] sm:$0xff]
  %v153 = vld [vmem:[%s0 + $0x458] sm:$0xff]
  %v154 = vld [vmem:[%s0 + $0x460] sm:$0xff]
  %v155 = vld [vmem:[%s0 + $0x468] sm:$0xff]
  %v156 = vld [vmem:[%s0 + $0x470] sm:$0xff]
  %v157 = vld [vmem:[%s0 + $0x478] sm:$0xff]
  %v158 = vld [vmem:[%s0 + $0x480] sm:$0xff]
  %v159 = vld [vmem:[%s0 + $0x488] sm:$0xff]
  %v160 = vld [vmem:[%s0 + $0x490] sm:$0xff]
  %v161 = vld [vmem:[%s0 + $0x498] sm:$0xff]
  %v162 = vld [vmem:[%s0 + $0x4a0] sm:$0xff]
  %v163 = vld [vmem:[%s0 + $0x4a8] sm:$0xff]
  %v164 = vld [vmem:[%s0 + $0x4b0] sm:$0xff]
  %v165 = vld [vmem:[%s0 + $0x4b8] sm:$0xff]
  %v166 = vld [vmem:[%s0 + $0x4c0] sm:$0xff]
  %v167 = vld [vmem:[%s0 + $0x4c8] sm:$0xff]
  %v168 = vld [vmem:[%s0 + $0x4d0] sm:$0xff]
  %v169 = vld [vmem:[%s0 + $0x4d8] sm:$0xff]
  %v170 = vld [vmem:[%s0 + $0x4e0] sm:$0xff]
  %v171 = vld [vmem:[%s0 + $0x4e8] sm:$0xff]
  %v172 = vld [vmem:[%s0 + $0x4f0] sm:$0xff]
  %v173 = vld [vmem:[%s0 + $0x4f8] sm:$0xff]
  %v174 = vld [vmem:[%s0 + $0x500] sm:$0xff]
  %v175 = vld [vmem:[%s0 + $0x508] sm:$0xff]
  %v176 = vld [vmem:[%s0 + $0x510] sm:$0xff]
  %v177 = vld [vmem:[%s0 + $0x518] sm:$0xff]
  %v178 = vld [vmem:[%s0 + $0x520] sm:$0xff]
  %v179 = vld [vmem:[%s0 + $0x528] sm:$0xff]
  %v180 = vld [vmem:[%s0 + $0x530] sm:$0xff]
  %v181 = vld [vmem:[%s0 + $0x538] sm:$0xff]
  %v182 = vld [vmem:[%s0 + $0x540] sm:$0xff]
  %v183 = vld [vmem:[%s0 + $0x548] sm:$0xff]
  %v184 = vld [vmem:[%s0 + $0x550] sm:$0xff]
  %v185 = vld [vmem:[%s0 + $0x558] sm:$0xff]
  %v186 = vld [vmem:[%s0 + $0x560] sm:$0xff]
  %v187 = vld [vmem:[%s0 + $0x568] sm:$0xff]
  %v188 = vld [vmem:[%s0 + $0x570] sm:$0xff]
  %v189 = vld [vmem:[%s0 + $0x578] sm:$0xff]
  %v190 = vld [vmem:[%s0 + $0x580] sm:$0xff]
  %v191 = vld [vmem:[%s0 + $0x588] sm:$0xff]
  %v192 = vld [vmem:[%s0 + $0x590] sm:$0xff]
  %v193 = vld [vmem:[%s0 + $0x598] sm:$0xff]
  %v194 = vld [vmem:[%s0 + $0x5a0] sm:$0xff]
  %v195 = vld [vmem:[%s0 + $0x5a8] sm:$0xff]
  %v196 = vld [vmem:[%s0 + $0x5b0] sm:$0xff]
  %v197 = vld [vmem:[%s0 + $0x5b8] sm:$0xff]
  %v198 = vld [vmem:[%s0 + $0x5c0] sm:$0xff]
  %v199 = vld [vmem:[%s0 + $0x5c8] sm:$0xff]
  %v200 = vld [vmem:[%s0 + $0x5d0] sm:$0xff]
  %v201 = vld [vmem:[%s0 + $0x5d8] sm:$0xff]
  %v202 = vld [vmem:[%s0 + $0x5e0] sm:$0xff]
  %v203 = vld [vmem:[%s0 + $0x5e8] sm:$0xff]
  %v204 = vld [vmem:[%s0 + $0x5f0] sm:$0xff]
  %v205 = vld [vmem:[%s0 + $0x5f8] sm:$0xff]
  %v206 = vld [vmem:[%s1] sm:$0xff]
  %v207 = vld [vmem:[%s1 + $0x8] sm:$0xff]
  %v208 = vld [vmem:[%s1 + $0x10] sm:$0xff]
  %v209 = vld [vmem:[%s1 + $0x18] sm:$0xff]
  %v210 = vld [vmem:[%s1 + $0x20] sm:$0xff]
  %v211 = vld [vmem:[%s1 + $0x28] sm:$0xff]
  %v212 = vld [vmem:[%s1 + $0x30] sm:$0xff]
  %v213 = vld [vmem:[%s1 + $0x38] sm:$0xff]
  %v214 = vld [vmem:[%s1 + $0x40] sm:$0xff]
  %v215 = vld [vmem:[%s1 + $0x48] sm:$0xff]
  %v216 = vld [vmem:[%s1 + $0x50] sm:$0xff]
  %v217 = vld [vmem:[%s1 + $0x58] sm:$0xff]
  %v218 = vld [vmem:[%s1 + $0x60] sm:$0xff]
  %v219 = vld [vmem:[%s1 + $0x68] sm:$0xff]
  %v220 = vld [vmem:[%s1 + $0x70] sm:$0xff]
  %v221 = vld [vmem:[%s1 + $0x78] sm:$0xff]
  %v222 = vld [vmem:[%s1 + $0x80] sm:$0xff]
  %v223 = vld [vmem:[%s1 + $0x88] sm:$0xff]
  %v224 = vld [vmem:[%s1 + $0x90] sm:$0xff]
  %v225 = vld [vmem:[%s1 + $0x98] sm:$0xff]
  %v226 = vld [vmem:[%s1 + $0xa0] sm:$0xff]
  %v227 = vld [vmem:[%s1 + $0xa8] sm:$0xff]
  %v228 = vld [vmem:[%s1 + $0xb0] sm:$0xff]
  %v229 = vld [vmem:[%s1 + $0xb8] sm:$0xff]
  %v230 = vld [vmem:[%s1 + $0xc0] sm:$0xff]
  %v231 = vld [vmem:[%s1 + $0xc8] sm:$0xff]
  %v232 = vld [vmem:[%s1 + $0xd0] sm:$0xff]
  %v233 = vld [vmem:[%s1 + $0xd8] sm:$0xff]
  %v234 = vld [vmem:[%s1 + $0xe0] sm:$0xff]
  %v235 = vld [vmem:[%s1 + $0xe8] sm:$0xff]
  %v236 = vld [vmem:[%s1 + $0xf0] sm:$0xff]
  %v237 = vld [vmem:[%s1 + $0xf8] sm:$0xff]
  %v238 = vld [vmem:[%s1 + $0x100] sm:$0xff]
  %v239 = vld [vmem:[%s1 + $0x108] sm:$0xff]
  %v240 = vld [vmem:[%s1 + $0x110] sm:$0xff]
  %v241 = vld [vmem:[%s1 + $0x118] sm:$0xff]
  %v242 = vld [vmem:[%s2] sm:$0x1]
  %v244 = vlaneseq
  %v245 = vshrl.u32 %v244, 7
  %v246 = vsub.s32 0, %v245
  %v247 = vrot.slane %v242, %v246
  %vm249 = vcmask 261120
  %v251 = vsel %vm249, %v16, 0
  %v254 = vsel %vm249, %v19, 0
  %v257 = vsel %vm249, %v22, 0
  %v260 = vsel %vm249, %v25, 0
  %v263 = vsel %vm249, %v28, 0
  %v266 = vsel %vm249, %v31, 0
  %v269 = vsel %vm249, %v34, 0
  %v272 = vsel %vm249, %v37, 0
  %v275 = vsel %vm249, %v40, 0
  %v278 = vsel %vm249, %v43, 0
  %v281 = vsel %vm249, %v46, 0
  %v284 = vsel %vm249, %v49, 0
  %v287 = vsel %vm249, %v52, 0
  %v290 = vsel %vm249, %v55, 0
  %v293 = vsel %vm249, %v58, 0
  %v296 = vsel %vm249, %v61, 0
  %v299 = vsel %vm249, %v64, 0
  %v302 = vsel %vm249, %v67, 0
  %v305 = vsel %vm249, %v70, 0
  %v308 = vsel %vm249, %v73, 0
  %v311 = vsel %vm249, %v76, 0
  %v314 = vsel %vm249, %v79, 0
  %v317 = vsel %vm249, %v82, 0
  %v320 = vsel %vm249, %v85, 0
  %v323 = vsel %vm249, %v88, 0
  %v326 = vsel %vm249, %v91, 0
  %v329 = vsel %vm249, %v94, 0
  %v332 = vsel %vm249, %v97, 0
  %v335 = vsel %vm249, %v100, 0
  %v338 = vsel %vm249, %v103, 0
  %v341 = vsel %vm249, %v106, 0
  %v344 = vsel %vm249, %v109, 0
  %v347 = vsel %vm249, %v112, 0
  %v350 = vsel %vm249, %v115, 0
  %v353 = vsel %vm249, %v118, 0
  %v356 = vsel %vm249, %v121, 0
  %v359 = vsel %vm249, %v124, 0
  %v362 = vsel %vm249, %v127, 0
  %v365 = vsel %vm249, %v130, 0
  %v368 = vsel %vm249, %v133, 0
  %v371 = vsel %vm249, %v136, 0
  %v374 = vsel %vm249, %v139, 0
  %v377 = vsel %vm249, %v142, 0
  %v380 = vsel %vm249, %v145, 0
  %v383 = vsel %vm249, %v148, 0
  %v386 = vsel %vm249, %v151, 0
  %v389 = vsel %vm249, %v154, 0
  %v392 = vsel %vm249, %v157, 0
  %v395 = vsel %vm249, %v160, 0
  %v398 = vsel %vm249, %v163, 0
  %v401 = vsel %vm249, %v166, 0
  %v404 = vsel %vm249, %v169, 0
  %v407 = vsel %vm249, %v172, 0
  %v410 = vsel %vm249, %v175, 0
  %v413 = vsel %vm249, %v178, 0
  %v416 = vsel %vm249, %v181, 0
  %v419 = vsel %vm249, %v184, 0
  %v422 = vsel %vm249, %v187, 0
  %v425 = vsel %vm249, %v190, 0
  %v428 = vsel %vm249, %v193, 0
  %v431 = vsel %vm249, %v196, 0
  %v434 = vsel %vm249, %v199, 0
  %v437 = vsel %vm249, %v202, 0
  %v440 = vsel %vm249, %v205, 0
  %442 = vmatprep.subr.mxu0 0.0
  %443 = vmatpush1.msra.mxu0 %v221
  %444 = vmatprep.subr.mxu0 0.0
  %445 = vmatpush1.msra.mxu0 %v220
  %446 = vmatprep.subr.mxu0 0.0
  %447 = vmatpush1.msra.mxu0 %v219
  %448 = vmatprep.subr.mxu0 0.0
  %449 = vmatpush1.msra.mxu0 %v218
  %450 = vmatprep.subr.mxu0 0.0
  %451 = vmatpush1.msra.mxu0 %v217
  %452 = vmatprep.subr.mxu0 0.0
  %453 = vmatpush1.msra.mxu0 %v216
  %454 = vmatprep.subr.mxu0 0.0
  %455 = vmatpush1.msra.mxu0 %v215
  %456 = vmatprep.subr.mxu0 0.0
  %457 = vmatpush1.msra.mxu0 %v214
  %458 = vmatprep.subr.mxu0 0.0
  %459 = vmatpush1.msra.mxu0 %v213
  %460 = vmatprep.subr.mxu0 0.0
  %461 = vmatpush1.msra.mxu0 %v212
  %462 = vmatprep.subr.mxu0 0.0
  %463 = vmatpush1.msra.mxu0 %v211
  %464 = vmatprep.subr.mxu0 0.0
  %465 = vmatpush1.msra.mxu0 %v210
  %466 = vmatprep.subr.mxu0 0.0
  %467 = vmatpush1.msra.mxu0 %v209
  %468 = vmatprep.subr.mxu0 0.0
  %469 = vmatpush1.msra.mxu0 %v208
  %470 = vmatprep.subr.mxu0 0.0
  %471 = vmatpush1.msra.mxu0 %v207
  %472 = vmatprep.subr.mxu0 0.0
  %473 = vmatpush1.msra.mxu0 %v206
  %474 = vmatprep.subr.mxu0 0.0
  %475 = vmatpush2.msra.mxu0 %v237
  %476 = vmatprep.subr.mxu0 0.0
  %477 = vmatpush2.msra.mxu0 %v236
  %478 = vmatprep.subr.mxu0 0.0
  %479 = vmatpush2.msra.mxu0 %v235
  %480 = vmatprep.subr.mxu0 0.0
  %481 = vmatpush2.msra.mxu0 %v234
  %482 = vmatprep.subr.mxu0 0.0
  %483 = vmatpush2.msra.mxu0 %v233
  %484 = vmatprep.subr.mxu0 0.0
  %485 = vmatpush2.msra.mxu0 %v232
  %486 = vmatprep.subr.mxu0 0.0
  %487 = vmatpush2.msra.mxu0 %v231
  %488 = vmatprep.subr.mxu0 0.0
  %489 = vmatpush2.msra.mxu0 %v230
  %490 = vmatprep.subr.mxu0 0.0
  %491 = vmatpush2.msra.mxu0 %v229
  %492 = vmatprep.subr.mxu0 0.0
  %493 = vmatpush2.msra.mxu0 %v228
  %494 = vmatprep.subr.mxu0 0.0
  %495 = vmatpush2.msra.mxu0 %v227
  %496 = vmatprep.subr.mxu0 0.0
  %497 = vmatpush2.msra.mxu0 %v226
  %498 = vmatprep.subr.mxu0 0.0
  %499 = vmatpush2.msra.mxu0 %v225
  %500 = vmatprep.subr.mxu0 0.0
  %501 = vmatpush2.msra.mxu0 %v224
  %502 = vmatprep.subr.mxu0 0.0
  %503 = vmatpush2.msra.mxu0 %v223
  %504 = vmatprep.subr.mxu0 0.0
  %505 = vmatpush2.msra.mxu0 %v222
  %506 = vmatprep.mubr.f32.mxu0 %v15
  %507 = vmatmul.mubr.f32.gmra.mxu0 %v14
  %v508 = vpop.f32.mrf.mxu0
  %v509 = vadd.f32 %v247, %v508
  %v510 = vpop.f32.mrf.mxu0
  %511 = vmatprep.mubr.f32.mxu0 %v18
  %512 = vmatmul.mubr.f32.gmra.mxu0 %v17
  %v513 = vpop.f32.mrf.mxu0
  %v514 = vadd.f32 %v247, %v513
  %v515 = vpop.f32.mrf.mxu0
  %516 = vmatprep.mubr.f32.mxu0 %v21
  %517 = vmatmul.mubr.f32.gmra.mxu0 %v20
  %v518 = vpop.f32.mrf.mxu0
  %v519 = vadd.f32 %v247, %v518
  %v520 = vpop.f32.mrf.mxu0
  %521 = vmatprep.mubr.f32.mxu0 %v24
  %522 = vmatmul.mubr.f32.gmra.mxu0 %v23
  %v523 = vpop.f32.mrf.mxu0
  %v524 = vadd.f32 %v247, %v523
  %v525 = vpop.f32.mrf.mxu0
  %526 = vmatprep.mubr.f32.mxu0 %v27
  %527 = vmatmul.mubr.f32.gmra.mxu0 %v26
  %v528 = vpop.f32.mrf.mxu0
  %v529 = vadd.f32 %v247, %v528
  %v530 = vpop.f32.mrf.mxu0
  %531 = vmatprep.mubr.f32.mxu0 %v30
  %532 = vmatmul.mubr.f32.gmra.mxu0 %v29
  %v533 = vpop.f32.mrf.mxu0
  %v534 = vadd.f32 %v247, %v533
  %v535 = vpop.f32.mrf.mxu0
  %536 = vmatprep.mubr.f32.mxu0 %v33
  %537 = vmatmul.mubr.f32.gmra.mxu0 %v32
  %v538 = vpop.f32.mrf.mxu0
  %v539 = vadd.f32 %v247, %v538
  %v540 = vpop.f32.mrf.mxu0
  %541 = vmatprep.mubr.f32.mxu0 %v36
  %542 = vmatmul.mubr.f32.gmra.mxu0 %v35
  %v543 = vpop.f32.mrf.mxu0
  %v544 = vadd.f32 %v247, %v543
  %v545 = vpop.f32.mrf.mxu0
  %546 = vmatprep.mubr.f32.mxu0 %v39
  %547 = vmatmul.mubr.f32.gmra.mxu0 %v38
  %v548 = vpop.f32.mrf.mxu0
  %v549 = vadd.f32 %v247, %v548
  %v550 = vpop.f32.mrf.mxu0
  %551 = vmatprep.mubr.f32.mxu0 %v42
  %552 = vmatmul.mubr.f32.gmra.mxu0 %v41
  %v553 = vpop.f32.mrf.mxu0
  %v554 = vadd.f32 %v247, %v553
  %v555 = vpop.f32.mrf.mxu0
  %556 = vmatprep.mubr.f32.mxu0 %v45
  %557 = vmatmul.mubr.f32.gmra.mxu0 %v44
  %v558 = vpop.f32.mrf.mxu0
  %v559 = vadd.f32 %v247, %v558
  %v560 = vpop.f32.mrf.mxu0
  %561 = vmatprep.mubr.f32.mxu0 %v48
  %562 = vmatmul.mubr.f32.gmra.mxu0 %v47
  %v563 = vpop.f32.mrf.mxu0
  %v564 = vadd.f32 %v247, %v563
  %v565 = vpop.f32.mrf.mxu0
  %566 = vmatprep.mubr.f32.mxu0 %v51
  %567 = vmatmul.mubr.f32.gmra.mxu0 %v50
  %v568 = vpop.f32.mrf.mxu0
  %v569 = vadd.f32 %v247, %v568
  %v570 = vpop.f32.mrf.mxu0
  %571 = vmatprep.mubr.f32.mxu0 %v54
  %572 = vmatmul.mubr.f32.gmra.mxu0 %v53
  %v573 = vpop.f32.mrf.mxu0
  %v574 = vadd.f32 %v247, %v573
  %v575 = vpop.f32.mrf.mxu0
  %576 = vmatprep.mubr.f32.mxu0 %v57
  %577 = vmatmul.mubr.f32.gmra.mxu0 %v56
  %v578 = vpop.f32.mrf.mxu0
  %v579 = vadd.f32 %v247, %v578
  %v580 = vpop.f32.mrf.mxu0
  %581 = vmatprep.mubr.f32.mxu0 %v60
  %582 = vmatmul.mubr.f32.gmra.mxu0 %v59
  %v583 = vpop.f32.mrf.mxu0
  %v584 = vadd.f32 %v247, %v583
  %v585 = vpop.f32.mrf.mxu0
  %586 = vmatprep.mubr.f32.mxu0 %v63
  %587 = vmatmul.mubr.f32.gmra.mxu0 %v62
  %v588 = vpop.f32.mrf.mxu0
  %v589 = vadd.f32 %v247, %v588
  %v590 = vpop.f32.mrf.mxu0
  %591 = vmatprep.mubr.f32.mxu0 %v66
  %592 = vmatmul.mubr.f32.gmra.mxu0 %v65
  %v593 = vpop.f32.mrf.mxu0
  %v594 = vadd.f32 %v247, %v593
  %v595 = vpop.f32.mrf.mxu0
  %596 = vmatprep.mubr.f32.mxu0 %v69
  %597 = vmatmul.mubr.f32.gmra.mxu0 %v68
  %v598 = vpop.f32.mrf.mxu0
  %v599 = vadd.f32 %v247, %v598
  %v600 = vpop.f32.mrf.mxu0
  %601 = vmatprep.mubr.f32.mxu0 %v72
  %602 = vmatmul.mubr.f32.gmra.mxu0 %v71
  %v603 = vpop.f32.mrf.mxu0
  %v604 = vadd.f32 %v247, %v603
  %v605 = vpop.f32.mrf.mxu0
  %606 = vmatprep.mubr.f32.mxu0 %v75
  %607 = vmatmul.mubr.f32.gmra.mxu0 %v74
  %v608 = vpop.f32.mrf.mxu0
  %v609 = vadd.f32 %v247, %v608
  %v610 = vpop.f32.mrf.mxu0
  %611 = vmatprep.mubr.f32.mxu0 %v78
  %612 = vmatmul.mubr.f32.gmra.mxu0 %v77
  %v613 = vpop.f32.mrf.mxu0
  %v614 = vadd.f32 %v247, %v613
  %v615 = vpop.f32.mrf.mxu0
  %616 = vmatprep.mubr.f32.mxu0 %v81
  %617 = vmatmul.mubr.f32.gmra.mxu0 %v80
  %v618 = vpop.f32.mrf.mxu0
  %v619 = vadd.f32 %v247, %v618
  %v620 = vpop.f32.mrf.mxu0
  %621 = vmatprep.mubr.f32.mxu0 %v84
  %622 = vmatmul.mubr.f32.gmra.mxu0 %v83
  %v623 = vpop.f32.mrf.mxu0
  %v624 = vadd.f32 %v247, %v623
  %v625 = vpop.f32.mrf.mxu0
  %626 = vmatprep.mubr.f32.mxu0 %v87
  %627 = vmatmul.mubr.f32.gmra.mxu0 %v86
  %v628 = vpop.f32.mrf.mxu0
  %v629 = vadd.f32 %v247, %v628
  %v630 = vpop.f32.mrf.mxu0
  %631 = vmatprep.mubr.f32.mxu0 %v90
  %632 = vmatmul.mubr.f32.gmra.mxu0 %v89
  %v633 = vpop.f32.mrf.mxu0
  %v634 = vadd.f32 %v247, %v633
  %v635 = vpop.f32.mrf.mxu0
  %636 = vmatprep.mubr.f32.mxu0 %v93
  %637 = vmatmul.mubr.f32.gmra.mxu0 %v92
  %v638 = vpop.f32.mrf.mxu0
  %v639 = vadd.f32 %v247, %v638
  %v640 = vpop.f32.mrf.mxu0
  %641 = vmatprep.mubr.f32.mxu0 %v96
  %642 = vmatmul.mubr.f32.gmra.mxu0 %v95
  %v643 = vpop.f32.mrf.mxu0
  %v644 = vadd.f32 %v247, %v643
  %v645 = vpop.f32.mrf.mxu0
  %646 = vmatprep.mubr.f32.mxu0 %v99
  %647 = vmatmul.mubr.f32.gmra.mxu0 %v98
  %v648 = vpop.f32.mrf.mxu0
  %v649 = vadd.f32 %v247, %v648
  %v650 = vpop.f32.mrf.mxu0
  %651 = vmatprep.mubr.f32.mxu0 %v102
  %652 = vmatmul.mubr.f32.gmra.mxu0 %v101
  %v653 = vpop.f32.mrf.mxu0
  %v654 = vadd.f32 %v247, %v653
  %v655 = vpop.f32.mrf.mxu0
  %656 = vmatprep.mubr.f32.mxu0 %v105
  %657 = vmatmul.mubr.f32.gmra.mxu0 %v104
  %v658 = vpop.f32.mrf.mxu0
  %v659 = vadd.f32 %v247, %v658
  %v660 = vpop.f32.mrf.mxu0
  %661 = vmatprep.mubr.f32.mxu0 %v108
  %662 = vmatmul.mubr.f32.gmra.mxu0 %v107
  %v663 = vpop.f32.mrf.mxu0
  %v664 = vadd.f32 %v247, %v663
  %v665 = vpop.f32.mrf.mxu0
  %666 = vmatprep.mubr.f32.mxu0 %v111
  %667 = vmatmul.mubr.f32.gmra.mxu0 %v110
  %v668 = vpop.f32.mrf.mxu0
  %v669 = vadd.f32 %v247, %v668
  %v670 = vpop.f32.mrf.mxu0
  %671 = vmatprep.mubr.f32.mxu0 %v114
  %672 = vmatmul.mubr.f32.gmra.mxu0 %v113
  %v673 = vpop.f32.mrf.mxu0
  %v674 = vadd.f32 %v247, %v673
  %v675 = vpop.f32.mrf.mxu0
  %676 = vmatprep.mubr.f32.mxu0 %v117
  %677 = vmatmul.mubr.f32.gmra.mxu0 %v116
  %v678 = vpop.f32.mrf.mxu0
  %v679 = vadd.f32 %v247, %v678
  %v680 = vpop.f32.mrf.mxu0
  %681 = vmatprep.mubr.f32.mxu0 %v120
  %682 = vmatmul.mubr.f32.gmra.mxu0 %v119
  %v683 = vpop.f32.mrf.mxu0
  %v684 = vadd.f32 %v247, %v683
  %v685 = vpop.f32.mrf.mxu0
  %686 = vmatprep.mubr.f32.mxu0 %v123
  %687 = vmatmul.mubr.f32.gmra.mxu0 %v122
  %v688 = vpop.f32.mrf.mxu0
  %v689 = vadd.f32 %v247, %v688
  %v690 = vpop.f32.mrf.mxu0
  %691 = vmatprep.mubr.f32.mxu0 %v126
  %692 = vmatmul.mubr.f32.gmra.mxu0 %v125
  %v693 = vpop.f32.mrf.mxu0
  %v694 = vadd.f32 %v247, %v693
  %v695 = vpop.f32.mrf.mxu0
  %696 = vmatprep.mubr.f32.mxu0 %v129
  %697 = vmatmul.mubr.f32.gmra.mxu0 %v128
  %v698 = vpop.f32.mrf.mxu0
  %v699 = vadd.f32 %v247, %v698
  %v700 = vpop.f32.mrf.mxu0
  %701 = vmatprep.mubr.f32.mxu0 %v132
  %702 = vmatmul.mubr.f32.gmra.mxu0 %v131
  %v703 = vpop.f32.mrf.mxu0
  %v704 = vadd.f32 %v247, %v703
  %v705 = vpop.f32.mrf.mxu0
  %706 = vmatprep.mubr.f32.mxu0 %v135
  %707 = vmatmul.mubr.f32.gmra.mxu0 %v134
  %v708 = vpop.f32.mrf.mxu0
  %v709 = vadd.f32 %v247, %v708
  %v710 = vpop.f32.mrf.mxu0
  %711 = vmatprep.mubr.f32.mxu0 %v138
  %712 = vmatmul.mubr.f32.gmra.mxu0 %v137
  %v713 = vpop.f32.mrf.mxu0
  %v714 = vadd.f32 %v247, %v713
  %v715 = vpop.f32.mrf.mxu0
  %716 = vmatprep.mubr.f32.mxu0 %v141
  %717 = vmatmul.mubr.f32.gmra.mxu0 %v140
  %v718 = vpop.f32.mrf.mxu0
  %v719 = vadd.f32 %v247, %v718
  %v720 = vpop.f32.mrf.mxu0
  %721 = vmatprep.mubr.f32.mxu0 %v144
  %722 = vmatmul.mubr.f32.gmra.mxu0 %v143
  %v723 = vpop.f32.mrf.mxu0
  %v724 = vadd.f32 %v247, %v723
  %v725 = vpop.f32.mrf.mxu0
  %726 = vmatprep.mubr.f32.mxu0 %v147
  %727 = vmatmul.mubr.f32.gmra.mxu0 %v146
  %v728 = vpop.f32.mrf.mxu0
  %v729 = vadd.f32 %v247, %v728
  %v730 = vpop.f32.mrf.mxu0
  %731 = vmatprep.mubr.f32.mxu0 %v150
  %732 = vmatmul.mubr.f32.gmra.mxu0 %v149
  %v733 = vpop.f32.mrf.mxu0
  %v734 = vadd.f32 %v247, %v733
  %v735 = vpop.f32.mrf.mxu0
  %736 = vmatprep.mubr.f32.mxu0 %v153
  %737 = vmatmul.mubr.f32.gmra.mxu0 %v152
  %v738 = vpop.f32.mrf.mxu0
  %v739 = vadd.f32 %v247, %v738
  %v740 = vpop.f32.mrf.mxu0
  %741 = vmatprep.mubr.f32.mxu0 %v156
  %742 = vmatmul.mubr.f32.gmra.mxu0 %v155
  %v743 = vpop.f32.mrf.mxu0
  %v744 = vadd.f32 %v247, %v743
  %v745 = vpop.f32.mrf.mxu0
  %746 = vmatprep.mubr.f32.mxu0 %v159
  %747 = vmatmul.mubr.f32.gmra.mxu0 %v158
  %v748 = vpop.f32.mrf.mxu0
  %v749 = vadd.f32 %v247, %v748
  %v750 = vpop.f32.mrf.mxu0
  %751 = vmatprep.mubr.f32.mxu0 %v162
  %752 = vmatmul.mubr.f32.gmra.mxu0 %v161
  %v753 = vpop.f32.mrf.mxu0
  %v754 = vadd.f32 %v247, %v753
  %v755 = vpop.f32.mrf.mxu0
  %756 = vmatprep.mubr.f32.mxu0 %v165
  %757 = vmatmul.mubr.f32.gmra.mxu0 %v164
  %v758 = vpop.f32.mrf.mxu0
  %v759 = vadd.f32 %v247, %v758
  %v760 = vpop.f32.mrf.mxu0
  %761 = vmatprep.mubr.f32.mxu0 %v168
  %762 = vmatmul.mubr.f32.gmra.mxu0 %v167
  %v763 = vpop.f32.mrf.mxu0
  %v764 = vadd.f32 %v247, %v763
  %v765 = vpop.f32.mrf.mxu0
  %766 = vmatprep.mubr.f32.mxu0 %v171
  %767 = vmatmul.mubr.f32.gmra.mxu0 %v170
  %v768 = vpop.f32.mrf.mxu0
  %v769 = vadd.f32 %v247, %v768
  %v770 = vpop.f32.mrf.mxu0
  %771 = vmatprep.mubr.f32.mxu0 %v174
  %772 = vmatmul.mubr.f32.gmra.mxu0 %v173
  %v773 = vpop.f32.mrf.mxu0
  %v774 = vadd.f32 %v247, %v773
  %v775 = vpop.f32.mrf.mxu0
  %776 = vmatprep.mubr.f32.mxu0 %v177
  %777 = vmatmul.mubr.f32.gmra.mxu0 %v176
  %v778 = vpop.f32.mrf.mxu0
  %v779 = vadd.f32 %v247, %v778
  %v780 = vpop.f32.mrf.mxu0
  %781 = vmatprep.mubr.f32.mxu0 %v180
  %782 = vmatmul.mubr.f32.gmra.mxu0 %v179
  %v783 = vpop.f32.mrf.mxu0
  %v784 = vadd.f32 %v247, %v783
  %v785 = vpop.f32.mrf.mxu0
  %786 = vmatprep.mubr.f32.mxu0 %v183
  %787 = vmatmul.mubr.f32.gmra.mxu0 %v182
  %v788 = vpop.f32.mrf.mxu0
  %v789 = vadd.f32 %v247, %v788
  %v790 = vpop.f32.mrf.mxu0
  %791 = vmatprep.mubr.f32.mxu0 %v186
  %792 = vmatmul.mubr.f32.gmra.mxu0 %v185
  %v793 = vpop.f32.mrf.mxu0
  %v794 = vadd.f32 %v247, %v793
  %v795 = vpop.f32.mrf.mxu0
  %796 = vmatprep.mubr.f32.mxu0 %v189
  %797 = vmatmul.mubr.f32.gmra.mxu0 %v188
  %v798 = vpop.f32.mrf.mxu0
  %v799 = vadd.f32 %v247, %v798
  %v800 = vpop.f32.mrf.mxu0
  %801 = vmatprep.mubr.f32.mxu0 %v192
  %802 = vmatmul.mubr.f32.gmra.mxu0 %v191
  %v803 = vpop.f32.mrf.mxu0
  %v804 = vadd.f32 %v247, %v803
  %v805 = vpop.f32.mrf.mxu0
  %806 = vmatprep.mubr.f32.mxu0 %v195
  %807 = vmatmul.mubr.f32.gmra.mxu0 %v194
  %v808 = vpop.f32.mrf.mxu0
  %v809 = vadd.f32 %v247, %v808
  %v810 = vpop.f32.mrf.mxu0
  %811 = vmatprep.mubr.f32.mxu0 %v198
  %812 = vmatmul.mubr.f32.gmra.mxu0 %v197
  %v813 = vpop.f32.mrf.mxu0
  %v814 = vadd.f32 %v247, %v813
  %v815 = vpop.f32.mrf.mxu0
  %816 = vmatprep.mubr.f32.mxu0 %v201
  %817 = vmatmul.mubr.f32.gmra.mxu0 %v200
  %v818 = vpop.f32.mrf.mxu0
  %v819 = vadd.f32 %v247, %v818
  %v820 = vpop.f32.mrf.mxu0
  %821 = vmatprep.mubr.f32.mxu0 %v204
  %822 = vmatmul.mubr.f32.gmra.mxu0 %v203
  %v823 = vpop.f32.mrf.mxu0
  %v824 = vadd.f32 %v247, %v823
  %v825 = vpop.f32.mrf.mxu0
  %826 = vdwg.mxu0
  %827 = vmatprep.subr.mxu0 0.0
  %828 = vmatpush1.msra.mxu0 0.0
  %829 = vmatprep.subr.mxu0 0.0
  %830 = vmatpush1.msra.mxu0 0.0
  %831 = vmatprep.subr.mxu0 0.0
  %832 = vmatpush1.msra.mxu0 0.0
  %833 = vmatprep.subr.mxu0 0.0
  %834 = vmatpush1.msra.mxu0 0.0
  %835 = vmatprep.subr.mxu0 0.0
  %836 = vmatpush1.msra.mxu0 0.0
  %837 = vmatprep.subr.mxu0 0.0
  %838 = vmatpush1.msra.mxu0 0.0
  %839 = vmatprep.subr.mxu0 0.0
  %840 = vmatpush1.msra.mxu0 0.0
  %841 = vmatprep.subr.mxu0 0.0
  %842 = vmatpush1.msra.mxu0 0.0
  %843 = vmatprep.subr.mxu0 0.0
  %844 = vmatpush1.msra.mxu0 0.0
  %845 = vmatprep.subr.mxu0 0.0
  %846 = vmatpush1.msra.mxu0 0.0
  %847 = vmatprep.subr.mxu0 0.0
  %848 = vmatpush1.msra.mxu0 0.0
  %849 = vmatprep.subr.mxu0 0.0
  %850 = vmatpush1.msra.mxu0 0.0
  %851 = vmatprep.subr.mxu0 0.0
  %852 = vmatpush1.msra.mxu0 %v241
  %853 = vmatprep.subr.mxu0 0.0
  %854 = vmatpush1.msra.mxu0 %v240
  %855 = vmatprep.subr.mxu0 0.0
  %856 = vmatpush1.msra.mxu0 %v239
  %857 = vmatprep.subr.mxu0 0.0
  %858 = vmatpush1.msra.mxu0 %v238
  %859 = vmatprep.subr.mxu0 0.0
  %860 = vmatpush2.msra.mxu0 0.0
  %861 = vmatprep.subr.mxu0 0.0
  %862 = vmatpush2.msra.mxu0 0.0
  %863 = vmatprep.subr.mxu0 0.0
  %864 = vmatpush2.msra.mxu0 0.0
  %865 = vmatprep.subr.mxu0 0.0
  %866 = vmatpush2.msra.mxu0 0.0
  %867 = vmatprep.subr.mxu0 0.0
  %868 = vmatpush2.msra.mxu0 0.0
  %869 = vmatprep.subr.mxu0 0.0
  %870 = vmatpush2.msra.mxu0 0.0
  %871 = vmatprep.subr.mxu0 0.0
  %872 = vmatpush2.msra.mxu0 0.0
  %873 = vmatprep.subr.mxu0 0.0
  %874 = vmatpush2.msra.mxu0 0.0
  %875 = vmatprep.subr.mxu0 0.0
  %876 = vmatpush2.msra.mxu0 0.0
  %877 = vmatprep.subr.mxu0 0.0
  %878 = vmatpush2.msra.mxu0 0.0
  %879 = vmatprep.subr.mxu0 0.0
  %880 = vmatpush2.msra.mxu0 0.0
  %881 = vmatprep.subr.mxu0 0.0
  %882 = vmatpush2.msra.mxu0 0.0
  %883 = vmatprep.subr.mxu0 0.0
  %884 = vmatpush2.msra.mxu0 0.0
  %885 = vmatprep.subr.mxu0 0.0
  %886 = vmatpush2.msra.mxu0 0.0
  %887 = vmatprep.subr.mxu0 0.0
  %888 = vmatpush2.msra.mxu0 0.0
  %889 = vmatprep.subr.mxu0 0.0
  %890 = vmatpush2.msra.mxu0 0.0
  %891 = vmatprep.mubr.f32.mxu0 0.0
  %892 = vmatmul.mubr.f32.gmra.mxu0 %v251
  %v893 = vpop.f32.mrf.mxu0
  %v894 = vadd.f32 %v509, %v893
  %v895 = vpop.f32.mrf.mxu0
  %896 = vmatprep.mubr.f32.mxu0 0.0
  %897 = vmatmul.mubr.f32.gmra.mxu0 %v254
  %v898 = vpop.f32.mrf.mxu0
  %v899 = vadd.f32 %v514, %v898
  %v900 = vpop.f32.mrf.mxu0
  %901 = vmatprep.mubr.f32.mxu0 0.0
  %902 = vmatmul.mubr.f32.gmra.mxu0 %v257
  %v903 = vpop.f32.mrf.mxu0
  %v904 = vadd.f32 %v519, %v903
  %v905 = vpop.f32.mrf.mxu0
  %906 = vmatprep.mubr.f32.mxu0 0.0
  %907 = vmatmul.mubr.f32.gmra.mxu0 %v260
  %v908 = vpop.f32.mrf.mxu0
  %v909 = vadd.f32 %v524, %v908
  %v910 = vpop.f32.mrf.mxu0
  %911 = vmatprep.mubr.f32.mxu0 0.0
  %912 = vmatmul.mubr.f32.gmra.mxu0 %v263
  %v913 = vpop.f32.mrf.mxu0
  %v914 = vadd.f32 %v529, %v913
  %v915 = vpop.f32.mrf.mxu0
  %916 = vmatprep.mubr.f32.mxu0 0.0
  %917 = vmatmul.mubr.f32.gmra.mxu0 %v266
  %v918 = vpop.f32.mrf.mxu0
  %v919 = vadd.f32 %v534, %v918
  %v920 = vpop.f32.mrf.mxu0
  %921 = vmatprep.mubr.f32.mxu0 0.0
  %922 = vmatmul.mubr.f32.gmra.mxu0 %v269
  %v923 = vpop.f32.mrf.mxu0
  %v924 = vadd.f32 %v539, %v923
  %v925 = vpop.f32.mrf.mxu0
  %926 = vmatprep.mubr.f32.mxu0 0.0
  %927 = vmatmul.mubr.f32.gmra.mxu0 %v272
  %v928 = vpop.f32.mrf.mxu0
  %v929 = vadd.f32 %v544, %v928
  %v930 = vpop.f32.mrf.mxu0
  %931 = vmatprep.mubr.f32.mxu0 0.0
  %932 = vmatmul.mubr.f32.gmra.mxu0 %v275
  %v933 = vpop.f32.mrf.mxu0
  %v934 = vadd.f32 %v549, %v933
  %v935 = vpop.f32.mrf.mxu0
  %936 = vmatprep.mubr.f32.mxu0 0.0
  %937 = vmatmul.mubr.f32.gmra.mxu0 %v278
  %v938 = vpop.f32.mrf.mxu0
  %v939 = vadd.f32 %v554, %v938
  %v940 = vpop.f32.mrf.mxu0
  %941 = vmatprep.mubr.f32.mxu0 0.0
  %942 = vmatmul.mubr.f32.gmra.mxu0 %v281
  %v943 = vpop.f32.mrf.mxu0
  %v944 = vadd.f32 %v559, %v943
  %v945 = vpop.f32.mrf.mxu0
  %946 = vmatprep.mubr.f32.mxu0 0.0
  %947 = vmatmul.mubr.f32.gmra.mxu0 %v284
  %v948 = vpop.f32.mrf.mxu0
  %v949 = vadd.f32 %v564, %v948
  %v950 = vpop.f32.mrf.mxu0
  %951 = vmatprep.mubr.f32.mxu0 0.0
  %952 = vmatmul.mubr.f32.gmra.mxu0 %v287
  %v953 = vpop.f32.mrf.mxu0
  %v954 = vadd.f32 %v569, %v953
  %v955 = vpop.f32.mrf.mxu0
  %956 = vmatprep.mubr.f32.mxu0 0.0
  %957 = vmatmul.mubr.f32.gmra.mxu0 %v290
  %v958 = vpop.f32.mrf.mxu0
  %v959 = vadd.f32 %v574, %v958
  %v960 = vpop.f32.mrf.mxu0
  %961 = vmatprep.mubr.f32.mxu0 0.0
  %962 = vmatmul.mubr.f32.gmra.mxu0 %v293
  %v963 = vpop.f32.mrf.mxu0
  %v964 = vadd.f32 %v579, %v963
  %v965 = vpop.f32.mrf.mxu0
  %966 = vmatprep.mubr.f32.mxu0 0.0
  %967 = vmatmul.mubr.f32.gmra.mxu0 %v296
  %v968 = vpop.f32.mrf.mxu0
  %v969 = vadd.f32 %v584, %v968
  %v970 = vpop.f32.mrf.mxu0
  %971 = vmatprep.mubr.f32.mxu0 0.0
  %972 = vmatmul.mubr.f32.gmra.mxu0 %v299
  %v973 = vpop.f32.mrf.mxu0
  %v974 = vadd.f32 %v589, %v973
  %v975 = vpop.f32.mrf.mxu0
  %976 = vmatprep.mubr.f32.mxu0 0.0
  %977 = vmatmul.mubr.f32.gmra.mxu0 %v302
  %v978 = vpop.f32.mrf.mxu0
  %v979 = vadd.f32 %v594, %v978
  %v980 = vpop.f32.mrf.mxu0
  %981 = vmatprep.mubr.f32.mxu0 0.0
  %982 = vmatmul.mubr.f32.gmra.mxu0 %v305
  %v983 = vpop.f32.mrf.mxu0
  %v984 = vadd.f32 %v599, %v983
  %v985 = vpop.f32.mrf.mxu0
  %986 = vmatprep.mubr.f32.mxu0 0.0
  %987 = vmatmul.mubr.f32.gmra.mxu0 %v308
  %v988 = vpop.f32.mrf.mxu0
  %v989 = vadd.f32 %v604, %v988
  %v990 = vpop.f32.mrf.mxu0
  %991 = vmatprep.mubr.f32.mxu0 0.0
  %992 = vmatmul.mubr.f32.gmra.mxu0 %v311
  %v993 = vpop.f32.mrf.mxu0
  %v994 = vadd.f32 %v609, %v993
  %v995 = vpop.f32.mrf.mxu0
  %996 = vmatprep.mubr.f32.mxu0 0.0
  %997 = vmatmul.mubr.f32.gmra.mxu0 %v314
  %v998 = vpop.f32.mrf.mxu0
  %v999 = vadd.f32 %v614, %v998
  %v1000 = vpop.f32.mrf.mxu0
  %1001 = vmatprep.mubr.f32.mxu0 0.0
  %1002 = vmatmul.mubr.f32.gmra.mxu0 %v317
  %v1003 = vpop.f32.mrf.mxu0
  %v1004 = vadd.f32 %v619, %v1003
  %v1005 = vpop.f32.mrf.mxu0
  %1006 = vmatprep.mubr.f32.mxu0 0.0
  %1007 = vmatmul.mubr.f32.gmra.mxu0 %v320
  %v1008 = vpop.f32.mrf.mxu0
  %v1009 = vadd.f32 %v624, %v1008
  %v1010 = vpop.f32.mrf.mxu0
  %1011 = vmatprep.mubr.f32.mxu0 0.0
  %1012 = vmatmul.mubr.f32.gmra.mxu0 %v323
  %v1013 = vpop.f32.mrf.mxu0
  %v1014 = vadd.f32 %v629, %v1013
  %v1015 = vpop.f32.mrf.mxu0
  %1016 = vmatprep.mubr.f32.mxu0 0.0
  %1017 = vmatmul.mubr.f32.gmra.mxu0 %v326
  %v1018 = vpop.f32.mrf.mxu0
  %v1019 = vadd.f32 %v634, %v1018
  %v1020 = vpop.f32.mrf.mxu0
  %1021 = vmatprep.mubr.f32.mxu0 0.0
  %1022 = vmatmul.mubr.f32.gmra.mxu0 %v329
  %v1023 = vpop.f32.mrf.mxu0
  %v1024 = vadd.f32 %v639, %v1023
  %v1025 = vpop.f32.mrf.mxu0
  %1026 = vmatprep.mubr.f32.mxu0 0.0
  %1027 = vmatmul.mubr.f32.gmra.mxu0 %v332
  %v1028 = vpop.f32.mrf.mxu0
  %v1029 = vadd.f32 %v644, %v1028
  %v1030 = vpop.f32.mrf.mxu0
  %1031 = vmatprep.mubr.f32.mxu0 0.0
  %1032 = vmatmul.mubr.f32.gmra.mxu0 %v335
  %v1033 = vpop.f32.mrf.mxu0
  %v1034 = vadd.f32 %v649, %v1033
  %v1035 = vpop.f32.mrf.mxu0
  %1036 = vmatprep.mubr.f32.mxu0 0.0
  %1037 = vmatmul.mubr.f32.gmra.mxu0 %v338
  %v1038 = vpop.f32.mrf.mxu0
  %v1039 = vadd.f32 %v654, %v1038
  %v1040 = vpop.f32.mrf.mxu0
  %1041 = vmatprep.mubr.f32.mxu0 0.0
  %1042 = vmatmul.mubr.f32.gmra.mxu0 %v341
  %v1043 = vpop.f32.mrf.mxu0
  %v1044 = vadd.f32 %v659, %v1043
  %v1045 = vpop.f32.mrf.mxu0
  %1046 = vmatprep.mubr.f32.mxu0 0.0
  %1047 = vmatmul.mubr.f32.gmra.mxu0 %v344
  %v1048 = vpop.f32.mrf.mxu0
  %v1049 = vadd.f32 %v664, %v1048
  %v1050 = vpop.f32.mrf.mxu0
  %1051 = vmatprep.mubr.f32.mxu0 0.0
  %1052 = vmatmul.mubr.f32.gmra.mxu0 %v347
  %v1053 = vpop.f32.mrf.mxu0
  %v1054 = vadd.f32 %v669, %v1053
  %v1055 = vpop.f32.mrf.mxu0
  %1056 = vmatprep.mubr.f32.mxu0 0.0
  %1057 = vmatmul.mubr.f32.gmra.mxu0 %v350
  %v1058 = vpop.f32.mrf.mxu0
  %v1059 = vadd.f32 %v674, %v1058
  %v1060 = vpop.f32.mrf.mxu0
  %1061 = vmatprep.mubr.f32.mxu0 0.0
  %1062 = vmatmul.mubr.f32.gmra.mxu0 %v353
  %v1063 = vpop.f32.mrf.mxu0
  %v1064 = vadd.f32 %v679, %v1063
  %v1065 = vpop.f32.mrf.mxu0
  %1066 = vmatprep.mubr.f32.mxu0 0.0
  %1067 = vmatmul.mubr.f32.gmra.mxu0 %v356
  %v1068 = vpop.f32.mrf.mxu0
  %v1069 = vadd.f32 %v684, %v1068
  %v1070 = vpop.f32.mrf.mxu0
  %1071 = vmatprep.mubr.f32.mxu0 0.0
  %1072 = vmatmul.mubr.f32.gmra.mxu0 %v359
  %v1073 = vpop.f32.mrf.mxu0
  %v1074 = vadd.f32 %v689, %v1073
  %v1075 = vpop.f32.mrf.mxu0
  %1076 = vmatprep.mubr.f32.mxu0 0.0
  %1077 = vmatmul.mubr.f32.gmra.mxu0 %v362
  %v1078 = vpop.f32.mrf.mxu0
  %v1079 = vadd.f32 %v694, %v1078
  %v1080 = vpop.f32.mrf.mxu0
  %1081 = vmatprep.mubr.f32.mxu0 0.0
  %1082 = vmatmul.mubr.f32.gmra.mxu0 %v365
  %v1083 = vpop.f32.mrf.mxu0
  %v1084 = vadd.f32 %v699, %v1083
  %v1085 = vpop.f32.mrf.mxu0
  %1086 = vmatprep.mubr.f32.mxu0 0.0
  %1087 = vmatmul.mubr.f32.gmra.mxu0 %v368
  %v1088 = vpop.f32.mrf.mxu0
  %v1089 = vadd.f32 %v704, %v1088
  %v1090 = vpop.f32.mrf.mxu0
  %1091 = vmatprep.mubr.f32.mxu0 0.0
  %1092 = vmatmul.mubr.f32.gmra.mxu0 %v371
  %v1093 = vpop.f32.mrf.mxu0
  %v1094 = vadd.f32 %v709, %v1093
  %v1095 = vpop.f32.mrf.mxu0
  %1096 = vmatprep.mubr.f32.mxu0 0.0
  %1097 = vmatmul.mubr.f32.gmra.mxu0 %v374
  %v1098 = vpop.f32.mrf.mxu0
  %v1099 = vadd.f32 %v714, %v1098
  %v1100 = vpop.f32.mrf.mxu0
  %1101 = vmatprep.mubr.f32.mxu0 0.0
  %1102 = vmatmul.mubr.f32.gmra.mxu0 %v377
  %v1103 = vpop.f32.mrf.mxu0
  %v1104 = vadd.f32 %v719, %v1103
  %v1105 = vpop.f32.mrf.mxu0
  %1106 = vmatprep.mubr.f32.mxu0 0.0
  %1107 = vmatmul.mubr.f32.gmra.mxu0 %v380
  %v1108 = vpop.f32.mrf.mxu0
  %v1109 = vadd.f32 %v724, %v1108
  %v1110 = vpop.f32.mrf.mxu0
  %1111 = vmatprep.mubr.f32.mxu0 0.0
  %1112 = vmatmul.mubr.f32.gmra.mxu0 %v383
  %v1113 = vpop.f32.mrf.mxu0
  %v1114 = vadd.f32 %v729, %v1113
  %v1115 = vpop.f32.mrf.mxu0
  %1116 = vmatprep.mubr.f32.mxu0 0.0
  %1117 = vmatmul.mubr.f32.gmra.mxu0 %v386
  %v1118 = vpop.f32.mrf.mxu0
  %v1119 = vadd.f32 %v734, %v1118
  %v1120 = vpop.f32.mrf.mxu0
  %1121 = vmatprep.mubr.f32.mxu0 0.0
  %1122 = vmatmul.mubr.f32.gmra.mxu0 %v389
  %v1123 = vpop.f32.mrf.mxu0
  %v1124 = vadd.f32 %v739, %v1123
  %v1125 = vpop.f32.mrf.mxu0
  %1126 = vmatprep.mubr.f32.mxu0 0.0
  %1127 = vmatmul.mubr.f32.gmra.mxu0 %v392
  %v1128 = vpop.f32.mrf.mxu0
  %v1129 = vadd.f32 %v744, %v1128
  %v1130 = vpop.f32.mrf.mxu0
  %1131 = vmatprep.mubr.f32.mxu0 0.0
  %1132 = vmatmul.mubr.f32.gmra.mxu0 %v395
  %v1133 = vpop.f32.mrf.mxu0
  %v1134 = vadd.f32 %v749, %v1133
  %v1135 = vpop.f32.mrf.mxu0
  %1136 = vmatprep.mubr.f32.mxu0 0.0
  %1137 = vmatmul.mubr.f32.gmra.mxu0 %v398
  %v1138 = vpop.f32.mrf.mxu0
  %v1139 = vadd.f32 %v754, %v1138
  %v1140 = vpop.f32.mrf.mxu0
  %1141 = vmatprep.mubr.f32.mxu0 0.0
  %1142 = vmatmul.mubr.f32.gmra.mxu0 %v401
  %v1143 = vpop.f32.mrf.mxu0
  %v1144 = vadd.f32 %v759, %v1143
  %v1145 = vpop.f32.mrf.mxu0
  %1146 = vmatprep.mubr.f32.mxu0 0.0
  %1147 = vmatmul.mubr.f32.gmra.mxu0 %v404
  %v1148 = vpop.f32.mrf.mxu0
  %v1149 = vadd.f32 %v764, %v1148
  %v1150 = vpop.f32.mrf.mxu0
  %1151 = vmatprep.mubr.f32.mxu0 0.0
  %1152 = vmatmul.mubr.f32.gmra.mxu0 %v407
  %v1153 = vpop.f32.mrf.mxu0
  %v1154 = vadd.f32 %v769, %v1153
  %v1155 = vpop.f32.mrf.mxu0
  %1156 = vmatprep.mubr.f32.mxu0 0.0
  %1157 = vmatmul.mubr.f32.gmra.mxu0 %v410
  %v1158 = vpop.f32.mrf.mxu0
  %v1159 = vadd.f32 %v774, %v1158
  %v1160 = vpop.f32.mrf.mxu0
  %1161 = vmatprep.mubr.f32.mxu0 0.0
  %1162 = vmatmul.mubr.f32.gmra.mxu0 %v413
  %v1163 = vpop.f32.mrf.mxu0
  %v1164 = vadd.f32 %v779, %v1163
  %v1165 = vpop.f32.mrf.mxu0
  %1166 = vmatprep.mubr.f32.mxu0 0.0
  %1167 = vmatmul.mubr.f32.gmra.mxu0 %v416
  %v1168 = vpop.f32.mrf.mxu0
  %v1169 = vadd.f32 %v784, %v1168
  %v1170 = vpop.f32.mrf.mxu0
  %1171 = vmatprep.mubr.f32.mxu0 0.0
  %1172 = vmatmul.mubr.f32.gmra.mxu0 %v419
  %v1173 = vpop.f32.mrf.mxu0
  %v1174 = vadd.f32 %v789, %v1173
  %v1175 = vpop.f32.mrf.mxu0
  %1176 = vmatprep.mubr.f32.mxu0 0.0
  %1177 = vmatmul.mubr.f32.gmra.mxu0 %v422
  %v1178 = vpop.f32.mrf.mxu0
  %v1179 = vadd.f32 %v794, %v1178
  %v1180 = vpop.f32.mrf.mxu0
  %1181 = vmatprep.mubr.f32.mxu0 0.0
  %1182 = vmatmul.mubr.f32.gmra.mxu0 %v425
  %v1183 = vpop.f32.mrf.mxu0
  %v1184 = vadd.f32 %v799, %v1183
  %v1185 = vpop.f32.mrf.mxu0
  %1186 = vmatprep.mubr.f32.mxu0 0.0
  %1187 = vmatmul.mubr.f32.gmra.mxu0 %v428
  %v1188 = vpop.f32.mrf.mxu0
  %v1189 = vadd.f32 %v804, %v1188
  %v1190 = vpop.f32.mrf.mxu0
  %1191 = vmatprep.mubr.f32.mxu0 0.0
  %1192 = vmatmul.mubr.f32.gmra.mxu0 %v431
  %v1193 = vpop.f32.mrf.mxu0
  %v1194 = vadd.f32 %v809, %v1193
  %v1195 = vpop.f32.mrf.mxu0
  %1196 = vmatprep.mubr.f32.mxu0 0.0
  %1197 = vmatmul.mubr.f32.gmra.mxu0 %v434
  %v1198 = vpop.f32.mrf.mxu0
  %v1199 = vadd.f32 %v814, %v1198
  %v1200 = vpop.f32.mrf.mxu0
  %1201 = vmatprep.mubr.f32.mxu0 0.0
  %1202 = vmatmul.mubr.f32.gmra.mxu0 %v437
  %v1203 = vpop.f32.mrf.mxu0
  %v1204 = vadd.f32 %v819, %v1203
  %v1205 = vpop.f32.mrf.mxu0
  %1206 = vmatprep.mubr.f32.mxu0 0.0
  %1207 = vmatmul.mubr.f32.gmra.mxu0 %v440
  %v1208 = vpop.f32.mrf.mxu0
  %v1209 = vadd.f32 %v824, %v1208
  %v1210 = vpop.f32.mrf.mxu0
  %1211 = vdwg.mxu0
  %1212 = vst [vmem:[%s3] sm:$0xff] %v894
  %1213 = vst [vmem:[%s3 + $0x8] sm:$0xff] %v899
  %1214 = vst [vmem:[%s3 + $0x10] sm:$0xff] %v904
  %1215 = vst [vmem:[%s3 + $0x18] sm:$0xff] %v909
  %1216 = vst [vmem:[%s3 + $0x20] sm:$0xff] %v914
  %1217 = vst [vmem:[%s3 + $0x28] sm:$0xff] %v919
  %1218 = vst [vmem:[%s3 + $0x30] sm:$0xff] %v924
  %1219 = vst [vmem:[%s3 + $0x38] sm:$0xff] %v929
  %1220 = vst [vmem:[%s3 + $0x40] sm:$0xff] %v934
  %1221 = vst [vmem:[%s3 + $0x48] sm:$0xff] %v939
  %1222 = vst [vmem:[%s3 + $0x50] sm:$0xff] %v944
  %1223 = vst [vmem:[%s3 + $0x58] sm:$0xff] %v949
  %1224 = vst [vmem:[%s3 + $0x60] sm:$0xff] %v954
  %1225 = vst [vmem:[%s3 + $0x68] sm:$0xff] %v959
  %1226 = vst [vmem:[%s3 + $0x70] sm:$0xff] %v964
  %1227 = vst [vmem:[%s3 + $0x78] sm:$0xff] %v969
  %1228 = vst [vmem:[%s3 + $0x80] sm:$0xff] %v974
  %1229 = vst [vmem:[%s3 + $0x88] sm:$0xff] %v979
  %1230 = vst [vmem:[%s3 + $0x90] sm:$0xff] %v984
  %1231 = vst [vmem:[%s3 + $0x98] sm:$0xff] %v989
  %1232 = vst [vmem:[%s3 + $0xa0] sm:$0xff] %v994
  %1233 = vst [vmem:[%s3 + $0xa8] sm:$0xff] %v999
  %1234 = vst [vmem:[%s3 + $0xb0] sm:$0xff] %v1004
  %1235 = vst [vmem:[%s3 + $0xb8] sm:$0xff] %v1009
  %1236 = vst [vmem:[%s3 + $0xc0] sm:$0xff] %v1014
  %1237 = vst [vmem:[%s3 + $0xc8] sm:$0xff] %v1019
  %1238 = vst [vmem:[%s3 + $0xd0] sm:$0xff] %v1024
  %1239 = vst [vmem:[%s3 + $0xd8] sm:$0xff] %v1029
  %1240 = vst [vmem:[%s3 + $0xe0] sm:$0xff] %v1034
  %1241 = vst [vmem:[%s3 + $0xe8] sm:$0xff] %v1039
  %1242 = vst [vmem:[%s3 + $0xf0] sm:$0xff] %v1044
  %1243 = vst [vmem:[%s3 + $0xf8] sm:$0xff] %v1049
  %1244 = vst [vmem:[%s3 + $0x100] sm:$0xff] %v1054
  %1245 = vst [vmem:[%s3 + $0x108] sm:$0xff] %v1059
  %1246 = vst [vmem:[%s3 + $0x110] sm:$0xff] %v1064
  %1247 = vst [vmem:[%s3 + $0x118] sm:$0xff] %v1069
  %1248 = vst [vmem:[%s3 + $0x120] sm:$0xff] %v1074
  %1249 = vst [vmem:[%s3 + $0x128] sm:$0xff] %v1079
  %1250 = vst [vmem:[%s3 + $0x130] sm:$0xff] %v1084
  %1251 = vst [vmem:[%s3 + $0x138] sm:$0xff] %v1089
  %1252 = vst [vmem:[%s3 + $0x140] sm:$0xff] %v1094
  %1253 = vst [vmem:[%s3 + $0x148] sm:$0xff] %v1099
  %1254 = vst [vmem:[%s3 + $0x150] sm:$0xff] %v1104
  %1255 = vst [vmem:[%s3 + $0x158] sm:$0xff] %v1109
  %1256 = vst [vmem:[%s3 + $0x160] sm:$0xff] %v1114
  %1257 = vst [vmem:[%s3 + $0x168] sm:$0xff] %v1119
  %1258 = vst [vmem:[%s3 + $0x170] sm:$0xff] %v1124
  %1259 = vst [vmem:[%s3 + $0x178] sm:$0xff] %v1129
  %1260 = vst [vmem:[%s3 + $0x180] sm:$0xff] %v1134
  %1261 = vst [vmem:[%s3 + $0x188] sm:$0xff] %v1139
  %1262 = vst [vmem:[%s3 + $0x190] sm:$0xff] %v1144
  %1263 = vst [vmem:[%s3 + $0x198] sm:$0xff] %v1149
  %1264 = vst [vmem:[%s3 + $0x1a0] sm:$0xff] %v1154
  %1265 = vst [vmem:[%s3 + $0x1a8] sm:$0xff] %v1159
  %1266 = vst [vmem:[%s3 + $0x1b0] sm:$0xff] %v1164
  %1267 = vst [vmem:[%s3 + $0x1b8] sm:$0xff] %v1169
  %1268 = vst [vmem:[%s3 + $0x1c0] sm:$0xff] %v1174
  %1269 = vst [vmem:[%s3 + $0x1c8] sm:$0xff] %v1179
  %1270 = vst [vmem:[%s3 + $0x1d0] sm:$0xff] %v1184
  %1271 = vst [vmem:[%s3 + $0x1d8] sm:$0xff] %v1189
  %1272 = vst [vmem:[%s3 + $0x1e0] sm:$0xff] %v1194
  %1273 = vst [vmem:[%s3 + $0x1e8] sm:$0xff] %v1199
  %1274 = vst [vmem:[%s3 + $0x1f0] sm:$0xff] %v1204
  %1275 = vst [vmem:[%s3 + $0x1f8] sm:$0xff] %v1209
  // Predicated region
  $region14: #{vqvae_forward.9} parent=0 // pred_check
    _
  $region15: #{vqvae_forward.9} parent=0 // pred_check_branch
    %1277 = sbr.rel (0) target = $region17
  $region16: #{vqvae_forward.9} parent=0 // pred_region
    _
  $region17: #{vqvae_forward.9} parent=0 // pred_fallthru
    _
  // Predicated region
  $region18: #{vqvae_forward.9} parent=0 // pred_check
    _
  $region19: #{vqvae_forward.9} parent=0 // pred_check_branch
    %1279 = sbr.rel (0) target = $region21
  $region20: #{vqvae_forward.9} parent=0 // pred_region
    _
  $region21: #{vqvae_forward.9} parent=0 // pred_fallthru
    _

</llo_original>
